<compile_context>
chip_gen: v7x
topology: tpu7x:2x2x1
jax: 0.10.0
libtpu: 0.0.40
codegen_flags: <defaults>
</compile_context>

<pallas_src>
import functools

import jax
import jax.numpy as jnp
from jax import lax
from jax.experimental import pallas as pl
from jax.experimental.pallas import tpu as pltpu


# ------------------------------- helpers ------------------------------------

def _round_up(x, m):
    return (x + m - 1) // m * m


def _pick_tile(dim, candidates):
    """Largest candidate tile that divides `dim`, else the full dim (always legal)."""
    for c in candidates:
        if dim % c == 0:
            return c
    return dim


def _vmem_limit_bytes():
    # v5e/v6e have 128 MiB VMEM, v7x only 64 MiB per TensorCore; use ~3/4 of the
    # physical capacity (capped) and fall back to a conservative 32 MiB.
    try:
        cap = pltpu.get_tpu_info().vmem_capacity_bytes
        return int(min(cap * 3 // 4, 96 * 1024 * 1024))
    except Exception:
        return 32 * 1024 * 1024


_VMEM_LIMIT = _vmem_limit_bytes()


def _gelu_tanh(x):
    # TODO(synk): nn.GELU default is exact-erf; tanh approximation used in-kernel
    # because erf has no guaranteed Mosaic lowering (tanh rides the EUP slot).
    c = jnp.float32(0.7978845608028654)   # sqrt(2/pi)
    return 0.5 * x * (1.0 + jnp.tanh(c * (x + 0.044715 * (x * x * x))))


def grad_reverse(x, lambd=1.0):
    # Forward of GradReverse is identity (only backward negates/scales grads).
    del lambd
    return x


# ------------------------- K-tiled matmul (+fusions) -------------------------

def _matmul_kernel(*refs, act, has_res):
    if has_res:
        x_ref, w_ref, b_ref, res_ref, o_ref, acc_ref = refs
    else:
        x_ref, w_ref, b_ref, o_ref, acc_ref = refs
        res_ref = None
    k = pl.program_id(2)

    @pl.when(k == 0)
    def _():
        acc_ref[...] = jnp.zeros_like(acc_ref)

    acc_ref[...] += jnp.dot(x_ref[...], w_ref[...],
                            preferred_element_type=jnp.float32)

    @pl.when(k == pl.num_programs(2) - 1)
    def _():
        y = acc_ref[...] + b_ref[...].astype(jnp.float32)
        if act == "gelu":
            y = _gelu_tanh(y)
        if res_ref is not None:
            y = y + res_ref[...].astype(jnp.float32)
        o_ref[...] = y.astype(o_ref.dtype)


def linear(x, w, b, *, act=None, residual=None, out_dtype=None):
    """x:(M,K) @ w:(K,N) + b, with optional fused GELU / residual add."""
    M, K = x.shape
    N = w.shape[1]
    out_dtype = out_dtype or x.dtype
    tm = _pick_tile(M, (512, 256, 128, 64, 32, 16))   # no tm=8 for bf16 packing
    tn = _pick_tile(N, (256, 128))
    tk = _pick_tile(K, (512, 256, 128))
    grid = (M // tm, N // tn, K // tk)
    in_specs = [
        pl.BlockSpec((tm, tk), lambda i, j, k: (i, k)),
        pl.BlockSpec((tk, tn), lambda i, j, k: (k, j)),
        pl.BlockSpec((1, tn), lambda i, j, k: (0, j)),
    ]
    args = [x, w, b.reshape(1, N)]
    if residual is not None:
        in_specs.append(pl.BlockSpec((tm, tn), lambda i, j, k: (i, j)))
        args.append(residual)
    return pl.pallas_call(
        functools.partial(_matmul_kernel, act=act, has_res=residual is not None),
        grid=grid,
        in_specs=in_specs,
        out_specs=pl.BlockSpec((tm, tn), lambda i, j, k: (i, j)),
        out_shape=jax.ShapeDtypeStruct((M, N), out_dtype),
        scratch_shapes=[pltpu.VMEM((tm, tn), jnp.float32)],
        compiler_params=pltpu.CompilerParams(
            dimension_semantics=("parallel", "parallel", "arbitrary"),
            vmem_limit_bytes=_VMEM_LIMIT),
    )(*args)


# ---------------------- fused LayerNorm + matmul (+GELU) ---------------------

def _ln_linear_kernel(x_ref, g_ref, bln_ref, w_ref, b_ref, o_ref, xn_ref, *,
                      eps, act):
    # LayerNorm computed once per row tile (j == 0) into bf16 VMEM scratch; all
    # output-N tiles reuse it (no redundant mean/var/rsqrt/affine/cast per tile).
    @pl.when(pl.program_id(1) == 0)
    def _():
        x = x_ref[...].astype(jnp.float32)
        mean = jnp.mean(x, axis=-1, keepdims=True)
        var = jnp.mean(jnp.square(x - mean), axis=-1, keepdims=True)
        xn = (x - mean) * lax.rsqrt(var + eps)
        xn = xn * g_ref[...].astype(jnp.float32) + bln_ref[...].astype(jnp.float32)
        xn_ref[...] = xn.astype(xn_ref.dtype)

    y = jnp.dot(xn_ref[...], w_ref[...], preferred_element_type=jnp.float32)
    y = y + b_ref[...].astype(jnp.float32)
    if act == "gelu":
        y = _gelu_tanh(y)
    o_ref[...] = y.astype(o_ref.dtype)


def ln_linear(x, gamma, beta, w, b, *, act=None, eps=1e-6, out_dtype=None):
    """LayerNorm(x) @ w + b (full-K row tile so LN stats are exact), optional GELU."""
    M, K = x.shape
    N = w.shape[1]
    out_dtype = out_dtype or x.dtype
    tm = _pick_tile(M, (512, 256, 128, 64, 32, 16))
    tn = _pick_tile(N, (256, 128))
    return pl.pallas_call(
        functools.partial(_ln_linear_kernel, eps=eps, act=act),
        grid=(M // tm, N // tn),
        in_specs=[
            pl.BlockSpec((tm, K), lambda i, j: (i, 0)),   # resident across j
            pl.BlockSpec((1, K), lambda i, j: (0, 0)),
            pl.BlockSpec((1, K), lambda i, j: (0, 0)),
            pl.BlockSpec((K, tn), lambda i, j: (0, j)),
            pl.BlockSpec((1, tn), lambda i, j: (0, j)),
        ],
        out_specs=pl.BlockSpec((tm, tn), lambda i, j: (i, j)),
        out_shape=jax.ShapeDtypeStruct((M, N), out_dtype),
        scratch_shapes=[pltpu.VMEM((tm, K), jnp.bfloat16)],
        compiler_params=pltpu.CompilerParams(
            # j carries the LN scratch -> "arbitrary"; i is independent -> "parallel".
            dimension_semantics=("parallel", "arbitrary"),
            vmem_limit_bytes=_VMEM_LIMIT),
    )(x, gamma.reshape(1, K), beta.reshape(1, K), w, b.reshape(1, N))


# --------------------------- flash-style attention ---------------------------

def _flash_attn_kernel(*refs, num_heads, head_dim, scale, has_pad):
    if has_pad:
        q_ref, k_ref, v_ref, bias_ref, o_ref, m_sc, l_sc, acc_sc = refs
    else:
        q_ref, k_ref, v_ref, o_ref, m_sc, l_sc, acc_sc = refs
        bias_ref = None
    ki = pl.program_id(2)

    @pl.when(ki == 0)
    def _():
        m_sc[...] = jnp.full_like(m_sc, -1e30)
        l_sc[...] = jnp.zeros_like(l_sc)
        acc_sc[...] = jnp.zeros_like(acc_sc)

    q = q_ref[0]                 # (tq, D)  lane-dense, all heads
    k = k_ref[0]                 # (tkv, D)
    v = v_ref[0]
    bias = bias_ref[...].astype(jnp.float32) if has_pad else None   # (1, tkv)

    # TODO(synk): for production head_dim=64 configs, batch 2-4 heads per dot
    # (or put head on the grid) to raise MXU utilization; keep heads in chunks if
    # num_heads >= 12 to avoid vreg spills from this unrolled loop.
    for h in range(num_heads):
        lo, hi = h * head_dim, (h + 1) * head_dim
        qh, kh, vh = q[:, lo:hi], k[:, lo:hi], v[:, lo:hi]
        s = lax.dot_general(qh, kh, (((1,), (1,)), ((), ())),
                            preferred_element_type=jnp.float32) * scale
        if bias is not None:
            s = s + bias                      # additive key-padding mask
        m_prev = m_sc[h]
        m_new = jnp.maximum(m_prev, jnp.max(s, axis=-1, keepdims=True))
        alpha = jnp.exp(m_prev - m_new)
        p = jnp.exp(s - m_new)
        l_sc[h] = alpha * l_sc[h] + jnp.sum(p, axis=-1, keepdims=True)
        pv = lax.dot_general(p.astype(vh.dtype), vh, (((1,), (0,)), ((), ())),
                             preferred_element_type=jnp.float32)
        acc_sc[h] = alpha * acc_sc[h] + pv
        m_sc[h] = m_new

    @pl.when(ki == pl.num_programs(2) - 1)
    def _():
        # write each head straight into its lane slice of o_ref (no concat temp)
        for h in range(num_heads):
            lo, hi = h * head_dim, (h + 1) * head_dim
            inv_l = pl.reciprocal(l_sc[h], approx=True)
            o_ref[0, :, lo:hi] = (acc_sc[h] * inv_l).astype(o_ref.dtype)


def flash_attention(qkv, *, num_heads, t_valid):
    """qkv: (B, Tpad, 3D) fused Q|K|V -> per-head softmax(q k^T / sqrt(dh)) v, (B, Tpad, D)."""
    B, Tpad, threeD = qkv.shape
    D = threeD // 3
    head_dim = D // num_heads
    if Tpad % 256 == 0:
        tq = tkv = 256
    elif Tpad % 128 == 0:
        tq = tkv = 128
    else:
        tq = tkv = Tpad
    has_pad = Tpad > t_valid
    grid = (B, Tpad // tq, Tpad // tkv)

    if D % 128 == 0:
        # consume the fused QKV tensor directly: lane-block selection in BlockSpecs
        args = [qkv, qkv, qkv]
        q_spec = pl.BlockSpec((1, tq, D), lambda b, qi, ki: (b, qi, 0))
        k_spec = pl.BlockSpec((1, tkv, D), lambda b, qi, ki: (b, ki, 1))
        v_spec = pl.BlockSpec((1, tkv, D), lambda b, qi, ki: (b, ki, 2))
    else:
        # small-D fallback: one lane slice in XLA (toy configs only)
        q = lax.slice_in_dim(qkv, 0, D, axis=2)
        k = lax.slice_in_dim(qkv, D, 2 * D, axis=2)
        v = lax.slice_in_dim(qkv, 2 * D, 3 * D, axis=2)
        args = [q, k, v]
        q_spec = pl.BlockSpec((1, tq, D), lambda b, qi, ki: (b, qi, 0))
        k_spec = pl.BlockSpec((1, tkv, D), lambda b, qi, ki: (b, ki, 0))
        v_spec = pl.BlockSpec((1, tkv, D), lambda b, qi, ki: (b, ki, 0))
    in_specs = [q_spec, k_spec, v_spec]

    if has_pad:
        col = jnp.arange(Tpad)
        kv_bias = jnp.where(col < t_valid, 0.0, -1e30).astype(jnp.float32)
        args.append(kv_bias.reshape(1, Tpad))
        in_specs.append(pl.BlockSpec((1, tkv), lambda b, qi, ki: (0, ki)))

    return pl.pallas_call(
        functools.partial(_flash_attn_kernel, num_heads=num_heads,
                          head_dim=head_dim, scale=head_dim ** -0.5,
                          has_pad=has_pad),
        grid=grid,
        in_specs=in_specs,
        out_specs=pl.BlockSpec((1, tq, D), lambda b, qi, ki: (b, qi, 0)),
        out_shape=jax.ShapeDtypeStruct((B, Tpad, D), qkv.dtype),
        scratch_shapes=[pltpu.VMEM((num_heads, tq, 1), jnp.float32),
                        pltpu.VMEM((num_heads, tq, 1), jnp.float32),
                        pltpu.VMEM((num_heads, tq, head_dim), jnp.float32)],
        compiler_params=pltpu.CompilerParams(
            dimension_semantics=("parallel", "parallel", "arbitrary"),
            vmem_limit_bytes=_VMEM_LIMIT),
    )(*args)


# ----------------- fused front end: patch embed + cls + pos + pad ------------

def _token_embed_kernel(x_ref, w_ref, b_ref, cls_ref, pos_ref, o_ref, *,
                        t_valid, t_pad):
    # patch-embed matmul, bias, pos_embed add, cls row, zero padding, bf16 cast
    x = x_ref[0]                                               # (npatch, Cpp) bf16
    pos = pos_ref[0].astype(jnp.float32)                       # (T, D)
    y = jnp.dot(x, w_ref[...], preferred_element_type=jnp.float32)
    y = y + b_ref[...].astype(jnp.float32) + pos[1:, :]        # patch tokens
    cls = cls_ref[0].astype(jnp.float32) + pos[:1, :]          # (1, D)
    parts = [cls, y]
    if t_pad > t_valid:
        parts.append(jnp.zeros((t_pad - t_valid, y.shape[1]), jnp.float32))
    o_ref[0] = jnp.concatenate(parts, axis=0).astype(o_ref.dtype)


def token_embed(patches, w, b, cls_tok, pos, *, t_pad, out_dtype=jnp.bfloat16):
    """patches: (B, npatch, C*ps*ps) -> padded tokens (B, t_pad, D) bf16."""
    B, npatch, Cpp = patches.shape
    D = w.shape[1]
    T = npatch + 1
    # TODO(synk): for very large npatch/Cpp this single-block-per-batch kernel
    # should be tiled over npatch/D; fine for ViT-B-scale shapes and below.
    return pl.pallas_call(
        functools.partial(_token_embed_kernel, t_valid=T, t_pad=t_pad),
        grid=(B,),
        in_specs=[pl.BlockSpec((1, npatch, Cpp), lambda b: (b, 0, 0)),
                  pl.BlockSpec((Cpp, D), lambda b: (0, 0)),
                  pl.BlockSpec((1, D), lambda b: (0, 0)),
                  pl.BlockSpec((1, 1, D), lambda b: (0, 0, 0)),
                  pl.BlockSpec((1, T, D), lambda b: (0, 0, 0))],
        out_specs=pl.BlockSpec((1, t_pad, D), lambda b: (b, 0, 0)),
        out_shape=jax.ShapeDtypeStruct((B, t_pad, D), out_dtype),
        compiler_params=pltpu.CompilerParams(
            dimension_semantics=("parallel",),
            vmem_limit_bytes=_VMEM_LIMIT),
    )(patches, w, b.reshape(1, D), cls_tok, pos)


# ------------- fused tail: masked mean-pool + fc_norm (+ head) ---------------

def _tail_kernel(*refs, t_valid, eps, with_head):
    if with_head:
        x_ref, g_ref, bln_ref, w_ref, hb_ref, feat_ref, logit_ref = refs
    else:
        x_ref, g_ref, bln_ref, feat_ref = refs
    x = x_ref[...].astype(jnp.float32)                         # (bt, Tpad, D)
    tok_idx = lax.broadcasted_iota(jnp.int32, (x.shape[1], 1), 0)
    mask = jnp.logical_and(tok_idx >= 1, tok_idx < t_valid).astype(jnp.float32)
    pooled = jnp.sum(x * mask, axis=1) * (1.0 / (t_valid - 1))  # == x[:,1:].mean(1)
    mean = jnp.mean(pooled, axis=-1, keepdims=True)
    var = jnp.mean(jnp.square(pooled - mean), axis=-1, keepdims=True)
    feat = ((pooled - mean) * lax.rsqrt(var + eps)
            * g_ref[...].astype(jnp.float32) + bln_ref[...].astype(jnp.float32))
    feat_ref[...] = feat.astype(feat_ref.dtype)
    if with_head:
        logits = jnp.dot(feat, w_ref[...], preferred_element_type=jnp.float32)
        logit_ref[...] = (logits + hb_ref[...].astype(jnp.float32)).astype(logit_ref.dtype)


def pool_norm_head(x, g, b, head_w, head_b, *, t_valid, with_head, eps=1e-6):
    """x: (B, Tpad, D) -> feat (B, D) fp32 [and logits (B, Npad) fp32] in one kernel."""
    B, Tpad, D = x.shape
    bt = 8 if B % 8 == 0 else B
    grid = (B // bt,)
    in_specs = [pl.BlockSpec((bt, Tpad, D), lambda i: (i, 0, 0)),
                pl.BlockSpec((1, D), lambda i: (0, 0)),
                pl.BlockSpec((1, D), lambda i: (0, 0))]
    args = [x, g.reshape(1, D), b.reshape(1, D)]
    out_shapes = [jax.ShapeDtypeStruct((B, D), jnp.float32)]
    out_specs = [pl.BlockSpec((bt, D), lambda i: (i, 0))]
    if with_head:
        Np = head_w.shape[1]
        in_specs += [pl.BlockSpec((D, Np), lambda i: (0, 0)),
                     pl.BlockSpec((1, Np), lambda i: (0, 0))]
        args += [head_w, head_b.reshape(1, Np)]
        out_shapes.append(jax.ShapeDtypeStruct((B, Np), jnp.float32))
        out_specs.append(pl.BlockSpec((bt, Np), lambda i: (i, 0)))
    outs = pl.pallas_call(
        functools.partial(_tail_kernel, t_valid=t_valid, eps=eps,
                          with_head=with_head),
        grid=grid,
        in_specs=in_specs,
        out_specs=out_specs,
        out_shape=out_shapes,
        compiler_params=pltpu.CompilerParams(
            dimension_semantics=("parallel",),
            vmem_limit_bytes=_VMEM_LIMIT),
    )(*args)
    if with_head:
        return outs[0], outs[1]
    return outs[0]


# ------------------------------ model forward --------------------------------

def block_forward(x, p, num_heads, *, t_valid):
    """One pre-norm transformer block.  x: (B, Tpad, D) bf16."""
    B, Tpad, D = x.shape
    xf = x.reshape(B * Tpad, D)

    # attention branch: LN + fused QKV projection in one kernel; residual in proj.
    qkv = ln_linear(xf, p["ln1_g"], p["ln1_b"], p["qkv_w"], p["qkv_b"])
    a = flash_attention(qkv.reshape(B, Tpad, 3 * D), num_heads=num_heads,
                        t_valid=t_valid)
    xf = linear(a.reshape(B * Tpad, D), p["proj_w"], p["proj_b"], residual=xf)

    # MLP branch: LN + bias + GELU fused into fc1; residual fused into fc2.
    h = ln_linear(xf, p["ln2_g"], p["ln2_b"], p["fc1_w"], p["fc1_b"], act="gelu")
    xf = linear(h, p["fc2_w"], p["fc2_b"], residual=xf)
    return xf.reshape(B, Tpad, D)


def mme_vit_forward(x, params, cfg, only_fc=False, only_feat=False, reverse=False):
    """Mirrors MmeViT.forward (eval mode)."""
    ncls = cfg["num_classes"]
    if only_fc:
        if reverse:
            x = grad_reverse(x)                 # forward identity
        return linear(x, params["head_w"], params["head_b"],
                      out_dtype=jnp.float32)[:, :ncls]

    B, C, H, W = x.shape
    ps, D = cfg["patch"], cfg["embed_dim"]
    gh, gw = H // ps, W // ps
    npatch = gh * gw
    T = npatch + 1
    Tpad = _round_up(T, 128) if T > 128 else _round_up(T, 8)

    # patch_embed (Conv2d k=s=patch) as im2col; (C, ph, pw) flattening matches
    # torch conv weight.reshape(D, C*ph*pw).T.  Everything else of the front end
    # (matmul + bias + pos_embed + cls + padding + bf16 cast) is fused in-kernel.
    patches = (x.reshape(B, C, gh, ps, gw, ps)
                 .transpose(0, 2, 4, 1, 3, 5)
                 .reshape(B, npatch, C * ps * ps)).astype(jnp.bfloat16)
    tok = token_embed(patches, params["patch_w"], params["patch_b"],
                      params["cls_token"], params["pos_embed"], t_pad=Tpad)

    for blk in params["blocks"]:
        tok = block_forward(tok, blk, cfg["num_heads"], t_valid=T)
    # vit.norm == Identity when global_pool == 'avg'

    if only_feat:
        return pool_norm_head(tok, params["fc_norm_g"], params["fc_norm_b"],
                              None, None, t_valid=T, with_head=False)
    feat, logits = pool_norm_head(tok, params["fc_norm_g"], params["fc_norm_b"],
                                  params["head_w"], params["head_b"],
                                  t_valid=T, with_head=True)
    return {"logits": logits[:, :ncls], "feat": feat}


# ------------------------------ parameter init --------------------------------

def init_params(key, cfg):
    D = cfg["embed_dim"]
    C = cfg["in_chans"]
    ps = cfg["patch"]
    depth = cfg["depth"]
    hidden = D * cfg["mlp_ratio"]
    ncls = cfg["num_classes"]
    ncls_pad = _round_up(ncls, 128)          # lane-dense head writes
    ntok = (cfg["img_size"] // ps) ** 2 + 1
    wdt = jnp.bfloat16

    def nrm(k, shape, scale=0.02, dtype=wdt):
        return (scale * jax.random.normal(k, shape)).astype(dtype)

    keys = jax.random.split(key, 6 + depth)
    head_core = 0.02 * jax.random.normal(keys[3], (D, ncls))
    head_w = jnp.zeros((D, ncls_pad), jnp.float32).at[:, :ncls].set(head_core)
    params = {
        "patch_w": nrm(keys[0], (C * ps * ps, D)),
        "patch_b": jnp.zeros((D,), jnp.float32),
        "cls_token": nrm(keys[1], (1, 1, D), dtype=jnp.float32),
        "pos_embed": nrm(keys[2], (1, ntok, D), dtype=jnp.float32),
        "fc_norm_g": jnp.ones((D,), jnp.float32),
        "fc_norm_b": jnp.zeros((D,), jnp.float32),
        "head_w": head_w.astype(wdt),
        "head_b": jnp.zeros((ncls_pad,), jnp.float32),
        "blocks": [],
    }
    for d in range(depth):
        bk = jax.random.split(keys[6 + d], 6)
        # fused QKV weight: columns [0:D]=Q, [D:2D]=K, [2D:3D]=V
        qkv_w = jnp.concatenate([nrm(bk[0], (D, D)), nrm(bk[1], (D, D)),
                                 nrm(bk[2], (D, D))], axis=1)
        params["blocks"].append({
            "ln1_g": jnp.ones((D,), jnp.float32),
            "ln1_b": jnp.zeros((D,), jnp.float32),
            "qkv_w": qkv_w,
            "qkv_b": jnp.zeros((3 * D,), jnp.float32),
            "proj_w": nrm(bk[3], (D, D)), "proj_b": jnp.zeros((D,), jnp.float32),
            "ln2_g": jnp.ones((D,), jnp.float32),
            "ln2_b": jnp.zeros((D,), jnp.float32),
            "fc1_w": nrm(bk[4], (D, hidden)),
            "fc1_b": jnp.zeros((hidden,), jnp.float32),
            "fc2_w": nrm(bk[5], (hidden, D)),
            "fc2_b": jnp.zeros((D,), jnp.float32),
        })
    return params


# ---------------------------------- main ---------------------------------------

if __name__ == "__main__":
    # embed_dim=128 keeps the test small but exercises the lane-dense (128) paths
    # (fused-QKV lane-block BlockSpecs, unmasked vst stores).
    cfg = dict(img_size=16, patch=8, in_chans=3, embed_dim=128, depth=2,
               num_heads=4, mlp_ratio=4, num_classes=10)

    key = jax.random.PRNGKey(0)
    pkey, xkey = jax.random.split(key)
    params = init_params(pkey, cfg)
    x = jax.random.normal(
        xkey, (2, cfg["in_chans"], cfg["img_size"], cfg["img_size"]),
        dtype=jnp.float32)

    fwd = jax.jit(functools.partial(mme_vit_forward, cfg=cfg))
    out = fwd(x, params)
    jax.block_until_ready(out)

    assert out["logits"].shape == (2, cfg["num_classes"])
    assert out["feat"].shape == (2, cfg["embed_dim"])
    assert bool(jnp.all(jnp.isfinite(out["logits"])))
    assert bool(jnp.all(jnp.isfinite(out["feat"])))

    # also exercise the only_feat / only_fc paths of MmeViT.forward
    feat = jax.block_until_ready(
        mme_vit_forward(x, params, cfg, only_feat=True))
    assert feat.shape == (2, cfg["embed_dim"])
    logits_fc = jax.block_until_ready(
        mme_vit_forward(feat, params, cfg, only_fc=True, reverse=True))
    assert logits_fc.shape == (2, cfg["num_classes"])
    assert bool(jnp.all(jnp.isfinite(logits_fc)))

    print("KERNEL_OK")
</pallas_src>

<mosaic_0001>
module attributes {stable_mosaic.version = 11 : i64} {
  func.func @_ln_linear_kernel(%arg0: i32, %arg1: i32, %arg2: memref<16x128xbf16, #tpu.memory_space<vmem>>, %arg3: memref<1x128xf32, #tpu.memory_space<vmem>>, %arg4: memref<1x128xf32, #tpu.memory_space<vmem>>, %arg5: memref<128x128xbf16, #tpu.memory_space<vmem>>, %arg6: memref<1x128xf32, #tpu.memory_space<vmem>>, %arg7: memref<16x128xbf16, #tpu.memory_space<vmem>>, %arg8: memref<16x128xbf16, #tpu.memory_space<vmem>>) attributes {dimension_semantics = [#tpu.dimension_semantics<parallel>, #tpu.dimension_semantics<arbitrary>], iteration_bounds = array<i64: 1, 3>, scalar_prefetch = 0 : i64, scratch_operands = 1 : i64, tpu.core_type = #tpu.core_type<tc>, window_params = [{transform_indices = @transform_0, window_bounds = array<i64: 16, 128>}, {pipeline_mode = #tpu.pipeline_mode<synchronous>, transform_indices = @transform_1, window_bounds = array<i64: 1, 128>}, {pipeline_mode = #tpu.pipeline_mode<synchronous>, transform_indices = @transform_2, window_bounds = array<i64: 1, 128>}, {transform_indices = @transform_3, window_bounds = array<i64: 128, 128>}, {transform_indices = @transform_4, window_bounds = array<i64: 1, 128>}, {transform_indices = @transform_5, window_bounds = array<i64: 16, 128>}]} {
    %c0_i32 = arith.constant 0 : i32
    %0 = arith.cmpi eq, %arg1, %c0_i32 : i32
    %1 = arith.extui %0 : i1 to i32
    %c0_i32_0 = arith.constant 0 : i32
    %2 = arith.cmpi ne, %1, %c0_i32_0 : i32
    scf.if %2 {
      %c0_8 = arith.constant 0 : index
      %c0_9 = arith.constant 0 : index
      %11 = vector.load %arg2[%c0_8, %c0_9] : memref<16x128xbf16, #tpu.memory_space<vmem>>, vector<16x128xbf16>
      %12 = arith.extf %11 : vector<16x128xbf16> to vector<16x128xf32>
      %cst_10 = arith.constant dense<0.000000e+00> : vector<16xf32>
      %13 = vector.multi_reduction <add>, %12, %cst_10 [1] : vector<16x128xf32> to vector<16xf32>
      %14 = vector.shape_cast %13 : vector<16xf32> to vector<16x1xf32>
      %cst_11 = arith.constant 1.280000e+02 : f32
      %15 = vector.broadcast %cst_11 : f32 to vector<16x1xf32>
      %16 = arith.divf %14, %15 : vector<16x1xf32>
      %17 = vector.broadcast %16 : vector<16x1xf32> to vector<16x128xf32>
      %18 = arith.subf %12, %17 : vector<16x128xf32>
      %19 = arith.mulf %18, %18 : vector<16x128xf32>
      %cst_12 = arith.constant dense<0.000000e+00> : vector<16xf32>
      %20 = vector.multi_reduction <add>, %19, %cst_12 [1] : vector<16x128xf32> to vector<16xf32>
      %21 = vector.shape_cast %20 : vector<16xf32> to vector<16x1xf32>
      %cst_13 = arith.constant 1.280000e+02 : f32
      %22 = vector.broadcast %cst_13 : f32 to vector<16x1xf32>
      %23 = arith.divf %21, %22 : vector<16x1xf32>
      %24 = vector.broadcast %16 : vector<16x1xf32> to vector<16x128xf32>
      %25 = arith.subf %12, %24 : vector<16x128xf32>
      %cst_14 = arith.constant 9.99999997E-7 : f32
      %26 = vector.broadcast %cst_14 : f32 to vector<16x1xf32>
      %27 = arith.addf %23, %26 : vector<16x1xf32>
      %28 = math.rsqrt %27 : vector<16x1xf32>
      %29 = vector.broadcast %28 : vector<16x1xf32> to vector<16x128xf32>
      %30 = arith.mulf %25, %29 : vector<16x128xf32>
      %c0_15 = arith.constant 0 : index
      %c0_16 = arith.constant 0 : index
      %31 = vector.load %arg3[%c0_15, %c0_16] : memref<1x128xf32, #tpu.memory_space<vmem>>, vector<1x128xf32>
      %32 = vector.broadcast %31 : vector<1x128xf32> to vector<16x128xf32>
      %33 = arith.mulf %30, %32 : vector<16x128xf32>
      %c0_17 = arith.constant 0 : index
      %c0_18 = arith.constant 0 : index
      %34 = vector.load %arg4[%c0_17, %c0_18] : memref<1x128xf32, #tpu.memory_space<vmem>>, vector<1x128xf32>
      %35 = vector.broadcast %34 : vector<1x128xf32> to vector<16x128xf32>
      %36 = arith.addf %33, %35 : vector<16x128xf32>
      %37 = arith.truncf %36 : vector<16x128xf32> to vector<16x128xbf16>
      %c0_19 = arith.constant 0 : index
      %c0_20 = arith.constant 0 : index
      %38 = vector.load %arg8[%c0_19, %c0_20] : memref<16x128xbf16, #tpu.memory_space<vmem>>, vector<16x128xbf16>
      tpu.vector_store %arg8[%c0_19, %c0_20], %37 {strides = array<i32>} : memref<16x128xbf16, #tpu.memory_space<vmem>>, vector<16x128xbf16>,
    } else {
    }
    %c0 = arith.constant 0 : index
    %c0_1 = arith.constant 0 : index
    %3 = vector.load %arg8[%c0, %c0_1] : memref<16x128xbf16, #tpu.memory_space<vmem>>, vector<16x128xbf16>
    %c0_2 = arith.constant 0 : index
    %c0_3 = arith.constant 0 : index
    %4 = vector.load %arg5[%c0_2, %c0_3] : memref<128x128xbf16, #tpu.memory_space<vmem>>, vector<128x128xbf16>
    %cst = arith.constant dense<0.000000e+00> : vector<16x128xf32>
    %5 = tpu.matmul %3, %4, %cst {dimension_numbers = #tpu.dot_dimension_numbers<[1], [0], [0], [1], [0, 0, 1, 1], [], []>} : vector<16x128xbf16>, vector<128x128xbf16>, vector<16x128xf32> -> vector<16x128xf32>
    %c0_4 = arith.constant 0 : index
    %c0_5 = arith.constant 0 : index
    %6 = vector.load %arg6[%c0_4, %c0_5] : memref<1x128xf32, #tpu.memory_space<vmem>>, vector<1x128xf32>
    %7 = vector.broadcast %6 : vector<1x128xf32> to vector<16x128xf32>
    %8 = arith.addf %5, %7 : vector<16x128xf32>
    %9 = arith.truncf %8 : vector<16x128xf32> to vector<16x128xbf16>
    %c0_6 = arith.constant 0 : index
    %c0_7 = arith.constant 0 : index
    %10 = vector.load %arg7[%c0_6, %c0_7] : memref<16x128xbf16, #tpu.memory_space<vmem>>, vector<16x128xbf16>
    tpu.vector_store %arg7[%c0_6, %c0_7], %9 {strides = array<i32>} : memref<16x128xbf16, #tpu.memory_space<vmem>>, vector<16x128xbf16>,
    return
  }
  func.func @transform_0(%arg0: i32, %arg1: i32) -> (i32, i32) {
    %c0_i32 = arith.constant 0 : i32
    %c0_i32_0 = arith.constant 0 : i32
    return %arg0, %c0_i32 : i32, i32
  }
  func.func @transform_1(%arg0: i32, %arg1: i32) -> (i32, i32) {
    %c0_i32 = arith.constant 0 : i32
    %c0_i32_0 = arith.constant 0 : i32
    %c0_i32_1 = arith.constant 0 : i32
    return %c0_i32, %c0_i32_0 : i32, i32
  }
  func.func @transform_2(%arg0: i32, %arg1: i32) -> (i32, i32) {
    %c0_i32 = arith.constant 0 : i32
    %c0_i32_0 = arith.constant 0 : i32
    %c0_i32_1 = arith.constant 0 : i32
    return %c0_i32, %c0_i32_0 : i32, i32
  }
  func.func @transform_3(%arg0: i32, %arg1: i32) -> (i32, i32) {
    %c0_i32 = arith.constant 0 : i32
    %c0_i32_0 = arith.constant 0 : i32
    return %c0_i32, %arg1 : i32, i32
  }
  func.func @transform_4(%arg0: i32, %arg1: i32) -> (i32, i32) {
    %c0_i32 = arith.constant 0 : i32
    %c0_i32_0 = arith.constant 0 : i32
    return %c0_i32, %arg1 : i32, i32
  }
  func.func @transform_5(%arg0: i32, %arg1: i32) -> (i32, i32) {
    %c0_i32 = arith.constant 0 : i32
    return %arg0, %arg1 : i32, i32
  }
}

module attributes {stable_mosaic.version = 11 : i64} {
  func.func @_token_embed_kernel(%arg0: i32, %arg1: memref<1x4x192xbf16, #tpu.memory_space<vmem>>, %arg2: memref<192x128xbf16, #tpu.memory_space<vmem>>, %arg3: memref<1x128xf32, #tpu.memory_space<vmem>>, %arg4: memref<1x1x128xf32, #tpu.memory_space<vmem>>, %arg5: memref<1x5x128xf32, #tpu.memory_space<vmem>>, %arg6: memref<1x8x128xbf16, #tpu.memory_space<vmem>>) attributes {dimension_semantics = [#tpu.dimension_semantics<parallel>], iteration_bounds = array<i64: 2>, scalar_prefetch = 0 : i64, scratch_operands = 0 : i64, tpu.core_type = #tpu.core_type<tc>, window_params = [{transform_indices = @transform_0, window_bounds = array<i64: 1, 4, 192>}, {pipeline_mode = #tpu.pipeline_mode<synchronous>, transform_indices = @transform_1, window_bounds = array<i64: 192, 128>}, {pipeline_mode = #tpu.pipeline_mode<synchronous>, transform_indices = @transform_2, window_bounds = array<i64: 1, 128>}, {pipeline_mode = #tpu.pipeline_mode<synchronous>, transform_indices = @transform_3, window_bounds = array<i64: 1, 1, 128>}, {pipeline_mode = #tpu.pipeline_mode<synchronous>, transform_indices = @transform_4, window_bounds = array<i64: 1, 5, 128>}, {transform_indices = @transform_5, window_bounds = array<i64: 1, 8, 128>}]} {
    %c0 = arith.constant 0 : index
    %c0_0 = arith.constant 0 : index
    %c0_1 = arith.constant 0 : index
    %0 = vector.load %arg1[%c0, %c0_0, %c0_1] : memref<1x4x192xbf16, #tpu.memory_space<vmem>>, vector<1x4x192xbf16>
    %1 = vector.shape_cast %0 : vector<1x4x192xbf16> to vector<4x192xbf16>
    %c0_2 = arith.constant 0 : index
    %c0_3 = arith.constant 0 : index
    %c0_4 = arith.constant 0 : index
    %2 = vector.load %arg5[%c0_2, %c0_3, %c0_4] : memref<1x5x128xf32, #tpu.memory_space<vmem>>, vector<1x5x128xf32>
    %3 = vector.shape_cast %2 : vector<1x5x128xf32> to vector<5x128xf32>
    %c0_5 = arith.constant 0 : index
    %c0_6 = arith.constant 0 : index
    %4 = vector.load %arg2[%c0_5, %c0_6] : memref<192x128xbf16, #tpu.memory_space<vmem>>, vector<192x128xbf16>
    %cst = arith.constant dense<0.000000e+00> : vector<4x128xf32>
    %5 = tpu.matmul %1, %4, %cst {dimension_numbers = #tpu.dot_dimension_numbers<[1], [0], [0], [1], [0, 0, 1, 1], [], []>} : vector<4x192xbf16>, vector<192x128xbf16>, vector<4x128xf32> -> vector<4x128xf32>
    %c0_7 = arith.constant 0 : index
    %c0_8 = arith.constant 0 : index
    %6 = vector.load %arg3[%c0_7, %c0_8] : memref<1x128xf32, #tpu.memory_space<vmem>>, vector<1x128xf32>
    %7 = vector.broadcast %6 : vector<1x128xf32> to vector<4x128xf32>
    %8 = arith.addf %5, %7 : vector<4x128xf32>
    %9 = vector.extract_strided_slice %3 {offsets = [1, 0], sizes = [4, 128], strides = [1, 1]} : vector<5x128xf32> to vector<4x128xf32>
    %10 = arith.addf %8, %9 : vector<4x128xf32>
    %c0_9 = arith.constant 0 : index
    %c0_10 = arith.constant 0 : index
    %c0_11 = arith.constant 0 : index
    %11 = vector.load %arg4[%c0_9, %c0_10, %c0_11] : memref<1x1x128xf32, #tpu.memory_space<vmem>>, vector<1x1x128xf32>
    %12 = vector.shape_cast %11 : vector<1x1x128xf32> to vector<1x128xf32>
    %13 = vector.extract_strided_slice %3 {offsets = [0, 0], sizes = [1, 128], strides = [1, 1]} : vector<5x128xf32> to vector<1x128xf32>
    %14 = arith.addf %12, %13 : vector<1x128xf32>
    %cst_12 = arith.constant 0.000000e+00 : f32
    %15 = vector.broadcast %cst_12 : f32 to vector<3x128xf32>
    %16 = tpu.concatenate %14, %10, %15 in 0 : vector<1x128xf32>, vector<4x128xf32>, vector<3x128xf32> -> vector<8x128xf32>
    %17 = arith.truncf %16 : vector<8x128xf32> to vector<8x128xbf16>
    %c0_13 = arith.constant 0 : index
    %c0_14 = arith.constant 0 : index
    %c0_15 = arith.constant 0 : index
    %18 = vector.load %arg6[%c0_13, %c0_14, %c0_15] : memref<1x8x128xbf16, #tpu.memory_space<vmem>>, vector<1x8x128xbf16>
    %19 = vector.shape_cast %18 : vector<1x8x128xbf16> to vector<8x128xbf16>
    %20 = vector.shape_cast %17 : vector<8x128xbf16> to vector<1x8x128xbf16>
    tpu.vector_store %arg6[%c0_13, %c0_14, %c0_15], %20 {strides = array<i32>} : memref<1x8x128xbf16, #tpu.memory_space<vmem>>, vector<1x8x128xbf16>,
    return
  }
  func.func @transform_0(%arg0: i32) -> (i32, i32, i32) {
    %c0_i32 = arith.constant 0 : i32
    %c0_i32_0 = arith.constant 0 : i32
    %c0_i32_1 = arith.constant 0 : i32
    return %arg0, %c0_i32, %c0_i32_0 : i32, i32, i32
  }
  func.func @transform_1(%arg0: i32) -> (i32, i32) {
    %c0_i32 = arith.constant 0 : i32
    %c0_i32_0 = arith.constant 0 : i32
    %c0_i32_1 = arith.constant 0 : i32
    return %c0_i32, %c0_i32_0 : i32, i32
  }
  func.func @transform_2(%arg0: i32) -> (i32, i32) {
    %c0_i32 = arith.constant 0 : i32
    %c0_i32_0 = arith.constant 0 : i32
    %c0_i32_1 = arith.constant 0 : i32
    return %c0_i32, %c0_i32_0 : i32, i32
  }
  func.func @transform_3(%arg0: i32) -> (i32, i32, i32) {
    %c0_i32 = arith.constant 0 : i32
    %c0_i32_0 = arith.constant 0 : i32
    %c0_i32_1 = arith.constant 0 : i32
    %c0_i32_2 = arith.constant 0 : i32
    return %c0_i32, %c0_i32_0, %c0_i32_1 : i32, i32, i32
  }
  func.func @transform_4(%arg0: i32) -> (i32, i32, i32) {
    %c0_i32 = arith.constant 0 : i32
    %c0_i32_0 = arith.constant 0 : i32
    %c0_i32_1 = arith.constant 0 : i32
    %c0_i32_2 = arith.constant 0 : i32
    return %c0_i32, %c0_i32_0, %c0_i32_1 : i32, i32, i32
  }
  func.func @transform_5(%arg0: i32) -> (i32, i32, i32) {
    %c0_i32 = arith.constant 0 : i32
    %c0_i32_0 = arith.constant 0 : i32
    %c0_i32_1 = arith.constant 0 : i32
    return %arg0, %c0_i32, %c0_i32_0 : i32, i32, i32
  }
}

module attributes {stable_mosaic.version = 11 : i64} {
  func.func @_flash_attn_kernel(%arg0: i32, %arg1: i32, %arg2: i32, %arg3: memref<1x8x128xbf16, #tpu.memory_space<vmem>>, %arg4: memref<1x8x128xbf16, #tpu.memory_space<vmem>>, %arg5: memref<1x8x128xbf16, #tpu.memory_space<vmem>>, %arg6: memref<1x8xf32, #tpu.memory_space<vmem>>, %arg7: memref<1x8x128xbf16, #tpu.memory_space<vmem>>, %arg8: memref<4x8x1xf32, #tpu.memory_space<vmem>>, %arg9: memref<4x8x1xf32, #tpu.memory_space<vmem>>, %arg10: memref<4x8x32xf32, #tpu.memory_space<vmem>>) attributes {dimension_semantics = [#tpu.dimension_semantics<parallel>, #tpu.dimension_semantics<parallel>, #tpu.dimension_semantics<arbitrary>], iteration_bounds = array<i64: 2, 1, 1>, scalar_prefetch = 0 : i64, scratch_operands = 3 : i64, tpu.core_type = #tpu.core_type<tc>, window_params = [{transform_indices = @transform_0, window_bounds = array<i64: 1, 8, 128>}, {transform_indices = @transform_1, window_bounds = array<i64: 1, 8, 128>}, {transform_indices = @transform_2, window_bounds = array<i64: 1, 8, 128>}, {transform_indices = @transform_3, window_bounds = array<i64: 1, 8>}, {transform_indices = @transform_4, window_bounds = array<i64: 1, 8, 128>}]} {
    %c0_i32 = arith.constant 0 : i32
    %0 = arith.cmpi eq, %arg2, %c0_i32 : i32
    %1 = arith.extui %0 : i1 to i32
    %c0_i32_0 = arith.constant 0 : i32
    %2 = arith.cmpi ne, %1, %c0_i32_0 : i32
    scf.if %2 {
      %cst_101 = arith.constant -1.000000e+30 : f32
      %173 = vector.broadcast %cst_101 : f32 to vector<4x8x1xf32>
      %c0_102 = arith.constant 0 : index
      %c0_103 = arith.constant 0 : index
      %c0_104 = arith.constant 0 : index
      %174 = vector.load %arg8[%c0_102, %c0_103, %c0_104] : memref<4x8x1xf32, #tpu.memory_space<vmem>>, vector<4x8x1xf32>
      tpu.vector_store %arg8[%c0_102, %c0_103, %c0_104], %173 {strides = array<i32>} : memref<4x8x1xf32, #tpu.memory_space<vmem>>, vector<4x8x1xf32>,
      %cst_105 = arith.constant 0.000000e+00 : f32
      %175 = vector.broadcast %cst_105 : f32 to vector<4x8x1xf32>
      %c0_106 = arith.constant 0 : index
      %c0_107 = arith.constant 0 : index
      %c0_108 = arith.constant 0 : index
      %176 = vector.load %arg9[%c0_106, %c0_107, %c0_108] : memref<4x8x1xf32, #tpu.memory_space<vmem>>, vector<4x8x1xf32>
      tpu.vector_store %arg9[%c0_106, %c0_107, %c0_108], %175 {strides = array<i32>} : memref<4x8x1xf32, #tpu.memory_space<vmem>>, vector<4x8x1xf32>,
      %cst_109 = arith.constant 0.000000e+00 : f32
      %177 = vector.broadcast %cst_109 : f32 to vector<4x8x32xf32>
      %c0_110 = arith.constant 0 : index
      %c0_111 = arith.constant 0 : index
      %c0_112 = arith.constant 0 : index
      %178 = vector.load %arg10[%c0_110, %c0_111, %c0_112] : memref<4x8x32xf32, #tpu.memory_space<vmem>>, vector<4x8x32xf32>
      tpu.vector_store %arg10[%c0_110, %c0_111, %c0_112], %177 {strides = array<i32>} : memref<4x8x32xf32, #tpu.memory_space<vmem>>, vector<4x8x32xf32>,
    } else {
    }
    %c0 = arith.constant 0 : index
    %c0_1 = arith.constant 0 : index
    %c0_2 = arith.constant 0 : index
    %3 = vector.load %arg3[%c0, %c0_1, %c0_2] : memref<1x8x128xbf16, #tpu.memory_space<vmem>>, vector<1x8x128xbf16>
    %4 = vector.shape_cast %3 : vector<1x8x128xbf16> to vector<8x128xbf16>
    %c0_3 = arith.constant 0 : index
    %c0_4 = arith.constant 0 : index
    %c0_5 = arith.constant 0 : index
    %5 = vector.load %arg4[%c0_3, %c0_4, %c0_5] : memref<1x8x128xbf16, #tpu.memory_space<vmem>>, vector<1x8x128xbf16>
    %6 = vector.shape_cast %5 : vector<1x8x128xbf16> to vector<8x128xbf16>
    %c0_6 = arith.constant 0 : index
    %c0_7 = arith.constant 0 : index
    %c0_8 = arith.constant 0 : index
    %7 = vector.load %arg5[%c0_6, %c0_7, %c0_8] : memref<1x8x128xbf16, #tpu.memory_space<vmem>>, vector<1x8x128xbf16>
    %8 = vector.shape_cast %7 : vector<1x8x128xbf16> to vector<8x128xbf16>
    %c0_9 = arith.constant 0 : index
    %c0_10 = arith.constant 0 : index
    %9 = vector.load %arg6[%c0_9, %c0_10] : memref<1x8xf32, #tpu.memory_space<vmem>>, vector<1x8xf32>
    %10 = vector.extract_strided_slice %4 {offsets = [0, 0], sizes = [8, 32], strides = [1, 1]} : vector<8x128xbf16> to vector<8x32xbf16>
    %11 = vector.extract_strided_slice %6 {offsets = [0, 0], sizes = [8, 32], strides = [1, 1]} : vector<8x128xbf16> to vector<8x32xbf16>
    %12 = vector.extract_strided_slice %8 {offsets = [0, 0], sizes = [8, 32], strides = [1, 1]} : vector<8x128xbf16> to vector<8x32xbf16>
    %cst = arith.constant dense<0.000000e+00> : vector<8x8xf32>
    %13 = tpu.matmul %10, %11, %cst {dimension_numbers = #tpu.dot_dimension_numbers<[1], [1], [0], [0], [0, 0, 1, 0], [], []>} : vector<8x32xbf16>, vector<8x32xbf16>, vector<8x8xf32> -> vector<8x8xf32>
    %cst_11 = arith.constant 0.176776692 : f32
    %14 = vector.broadcast %cst_11 : f32 to vector<8x8xf32>
    %15 = arith.mulf %13, %14 : vector<8x8xf32>
    %16 = vector.broadcast %9 : vector<1x8xf32> to vector<8x8xf32>
    %17 = arith.addf %15, %16 : vector<8x8xf32>
    %c0_12 = arith.constant 0 : index
    %c0_13 = arith.constant 0 : index
    %c0_14 = arith.constant 0 : index
    %18 = vector.load %arg8[%c0_12, %c0_13, %c0_14] : memref<4x8x1xf32, #tpu.memory_space<vmem>>, vector<1x8x1xf32>
    %19 = vector.shape_cast %18 : vector<1x8x1xf32> to vector<8x1xf32>
    %cst_15 = arith.constant dense<0xFF800000> : vector<8xf32>
    %20 = vector.multi_reduction <maximumf>, %17, %cst_15 [1] : vector<8x8xf32> to vector<8xf32>
    %21 = vector.shape_cast %20 : vector<8xf32> to vector<8x1xf32>
    %22 = arith.maximumf %19, %21 : vector<8x1xf32>
    %23 = arith.subf %19, %22 : vector<8x1xf32>
    %24 = math.exp %23 : vector<8x1xf32>
    %25 = vector.broadcast %22 : vector<8x1xf32> to vector<8x8xf32>
    %26 = arith.subf %17, %25 : vector<8x8xf32>
    %27 = math.exp %26 : vector<8x8xf32>
    %c0_16 = arith.constant 0 : index
    %c0_17 = arith.constant 0 : index
    %c0_18 = arith.constant 0 : index
    %28 = vector.load %arg9[%c0_16, %c0_17, %c0_18] : memref<4x8x1xf32, #tpu.memory_space<vmem>>, vector<1x8x1xf32>
    %29 = vector.shape_cast %28 : vector<1x8x1xf32> to vector<8x1xf32>
    %30 = arith.mulf %24, %29 : vector<8x1xf32>
    %cst_19 = arith.constant dense<0.000000e+00> : vector<8xf32>
    %31 = vector.multi_reduction <add>, %27, %cst_19 [1] : vector<8x8xf32> to vector<8xf32>
    %32 = vector.shape_cast %31 : vector<8xf32> to vector<8x1xf32>
    %33 = arith.addf %30, %32 : vector<8x1xf32>
    %c0_20 = arith.constant 0 : index
    %c0_21 = arith.constant 0 : index
    %c0_22 = arith.constant 0 : index
    %34 = vector.load %arg9[%c0_20, %c0_21, %c0_22] : memref<4x8x1xf32, #tpu.memory_space<vmem>>, vector<1x8x1xf32>
    %35 = vector.shape_cast %34 : vector<1x8x1xf32> to vector<8x1xf32>
    %36 = vector.shape_cast %33 : vector<8x1xf32> to vector<1x8x1xf32>
    tpu.vector_store %arg9[%c0_20, %c0_21, %c0_22], %36 {strides = array<i32>} : memref<4x8x1xf32, #tpu.memory_space<vmem>>, vector<1x8x1xf32>,
    %37 = arith.truncf %27 : vector<8x8xf32> to vector<8x8xbf16>
    %cst_23 = arith.constant dense<0.000000e+00> : vector<8x32xf32>
    %38 = tpu.matmul %37, %12, %cst_23 {dimension_numbers = #tpu.dot_dimension_numbers<[1], [0], [0], [1], [0, 0, 1, 1], [], []>} : vector<8x8xbf16>, vector<8x32xbf16>, vector<8x32xf32> -> vector<8x32xf32>
    %c0_24 = arith.constant 0 : index
    %c0_25 = arith.constant 0 : index
    %c0_26 = arith.constant 0 : index
    %39 = vector.load %arg10[%c0_24, %c0_25, %c0_26] : memref<4x8x32xf32, #tpu.memory_space<vmem>>, vector<1x8x32xf32>
    %40 = vector.shape_cast %39 : vector<1x8x32xf32> to vector<8x32xf32>
    %41 = vector.broadcast %24 : vector<8x1xf32> to vector<8x32xf32>
    %42 = arith.mulf %41, %40 : vector<8x32xf32>
    %43 = arith.addf %42, %38 : vector<8x32xf32>
    %c0_27 = arith.constant 0 : index
    %c0_28 = arith.constant 0 : index
    %c0_29 = arith.constant 0 : index
    %44 = vector.load %arg10[%c0_27, %c0_28, %c0_29] : memref<4x8x32xf32, #tpu.memory_space<vmem>>, vector<1x8x32xf32>
    %45 = vector.shape_cast %44 : vector<1x8x32xf32> to vector<8x32xf32>
    %46 = vector.shape_cast %43 : vector<8x32xf32> to vector<1x8x32xf32>
    tpu.vector_store %arg10[%c0_27, %c0_28, %c0_29], %46 {strides = array<i32>} : memref<4x8x32xf32, #tpu.memory_space<vmem>>, vector<1x8x32xf32>,
    %c0_30 = arith.constant 0 : index
    %c0_31 = arith.constant 0 : index
    %c0_32 = arith.constant 0 : index
    %47 = vector.load %arg8[%c0_30, %c0_31, %c0_32] : memref<4x8x1xf32, #tpu.memory_space<vmem>>, vector<1x8x1xf32>
    %48 = vector.shape_cast %47 : vector<1x8x1xf32> to vector<8x1xf32>
    %49 = vector.shape_cast %22 : vector<8x1xf32> to vector<1x8x1xf32>
    tpu.vector_store %arg8[%c0_30, %c0_31, %c0_32], %49 {strides = array<i32>} : memref<4x8x1xf32, #tpu.memory_space<vmem>>, vector<1x8x1xf32>,
    %50 = vector.extract_strided_slice %4 {offsets = [0, 32], sizes = [8, 32], strides = [1, 1]} : vector<8x128xbf16> to vector<8x32xbf16>
    %51 = vector.extract_strided_slice %6 {offsets = [0, 32], sizes = [8, 32], strides = [1, 1]} : vector<8x128xbf16> to vector<8x32xbf16>
    %52 = vector.extract_strided_slice %8 {offsets = [0, 32], sizes = [8, 32], strides = [1, 1]} : vector<8x128xbf16> to vector<8x32xbf16>
    %cst_33 = arith.constant dense<0.000000e+00> : vector<8x8xf32>
    %53 = tpu.matmul %50, %51, %cst_33 {dimension_numbers = #tpu.dot_dimension_numbers<[1], [1], [0], [0], [0, 0, 1, 0], [], []>} : vector<8x32xbf16>, vector<8x32xbf16>, vector<8x8xf32> -> vector<8x8xf32>
    %cst_34 = arith.constant 0.176776692 : f32
    %54 = vector.broadcast %cst_34 : f32 to vector<8x8xf32>
    %55 = arith.mulf %53, %54 : vector<8x8xf32>
    %56 = vector.broadcast %9 : vector<1x8xf32> to vector<8x8xf32>
    %57 = arith.addf %55, %56 : vector<8x8xf32>
    %c1 = arith.constant 1 : index
    %c0_35 = arith.constant 0 : index
    %c0_36 = arith.constant 0 : index
    %58 = vector.load %arg8[%c1, %c0_35, %c0_36] : memref<4x8x1xf32, #tpu.memory_space<vmem>>, vector<1x8x1xf32>
    %59 = vector.shape_cast %58 : vector<1x8x1xf32> to vector<8x1xf32>
    %cst_37 = arith.constant dense<0xFF800000> : vector<8xf32>
    %60 = vector.multi_reduction <maximumf>, %57, %cst_37 [1] : vector<8x8xf32> to vector<8xf32>
    %61 = vector.shape_cast %60 : vector<8xf32> to vector<8x1xf32>
    %62 = arith.maximumf %59, %61 : vector<8x1xf32>
    %63 = arith.subf %59, %62 : vector<8x1xf32>
    %64 = math.exp %63 : vector<8x1xf32>
    %65 = vector.broadcast %62 : vector<8x1xf32> to vector<8x8xf32>
    %66 = arith.subf %57, %65 : vector<8x8xf32>
    %67 = math.exp %66 : vector<8x8xf32>
    %c1_38 = arith.constant 1 : index
    %c0_39 = arith.constant 0 : index
    %c0_40 = arith.constant 0 : index
    %68 = vector.load %arg9[%c1_38, %c0_39, %c0_40] : memref<4x8x1xf32, #tpu.memory_space<vmem>>, vector<1x8x1xf32>
    %69 = vector.shape_cast %68 : vector<1x8x1xf32> to vector<8x1xf32>
    %70 = arith.mulf %64, %69 : vector<8x1xf32>
    %cst_41 = arith.constant dense<0.000000e+00> : vector<8xf32>
    %71 = vector.multi_reduction <add>, %67, %cst_41 [1] : vector<8x8xf32> to vector<8xf32>
    %72 = vector.shape_cast %71 : vector<8xf32> to vector<8x1xf32>
    %73 = arith.addf %70, %72 : vector<8x1xf32>
    %c1_42 = arith.constant 1 : index
    %c0_43 = arith.constant 0 : index
    %c0_44 = arith.constant 0 : index
    %74 = vector.load %arg9[%c1_42, %c0_43, %c0_44] : memref<4x8x1xf32, #tpu.memory_space<vmem>>, vector<1x8x1xf32>
    %75 = vector.shape_cast %74 : vector<1x8x1xf32> to vector<8x1xf32>
    %76 = vector.shape_cast %73 : vector<8x1xf32> to vector<1x8x1xf32>
    tpu.vector_store %arg9[%c1_42, %c0_43, %c0_44], %76 {strides = array<i32>} : memref<4x8x1xf32, #tpu.memory_space<vmem>>, vector<1x8x1xf32>,
    %77 = arith.truncf %67 : vector<8x8xf32> to vector<8x8xbf16>
    %cst_45 = arith.constant dense<0.000000e+00> : vector<8x32xf32>
    %78 = tpu.matmul %77, %52, %cst_45 {dimension_numbers = #tpu.dot_dimension_numbers<[1], [0], [0], [1], [0, 0, 1, 1], [], []>} : vector<8x8xbf16>, vector<8x32xbf16>, vector<8x32xf32> -> vector<8x32xf32>
    %c1_46 = arith.constant 1 : index
    %c0_47 = arith.constant 0 : index
    %c0_48 = arith.constant 0 : index
    %79 = vector.load %arg10[%c1_46, %c0_47, %c0_48] : memref<4x8x32xf32, #tpu.memory_space<vmem>>, vector<1x8x32xf32>
    %80 = vector.shape_cast %79 : vector<1x8x32xf32> to vector<8x32xf32>
    %81 = vector.broadcast %64 : vector<8x1xf32> to vector<8x32xf32>
    %82 = arith.mulf %81, %80 : vector<8x32xf32>
    %83 = arith.addf %82, %78 : vector<8x32xf32>
    %c1_49 = arith.constant 1 : index
    %c0_50 = arith.constant 0 : index
    %c0_51 = arith.constant 0 : index
    %84 = vector.load %arg10[%c1_49, %c0_50, %c0_51] : memref<4x8x32xf32, #tpu.memory_space<vmem>>, vector<1x8x32xf32>
    %85 = vector.shape_cast %84 : vector<1x8x32xf32> to vector<8x32xf32>
    %86 = vector.shape_cast %83 : vector<8x32xf32> to vector<1x8x32xf32>
    tpu.vector_store %arg10[%c1_49, %c0_50, %c0_51], %86 {strides = array<i32>} : memref<4x8x32xf32, #tpu.memory_space<vmem>>, vector<1x8x32xf32>,
    %c1_52 = arith.constant 1 : index
    %c0_53 = arith.constant 0 : index
    %c0_54 = arith.constant 0 : index
    %87 = vector.load %arg8[%c1_52, %c0_53, %c0_54] : memref<4x8x1xf32, #tpu.memory_space<vmem>>, vector<1x8x1xf32>
    %88 = vector.shape_cast %87 : vector<1x8x1xf32> to vector<8x1xf32>
    %89 = vector.shape_cast %62 : vector<8x1xf32> to vector<1x8x1xf32>
    tpu.vector_store %arg8[%c1_52, %c0_53, %c0_54], %89 {strides = array<i32>} : memref<4x8x1xf32, #tpu.memory_space<vmem>>, vector<1x8x1xf32>,
    %90 = vector.extract_strided_slice %4 {offsets = [0, 64], sizes = [8, 32], strides = [1, 1]} : vector<8x128xbf16> to vector<8x32xbf16>
    %91 = vector.extract_strided_slice %6 {offsets = [0, 64], sizes = [8, 32], strides = [1, 1]} : vector<8x128xbf16> to vector<8x32xbf16>
    %92 = vector.extract_strided_slice %8 {offsets = [0, 64], sizes = [8, 32], strides = [1, 1]} : vector<8x128xbf16> to vector<8x32xbf16>
    %cst_55 = arith.constant dense<0.000000e+00> : vector<8x8xf32>
    %93 = tpu.matmul %90, %91, %cst_55 {dimension_numbers = #tpu.dot_dimension_numbers<[1], [1], [0], [0], [0, 0, 1, 0], [], []>} : vector<8x32xbf16>, vector<8x32xbf16>, vector<8x8xf32> -> vector<8x8xf32>
    %cst_56 = arith.constant 0.176776692 : f32
    %94 = vector.broadcast %cst_56 : f32 to vector<8x8xf32>
    %95 = arith.mulf %93, %94 : vector<8x8xf32>
    %96 = vector.broadcast %9 : vector<1x8xf32> to vector<8x8xf32>
    %97 = arith.addf %95, %96 : vector<8x8xf32>
    %c2 = arith.constant 2 : index
    %c0_57 = arith.constant 0 : index
    %c0_58 = arith.constant 0 : index
    %98 = vector.load %arg8[%c2, %c0_57, %c0_58] : memref<4x8x1xf32, #tpu.memory_space<vmem>>, vector<1x8x1xf32>
    %99 = vector.shape_cast %98 : vector<1x8x1xf32> to vector<8x1xf32>
    %cst_59 = arith.constant dense<0xFF800000> : vector<8xf32>
    %100 = vector.multi_reduction <maximumf>, %97, %cst_59 [1] : vector<8x8xf32> to vector<8xf32>
    %101 = vector.shape_cast %100 : vector<8xf32> to vector<8x1xf32>
    %102 = arith.maximumf %99, %101 : vector<8x1xf32>
    %103 = arith.subf %99, %102 : vector<8x1xf32>
    %104 = math.exp %103 : vector<8x1xf32>
    %105 = vector.broadcast %102 : vector<8x1xf32> to vector<8x8xf32>
    %106 = arith.subf %97, %105 : vector<8x8xf32>
    %107 = math.exp %106 : vector<8x8xf32>
    %c2_60 = arith.constant 2 : index
    %c0_61 = arith.constant 0 : index
    %c0_62 = arith.constant 0 : index
    %108 = vector.load %arg9[%c2_60, %c0_61, %c0_62] : memref<4x8x1xf32, #tpu.memory_space<vmem>>, vector<1x8x1xf32>
    %109 = vector.shape_cast %108 : vector<1x8x1xf32> to vector<8x1xf32>
    %110 = arith.mulf %104, %109 : vector<8x1xf32>
    %cst_63 = arith.constant dense<0.000000e+00> : vector<8xf32>
    %111 = vector.multi_reduction <add>, %107, %cst_63 [1] : vector<8x8xf32> to vector<8xf32>
    %112 = vector.shape_cast %111 : vector<8xf32> to vector<8x1xf32>
    %113 = arith.addf %110, %112 : vector<8x1xf32>
    %c2_64 = arith.constant 2 : index
    %c0_65 = arith.constant 0 : index
    %c0_66 = arith.constant 0 : index
    %114 = vector.load %arg9[%c2_64, %c0_65, %c0_66] : memref<4x8x1xf32, #tpu.memory_space<vmem>>, vector<1x8x1xf32>
    %115 = vector.shape_cast %114 : vector<1x8x1xf32> to vector<8x1xf32>
    %116 = vector.shape_cast %113 : vector<8x1xf32> to vector<1x8x1xf32>
    tpu.vector_store %arg9[%c2_64, %c0_65, %c0_66], %116 {strides = array<i32>} : memref<4x8x1xf32, #tpu.memory_space<vmem>>, vector<1x8x1xf32>,
    %117 = arith.truncf %107 : vector<8x8xf32> to vector<8x8xbf16>
    %cst_67 = arith.constant dense<0.000000e+00> : vector<8x32xf32>
    %118 = tpu.matmul %117, %92, %cst_67 {dimension_numbers = #tpu.dot_dimension_numbers<[1], [0], [0], [1], [0, 0, 1, 1], [], []>} : vector<8x8xbf16>, vector<8x32xbf16>, vector<8x32xf32> -> vector<8x32xf32>
    %c2_68 = arith.constant 2 : index
    %c0_69 = arith.constant 0 : index
    %c0_70 = arith.constant 0 : index
    %119 = vector.load %arg10[%c2_68, %c0_69, %c0_70] : memref<4x8x32xf32, #tpu.memory_space<vmem>>, vector<1x8x32xf32>
    %120 = vector.shape_cast %119 : vector<1x8x32xf32> to vector<8x32xf32>
    %121 = vector.broadcast %104 : vector<8x1xf32> to vector<8x32xf32>
    %122 = arith.mulf %121, %120 : vector<8x32xf32>
    %123 = arith.addf %122, %118 : vector<8x32xf32>
    %c2_71 = arith.constant 2 : index
    %c0_72 = arith.constant 0 : index
    %c0_73 = arith.constant 0 : index
    %124 = vector.load %arg10[%c2_71, %c0_72, %c0_73] : memref<4x8x32xf32, #tpu.memory_space<vmem>>, vector<1x8x32xf32>
    %125 = vector.shape_cast %124 : vector<1x8x32xf32> to vector<8x32xf32>
    %126 = vector.shape_cast %123 : vector<8x32xf32> to vector<1x8x32xf32>
    tpu.vector_store %arg10[%c2_71, %c0_72, %c0_73], %126 {strides = array<i32>} : memref<4x8x32xf32, #tpu.memory_space<vmem>>, vector<1x8x32xf32>,
    %c2_74 = arith.constant 2 : index
    %c0_75 = arith.constant 0 : index
    %c0_76 = arith.constant 0 : index
    %127 = vector.load %arg8[%c2_74, %c0_75, %c0_76] : memref<4x8x1xf32, #tpu.memory_space<vmem>>, vector<1x8x1xf32>
    %128 = vector.shape_cast %127 : vector<1x8x1xf32> to vector<8x1xf32>
    %129 = vector.shape_cast %102 : vector<8x1xf32> to vector<1x8x1xf32>
    tpu.vector_store %arg8[%c2_74, %c0_75, %c0_76], %129 {strides = array<i32>} : memref<4x8x1xf32, #tpu.memory_space<vmem>>, vector<1x8x1xf32>,
    %130 = vector.extract_strided_slice %4 {offsets = [0, 96], sizes = [8, 32], strides = [1, 1]} : vector<8x128xbf16> to vector<8x32xbf16>
    %131 = vector.extract_strided_slice %6 {offsets = [0, 96], sizes = [8, 32], strides = [1, 1]} : vector<8x128xbf16> to vector<8x32xbf16>
    %132 = vector.extract_strided_slice %8 {offsets = [0, 96], sizes = [8, 32], strides = [1, 1]} : vector<8x128xbf16> to vector<8x32xbf16>
    %cst_77 = arith.constant dense<0.000000e+00> : vector<8x8xf32>
    %133 = tpu.matmul %130, %131, %cst_77 {dimension_numbers = #tpu.dot_dimension_numbers<[1], [1], [0], [0], [0, 0, 1, 0], [], []>} : vector<8x32xbf16>, vector<8x32xbf16>, vector<8x8xf32> -> vector<8x8xf32>
    %cst_78 = arith.constant 0.176776692 : f32
    %134 = vector.broadcast %cst_78 : f32 to vector<8x8xf32>
    %135 = arith.mulf %133, %134 : vector<8x8xf32>
    %136 = vector.broadcast %9 : vector<1x8xf32> to vector<8x8xf32>
    %137 = arith.addf %135, %136 : vector<8x8xf32>
    %c3 = arith.constant 3 : index
    %c0_79 = arith.constant 0 : index
    %c0_80 = arith.constant 0 : index
    %138 = vector.load %arg8[%c3, %c0_79, %c0_80] : memref<4x8x1xf32, #tpu.memory_space<vmem>>, vector<1x8x1xf32>
    %139 = vector.shape_cast %138 : vector<1x8x1xf32> to vector<8x1xf32>
    %cst_81 = arith.constant dense<0xFF800000> : vector<8xf32>
    %140 = vector.multi_reduction <maximumf>, %137, %cst_81 [1] : vector<8x8xf32> to vector<8xf32>
    %141 = vector.shape_cast %140 : vector<8xf32> to vector<8x1xf32>
    %142 = arith.maximumf %139, %141 : vector<8x1xf32>
    %143 = arith.subf %139, %142 : vector<8x1xf32>
    %144 = math.exp %143 : vector<8x1xf32>
    %145 = vector.broadcast %142 : vector<8x1xf32> to vector<8x8xf32>
    %146 = arith.subf %137, %145 : vector<8x8xf32>
    %147 = math.exp %146 : vector<8x8xf32>
    %c3_82 = arith.constant 3 : index
    %c0_83 = arith.constant 0 : index
    %c0_84 = arith.constant 0 : index
    %148 = vector.load %arg9[%c3_82, %c0_83, %c0_84] : memref<4x8x1xf32, #tpu.memory_space<vmem>>, vector<1x8x1xf32>
    %149 = vector.shape_cast %148 : vector<1x8x1xf32> to vector<8x1xf32>
    %150 = arith.mulf %144, %149 : vector<8x1xf32>
    %cst_85 = arith.constant dense<0.000000e+00> : vector<8xf32>
    %151 = vector.multi_reduction <add>, %147, %cst_85 [1] : vector<8x8xf32> to vector<8xf32>
    %152 = vector.shape_cast %151 : vector<8xf32> to vector<8x1xf32>
    %153 = arith.addf %150, %152 : vector<8x1xf32>
    %c3_86 = arith.constant 3 : index
    %c0_87 = arith.constant 0 : index
    %c0_88 = arith.constant 0 : index
    %154 = vector.load %arg9[%c3_86, %c0_87, %c0_88] : memref<4x8x1xf32, #tpu.memory_space<vmem>>, vector<1x8x1xf32>
    %155 = vector.shape_cast %154 : vector<1x8x1xf32> to vector<8x1xf32>
    %156 = vector.shape_cast %153 : vector<8x1xf32> to vector<1x8x1xf32>
    tpu.vector_store %arg9[%c3_86, %c0_87, %c0_88], %156 {strides = array<i32>} : memref<4x8x1xf32, #tpu.memory_space<vmem>>, vector<1x8x1xf32>,
    %157 = arith.truncf %147 : vector<8x8xf32> to vector<8x8xbf16>
    %cst_89 = arith.constant dense<0.000000e+00> : vector<8x32xf32>
    %158 = tpu.matmul %157, %132, %cst_89 {dimension_numbers = #tpu.dot_dimension_numbers<[1], [0], [0], [1], [0, 0, 1, 1], [], []>} : vector<8x8xbf16>, vector<8x32xbf16>, vector<8x32xf32> -> vector<8x32xf32>
    %c3_90 = arith.constant 3 : index
    %c0_91 = arith.constant 0 : index
    %c0_92 = arith.constant 0 : index
    %159 = vector.load %arg10[%c3_90, %c0_91, %c0_92] : memref<4x8x32xf32, #tpu.memory_space<vmem>>, vector<1x8x32xf32>
    %160 = vector.shape_cast %159 : vector<1x8x32xf32> to vector<8x32xf32>
    %161 = vector.broadcast %144 : vector<8x1xf32> to vector<8x32xf32>
    %162 = arith.mulf %161, %160 : vector<8x32xf32>
    %163 = arith.addf %162, %158 : vector<8x32xf32>
    %c3_93 = arith.constant 3 : index
    %c0_94 = arith.constant 0 : index
    %c0_95 = arith.constant 0 : index
    %164 = vector.load %arg10[%c3_93, %c0_94, %c0_95] : memref<4x8x32xf32, #tpu.memory_space<vmem>>, vector<1x8x32xf32>
    %165 = vector.shape_cast %164 : vector<1x8x32xf32> to vector<8x32xf32>
    %166 = vector.shape_cast %163 : vector<8x32xf32> to vector<1x8x32xf32>
    tpu.vector_store %arg10[%c3_93, %c0_94, %c0_95], %166 {strides = array<i32>} : memref<4x8x32xf32, #tpu.memory_space<vmem>>, vector<1x8x32xf32>,
    %c3_96 = arith.constant 3 : index
    %c0_97 = arith.constant 0 : index
    %c0_98 = arith.constant 0 : index
    %167 = vector.load %arg8[%c3_96, %c0_97, %c0_98] : memref<4x8x1xf32, #tpu.memory_space<vmem>>, vector<1x8x1xf32>
    %168 = vector.shape_cast %167 : vector<1x8x1xf32> to vector<8x1xf32>
    %169 = vector.shape_cast %142 : vector<8x1xf32> to vector<1x8x1xf32>
    tpu.vector_store %arg8[%c3_96, %c0_97, %c0_98], %169 {strides = array<i32>} : memref<4x8x1xf32, #tpu.memory_space<vmem>>, vector<1x8x1xf32>,
    %c0_i32_99 = arith.constant 0 : i32
    %170 = arith.cmpi eq, %arg2, %c0_i32_99 : i32
    %171 = arith.extui %170 : i1 to i32
    %c0_i32_100 = arith.constant 0 : i32
    %172 = arith.cmpi ne, %171, %c0_i32_100 : i32
    scf.if %172 {
      %c0_101 = arith.constant 0 : index
      %c0_102 = arith.constant 0 : index
      %c0_103 = arith.constant 0 : index
      %173 = vector.load %arg9[%c0_101, %c0_102, %c0_103] : memref<4x8x1xf32, #tpu.memory_space<vmem>>, vector<1x8x1xf32>
      %174 = vector.shape_cast %173 : vector<1x8x1xf32> to vector<8x1xf32>
      %175 = tpu.reciprocal %174 {approx = true} : vector<8x1xf32> -> vector<8x1xf32>
      %c0_104 = arith.constant 0 : index
      %c0_105 = arith.constant 0 : index
      %c0_106 = arith.constant 0 : index
      %176 = vector.load %arg10[%c0_104, %c0_105, %c0_106] : memref<4x8x32xf32, #tpu.memory_space<vmem>>, vector<1x8x32xf32>
      %177 = vector.shape_cast %176 : vector<1x8x32xf32> to vector<8x32xf32>
      %178 = vector.broadcast %175 : vector<8x1xf32> to vector<8x32xf32>
      %179 = arith.mulf %177, %178 : vector<8x32xf32>
      %180 = arith.truncf %179 : vector<8x32xf32> to vector<8x32xbf16>
      %c0_107 = arith.constant 0 : index
      %c0_108 = arith.constant 0 : index
      %c0_109 = arith.constant 0 : index
      %181 = vector.load %arg7[%c0_107, %c0_108, %c0_109] : memref<1x8x128xbf16, #tpu.memory_space<vmem>>, vector<1x8x32xbf16>
      %182 = vector.shape_cast %181 : vector<1x8x32xbf16> to vector<8x32xbf16>
      %183 = vector.shape_cast %180 : vector<8x32xbf16> to vector<1x8x32xbf16>
      tpu.vector_store %arg7[%c0_107, %c0_108, %c0_109], %183 {strides = array<i32>} : memref<1x8x128xbf16, #tpu.memory_space<vmem>>, vector<1x8x32xbf16>,
      %c1_110 = arith.constant 1 : index
      %c0_111 = arith.constant 0 : index
      %c0_112 = arith.constant 0 : index
      %184 = vector.load %arg9[%c1_110, %c0_111, %c0_112] : memref<4x8x1xf32, #tpu.memory_space<vmem>>, vector<1x8x1xf32>
      %185 = vector.shape_cast %184 : vector<1x8x1xf32> to vector<8x1xf32>
      %186 = tpu.reciprocal %185 {approx = true} : vector<8x1xf32> -> vector<8x1xf32>
      %c1_113 = arith.constant 1 : index
      %c0_114 = arith.constant 0 : index
      %c0_115 = arith.constant 0 : index
      %187 = vector.load %arg10[%c1_113, %c0_114, %c0_115] : memref<4x8x32xf32, #tpu.memory_space<vmem>>, vector<1x8x32xf32>
      %188 = vector.shape_cast %187 : vector<1x8x32xf32> to vector<8x32xf32>
      %189 = vector.broadcast %186 : vector<8x1xf32> to vector<8x32xf32>
      %190 = arith.mulf %188, %189 : vector<8x32xf32>
      %191 = arith.truncf %190 : vector<8x32xf32> to vector<8x32xbf16>
      %c0_116 = arith.constant 0 : index
      %c0_117 = arith.constant 0 : index
      %c32 = arith.constant 32 : index
      %192 = vector.load %arg7[%c0_116, %c0_117, %c32] : memref<1x8x128xbf16, #tpu.memory_space<vmem>>, vector<1x8x32xbf16>
      %193 = vector.shape_cast %192 : vector<1x8x32xbf16> to vector<8x32xbf16>
      %194 = vector.shape_cast %191 : vector<8x32xbf16> to vector<1x8x32xbf16>
      tpu.vector_store %arg7[%c0_116, %c0_117, %c32], %194 {strides = array<i32>} : memref<1x8x128xbf16, #tpu.memory_space<vmem>>, vector<1x8x32xbf16>,
      %c2_118 = arith.constant 2 : index
      %c0_119 = arith.constant 0 : index
      %c0_120 = arith.constant 0 : index
      %195 = vector.load %arg9[%c2_118, %c0_119, %c0_120] : memref<4x8x1xf32, #tpu.memory_space<vmem>>, vector<1x8x1xf32>
      %196 = vector.shape_cast %195 : vector<1x8x1xf32> to vector<8x1xf32>
      %197 = tpu.reciprocal %196 {approx = true} : vector<8x1xf32> -> vector<8x1xf32>
      %c2_121 = arith.constant 2 : index
      %c0_122 = arith.constant 0 : index
      %c0_123 = arith.constant 0 : index
      %198 = vector.load %arg10[%c2_121, %c0_122, %c0_123] : memref<4x8x32xf32, #tpu.memory_space<vmem>>, vector<1x8x32xf32>
      %199 = vector.shape_cast %198 : vector<1x8x32xf32> to vector<8x32xf32>
      %200 = vector.broadcast %197 : vector<8x1xf32> to vector<8x32xf32>
      %201 = arith.mulf %199, %200 : vector<8x32xf32>
      %202 = arith.truncf %201 : vector<8x32xf32> to vector<8x32xbf16>
      %c0_124 = arith.constant 0 : index
      %c0_125 = arith.constant 0 : index
      %c64 = arith.constant 64 : index
      %203 = vector.load %arg7[%c0_124, %c0_125, %c64] : memref<1x8x128xbf16, #tpu.memory_space<vmem>>, vector<1x8x32xbf16>
      %204 = vector.shape_cast %203 : vector<1x8x32xbf16> to vector<8x32xbf16>
      %205 = vector.shape_cast %202 : vector<8x32xbf16> to vector<1x8x32xbf16>
      tpu.vector_store %arg7[%c0_124, %c0_125, %c64], %205 {strides = array<i32>} : memref<1x8x128xbf16, #tpu.memory_space<vmem>>, vector<1x8x32xbf16>,
      %c3_126 = arith.constant 3 : index
      %c0_127 = arith.constant 0 : index
      %c0_128 = arith.constant 0 : index
      %206 = vector.load %arg9[%c3_126, %c0_127, %c0_128] : memref<4x8x1xf32, #tpu.memory_space<vmem>>, vector<1x8x1xf32>
      %207 = vector.shape_cast %206 : vector<1x8x1xf32> to vector<8x1xf32>
      %208 = tpu.reciprocal %207 {approx = true} : vector<8x1xf32> -> vector<8x1xf32>
      %c3_129 = arith.constant 3 : index
      %c0_130 = arith.constant 0 : index
      %c0_131 = arith.constant 0 : index
      %209 = vector.load %arg10[%c3_129, %c0_130, %c0_131] : memref<4x8x32xf32, #tpu.memory_space<vmem>>, vector<1x8x32xf32>
      %210 = vector.shape_cast %209 : vector<1x8x32xf32> to vector<8x32xf32>
      %211 = vector.broadcast %208 : vector<8x1xf32> to vector<8x32xf32>
      %212 = arith.mulf %210, %211 : vector<8x32xf32>
      %213 = arith.truncf %212 : vector<8x32xf32> to vector<8x32xbf16>
      %c0_132 = arith.constant 0 : index
      %c0_133 = arith.constant 0 : index
      %c96 = arith.constant 96 : index
      %214 = vector.load %arg7[%c0_132, %c0_133, %c96] : memref<1x8x128xbf16, #tpu.memory_space<vmem>>, vector<1x8x32xbf16>
      %215 = vector.shape_cast %214 : vector<1x8x32xbf16> to vector<8x32xbf16>
      %216 = vector.shape_cast %213 : vector<8x32xbf16> to vector<1x8x32xbf16>
      tpu.vector_store %arg7[%c0_132, %c0_133, %c96], %216 {strides = array<i32>} : memref<1x8x128xbf16, #tpu.memory_space<vmem>>, vector<1x8x32xbf16>,
    } else {
    }
    return
  }
  func.func @transform_0(%arg0: i32, %arg1: i32, %arg2: i32) -> (i32, i32, i32) {
    %c0_i32 = arith.constant 0 : i32
    %c0_i32_0 = arith.constant 0 : i32
    return %arg0, %arg1, %c0_i32 : i32, i32, i32
  }
  func.func @transform_1(%arg0: i32, %arg1: i32, %arg2: i32) -> (i32, i32, i32) {
    %c1_i32 = arith.constant 1 : i32
    %c0_i32 = arith.constant 0 : i32
    return %arg0, %arg2, %c1_i32 : i32, i32, i32
  }
  func.func @transform_2(%arg0: i32, %arg1: i32, %arg2: i32) -> (i32, i32, i32) {
    %c2_i32 = arith.constant 2 : i32
    %c0_i32 = arith.constant 0 : i32
    return %arg0, %arg2, %c2_i32 : i32, i32, i32
  }
  func.func @transform_3(%arg0: i32, %arg1: i32, %arg2: i32) -> (i32, i32) {
    %c0_i32 = arith.constant 0 : i32
    %c0_i32_0 = arith.constant 0 : i32
    return %c0_i32, %arg2 : i32, i32
  }
  func.func @transform_4(%arg0: i32, %arg1: i32, %arg2: i32) -> (i32, i32, i32) {
    %c0_i32 = arith.constant 0 : i32
    %c0_i32_0 = arith.constant 0 : i32
    return %arg0, %arg1, %c0_i32 : i32, i32, i32
  }
}

module attributes {stable_mosaic.version = 11 : i64} {
  func.func @_matmul_kernel(%arg0: i32, %arg1: i32, %arg2: i32, %arg3: memref<16x128xbf16, #tpu.memory_space<vmem>>, %arg4: memref<128x128xbf16, #tpu.memory_space<vmem>>, %arg5: memref<1x128xf32, #tpu.memory_space<vmem>>, %arg6: memref<16x128xbf16, #tpu.memory_space<vmem>>, %arg7: memref<16x128xbf16, #tpu.memory_space<vmem>>, %arg8: memref<16x128xf32, #tpu.memory_space<vmem>>) attributes {dimension_semantics = [#tpu.dimension_semantics<parallel>, #tpu.dimension_semantics<parallel>, #tpu.dimension_semantics<arbitrary>], iteration_bounds = array<i64: 1, 1, 1>, scalar_prefetch = 0 : i64, scratch_operands = 1 : i64, tpu.core_type = #tpu.core_type<tc>, window_params = [{transform_indices = @transform_0, window_bounds = array<i64: 16, 128>}, {transform_indices = @transform_1, window_bounds = array<i64: 128, 128>}, {transform_indices = @transform_2, window_bounds = array<i64: 1, 128>}, {transform_indices = @transform_3, window_bounds = array<i64: 16, 128>}, {transform_indices = @transform_4, window_bounds = array<i64: 16, 128>}]} {
    %c0_i32 = arith.constant 0 : i32
    %0 = arith.cmpi eq, %arg2, %c0_i32 : i32
    %1 = arith.extui %0 : i1 to i32
    %c0_i32_0 = arith.constant 0 : i32
    %2 = arith.cmpi ne, %1, %c0_i32_0 : i32
    scf.if %2 {
      %cst_10 = arith.constant 0.000000e+00 : f32
      %12 = vector.broadcast %cst_10 : f32 to vector<16x128xf32>
      %c0_11 = arith.constant 0 : index
      %c0_12 = arith.constant 0 : index
      %13 = vector.load %arg8[%c0_11, %c0_12] : memref<16x128xf32, #tpu.memory_space<vmem>>, vector<16x128xf32>
      tpu.vector_store %arg8[%c0_11, %c0_12], %12 {strides = array<i32>} : memref<16x128xf32, #tpu.memory_space<vmem>>, vector<16x128xf32>,
    } else {
    }
    %c0 = arith.constant 0 : index
    %c0_1 = arith.constant 0 : index
    %3 = vector.load %arg8[%c0, %c0_1] : memref<16x128xf32, #tpu.memory_space<vmem>>, vector<16x128xf32>
    %c0_2 = arith.constant 0 : index
    %c0_3 = arith.constant 0 : index
    %4 = vector.load %arg3[%c0_2, %c0_3] : memref<16x128xbf16, #tpu.memory_space<vmem>>, vector<16x128xbf16>
    %c0_4 = arith.constant 0 : index
    %c0_5 = arith.constant 0 : index
    %5 = vector.load %arg4[%c0_4, %c0_5] : memref<128x128xbf16, #tpu.memory_space<vmem>>, vector<128x128xbf16>
    %cst = arith.constant dense<0.000000e+00> : vector<16x128xf32>
    %6 = tpu.matmul %4, %5, %cst {dimension_numbers = #tpu.dot_dimension_numbers<[1], [0], [0], [1], [0, 0, 1, 1], [], []>} : vector<16x128xbf16>, vector<128x128xbf16>, vector<16x128xf32> -> vector<16x128xf32>
    %7 = arith.addf %3, %6 : vector<16x128xf32>
    %c0_6 = arith.constant 0 : index
    %c0_7 = arith.constant 0 : index
    %8 = vector.load %arg8[%c0_6, %c0_7] : memref<16x128xf32, #tpu.memory_space<vmem>>, vector<16x128xf32>
    tpu.vector_store %arg8[%c0_6, %c0_7], %7 {strides = array<i32>} : memref<16x128xf32, #tpu.memory_space<vmem>>, vector<16x128xf32>,
    %c0_i32_8 = arith.constant 0 : i32
    %9 = arith.cmpi eq, %arg2, %c0_i32_8 : i32
    %10 = arith.extui %9 : i1 to i32
    %c0_i32_9 = arith.constant 0 : i32
    %11 = arith.cmpi ne, %10, %c0_i32_9 : i32
    scf.if %11 {
      %c0_10 = arith.constant 0 : index
      %c0_11 = arith.constant 0 : index
      %12 = vector.load %arg8[%c0_10, %c0_11] : memref<16x128xf32, #tpu.memory_space<vmem>>, vector<16x128xf32>
      %c0_12 = arith.constant 0 : index
      %c0_13 = arith.constant 0 : index
      %13 = vector.load %arg5[%c0_12, %c0_13] : memref<1x128xf32, #tpu.memory_space<vmem>>, vector<1x128xf32>
      %14 = vector.broadcast %13 : vector<1x128xf32> to vector<16x128xf32>
      %15 = arith.addf %12, %14 : vector<16x128xf32>
      %c0_14 = arith.constant 0 : index
      %c0_15 = arith.constant 0 : index
      %16 = vector.load %arg6[%c0_14, %c0_15] : memref<16x128xbf16, #tpu.memory_space<vmem>>, vector<16x128xbf16>
      %17 = arith.extf %16 : vector<16x128xbf16> to vector<16x128xf32>
      %18 = arith.addf %15, %17 : vector<16x128xf32>
      %19 = arith.truncf %18 : vector<16x128xf32> to vector<16x128xbf16>
      %c0_16 = arith.constant 0 : index
      %c0_17 = arith.constant 0 : index
      %20 = vector.load %arg7[%c0_16, %c0_17] : memref<16x128xbf16, #tpu.memory_space<vmem>>, vector<16x128xbf16>
      tpu.vector_store %arg7[%c0_16, %c0_17], %19 {strides = array<i32>} : memref<16x128xbf16, #tpu.memory_space<vmem>>, vector<16x128xbf16>,
    } else {
    }
    return
  }
  func.func @transform_0(%arg0: i32, %arg1: i32, %arg2: i32) -> (i32, i32) {
    %c0_i32 = arith.constant 0 : i32
    return %arg0, %arg2 : i32, i32
  }
  func.func @transform_1(%arg0: i32, %arg1: i32, %arg2: i32) -> (i32, i32) {
    %c0_i32 = arith.constant 0 : i32
    return %arg2, %arg1 : i32, i32
  }
  func.func @transform_2(%arg0: i32, %arg1: i32, %arg2: i32) -> (i32, i32) {
    %c0_i32 = arith.constant 0 : i32
    %c0_i32_0 = arith.constant 0 : i32
    return %c0_i32, %arg1 : i32, i32
  }
  func.func @transform_3(%arg0: i32, %arg1: i32, %arg2: i32) -> (i32, i32) {
    %c0_i32 = arith.constant 0 : i32
    return %arg0, %arg1 : i32, i32
  }
  func.func @transform_4(%arg0: i32, %arg1: i32, %arg2: i32) -> (i32, i32) {
    %c0_i32 = arith.constant 0 : i32
    return %arg0, %arg1 : i32, i32
  }
}

module attributes {stable_mosaic.version = 11 : i64} {
  func.func @_ln_linear_kernel(%arg0: i32, %arg1: i32, %arg2: memref<16x128xbf16, #tpu.memory_space<vmem>>, %arg3: memref<1x128xf32, #tpu.memory_space<vmem>>, %arg4: memref<1x128xf32, #tpu.memory_space<vmem>>, %arg5: memref<128x256xbf16, #tpu.memory_space<vmem>>, %arg6: memref<1x256xf32, #tpu.memory_space<vmem>>, %arg7: memref<16x256xbf16, #tpu.memory_space<vmem>>, %arg8: memref<16x128xbf16, #tpu.memory_space<vmem>>) attributes {dimension_semantics = [#tpu.dimension_semantics<parallel>, #tpu.dimension_semantics<arbitrary>], iteration_bounds = array<i64: 1, 2>, scalar_prefetch = 0 : i64, scratch_operands = 1 : i64, tpu.core_type = #tpu.core_type<tc>, window_params = [{transform_indices = @transform_0, window_bounds = array<i64: 16, 128>}, {pipeline_mode = #tpu.pipeline_mode<synchronous>, transform_indices = @transform_1, window_bounds = array<i64: 1, 128>}, {pipeline_mode = #tpu.pipeline_mode<synchronous>, transform_indices = @transform_2, window_bounds = array<i64: 1, 128>}, {transform_indices = @transform_3, window_bounds = array<i64: 128, 256>}, {transform_indices = @transform_4, window_bounds = array<i64: 1, 256>}, {transform_indices = @transform_5, window_bounds = array<i64: 16, 256>}]} {
    %c0_i32 = arith.constant 0 : i32
    %0 = arith.cmpi eq, %arg1, %c0_i32 : i32
    %1 = arith.extui %0 : i1 to i32
    %c0_i32_0 = arith.constant 0 : i32
    %2 = arith.cmpi ne, %1, %c0_i32_0 : i32
    scf.if %2 {
      %c0_12 = arith.constant 0 : index
      %c0_13 = arith.constant 0 : index
      %24 = vector.load %arg2[%c0_12, %c0_13] : memref<16x128xbf16, #tpu.memory_space<vmem>>, vector<16x128xbf16>
      %25 = arith.extf %24 : vector<16x128xbf16> to vector<16x128xf32>
      %cst_14 = arith.constant dense<0.000000e+00> : vector<16xf32>
      %26 = vector.multi_reduction <add>, %25, %cst_14 [1] : vector<16x128xf32> to vector<16xf32>
      %27 = vector.shape_cast %26 : vector<16xf32> to vector<16x1xf32>
      %cst_15 = arith.constant 1.280000e+02 : f32
      %28 = vector.broadcast %cst_15 : f32 to vector<16x1xf32>
      %29 = arith.divf %27, %28 : vector<16x1xf32>
      %30 = vector.broadcast %29 : vector<16x1xf32> to vector<16x128xf32>
      %31 = arith.subf %25, %30 : vector<16x128xf32>
      %32 = arith.mulf %31, %31 : vector<16x128xf32>
      %cst_16 = arith.constant dense<0.000000e+00> : vector<16xf32>
      %33 = vector.multi_reduction <add>, %32, %cst_16 [1] : vector<16x128xf32> to vector<16xf32>
      %34 = vector.shape_cast %33 : vector<16xf32> to vector<16x1xf32>
      %cst_17 = arith.constant 1.280000e+02 : f32
      %35 = vector.broadcast %cst_17 : f32 to vector<16x1xf32>
      %36 = arith.divf %34, %35 : vector<16x1xf32>
      %37 = vector.broadcast %29 : vector<16x1xf32> to vector<16x128xf32>
      %38 = arith.subf %25, %37 : vector<16x128xf32>
      %cst_18 = arith.constant 9.99999997E-7 : f32
      %39 = vector.broadcast %cst_18 : f32 to vector<16x1xf32>
      %40 = arith.addf %36, %39 : vector<16x1xf32>
      %41 = math.rsqrt %40 : vector<16x1xf32>
      %42 = vector.broadcast %41 : vector<16x1xf32> to vector<16x128xf32>
      %43 = arith.mulf %38, %42 : vector<16x128xf32>
      %c0_19 = arith.constant 0 : index
      %c0_20 = arith.constant 0 : index
      %44 = vector.load %arg3[%c0_19, %c0_20] : memref<1x128xf32, #tpu.memory_space<vmem>>, vector<1x128xf32>
      %45 = vector.broadcast %44 : vector<1x128xf32> to vector<16x128xf32>
      %46 = arith.mulf %43, %45 : vector<16x128xf32>
      %c0_21 = arith.constant 0 : index
      %c0_22 = arith.constant 0 : index
      %47 = vector.load %arg4[%c0_21, %c0_22] : memref<1x128xf32, #tpu.memory_space<vmem>>, vector<1x128xf32>
      %48 = vector.broadcast %47 : vector<1x128xf32> to vector<16x128xf32>
      %49 = arith.addf %46, %48 : vector<16x128xf32>
      %50 = arith.truncf %49 : vector<16x128xf32> to vector<16x128xbf16>
      %c0_23 = arith.constant 0 : index
      %c0_24 = arith.constant 0 : index
      %51 = vector.load %arg8[%c0_23, %c0_24] : memref<16x128xbf16, #tpu.memory_space<vmem>>, vector<16x128xbf16>
      tpu.vector_store %arg8[%c0_23, %c0_24], %50 {strides = array<i32>} : memref<16x128xbf16, #tpu.memory_space<vmem>>, vector<16x128xbf16>,
    } else {
    }
    %c0 = arith.constant 0 : index
    %c0_1 = arith.constant 0 : index
    %3 = vector.load %arg8[%c0, %c0_1] : memref<16x128xbf16, #tpu.memory_space<vmem>>, vector<16x128xbf16>
    %c0_2 = arith.constant 0 : index
    %c0_3 = arith.constant 0 : index
    %4 = vector.load %arg5[%c0_2, %c0_3] : memref<128x256xbf16, #tpu.memory_space<vmem>>, vector<128x256xbf16>
    %cst = arith.constant dense<0.000000e+00> : vector<16x256xf32>
    %5 = tpu.matmul %3, %4, %cst {dimension_numbers = #tpu.dot_dimension_numbers<[1], [0], [0], [1], [0, 0, 1, 1], [], []>} : vector<16x128xbf16>, vector<128x256xbf16>, vector<16x256xf32> -> vector<16x256xf32>
    %c0_4 = arith.constant 0 : index
    %c0_5 = arith.constant 0 : index
    %6 = vector.load %arg6[%c0_4, %c0_5] : memref<1x256xf32, #tpu.memory_space<vmem>>, vector<1x256xf32>
    %7 = vector.broadcast %6 : vector<1x256xf32> to vector<16x256xf32>
    %8 = arith.addf %5, %7 : vector<16x256xf32>
    %cst_6 = arith.constant 5.000000e-01 : f32
    %9 = vector.broadcast %cst_6 : f32 to vector<16x256xf32>
    %10 = arith.mulf %9, %8 : vector<16x256xf32>
    %11 = arith.mulf %8, %8 : vector<16x256xf32>
    %12 = arith.mulf %11, %8 : vector<16x256xf32>
    %cst_7 = arith.constant 4.471500e-02 : f32
    %13 = vector.broadcast %cst_7 : f32 to vector<16x256xf32>
    %14 = arith.mulf %13, %12 : vector<16x256xf32>
    %15 = arith.addf %8, %14 : vector<16x256xf32>
    %cst_8 = arith.constant 0.797884583 : f32
    %16 = vector.broadcast %cst_8 : f32 to vector<16x256xf32>
    %17 = arith.mulf %16, %15 : vector<16x256xf32>
    %18 = math.tanh %17 : vector<16x256xf32>
    %cst_9 = arith.constant 1.000000e+00 : f32
    %19 = vector.broadcast %cst_9 : f32 to vector<16x256xf32>
    %20 = arith.addf %19, %18 : vector<16x256xf32>
    %21 = arith.mulf %10, %20 : vector<16x256xf32>
    %22 = arith.truncf %21 : vector<16x256xf32> to vector<16x256xbf16>
    %c0_10 = arith.constant 0 : index
    %c0_11 = arith.constant 0 : index
    %23 = vector.load %arg7[%c0_10, %c0_11] : memref<16x256xbf16, #tpu.memory_space<vmem>>, vector<16x256xbf16>
    tpu.vector_store %arg7[%c0_10, %c0_11], %22 {strides = array<i32>} : memref<16x256xbf16, #tpu.memory_space<vmem>>, vector<16x256xbf16>,
    return
  }
  func.func @transform_0(%arg0: i32, %arg1: i32) -> (i32, i32) {
    %c0_i32 = arith.constant 0 : i32
    %c0_i32_0 = arith.constant 0 : i32
    return %arg0, %c0_i32 : i32, i32
  }
  func.func @transform_1(%arg0: i32, %arg1: i32) -> (i32, i32) {
    %c0_i32 = arith.constant 0 : i32
    %c0_i32_0 = arith.constant 0 : i32
    %c0_i32_1 = arith.constant 0 : i32
    return %c0_i32, %c0_i32_0 : i32, i32
  }
  func.func @transform_2(%arg0: i32, %arg1: i32) -> (i32, i32) {
    %c0_i32 = arith.constant 0 : i32
    %c0_i32_0 = arith.constant 0 : i32
    %c0_i32_1 = arith.constant 0 : i32
    return %c0_i32, %c0_i32_0 : i32, i32
  }
  func.func @transform_3(%arg0: i32, %arg1: i32) -> (i32, i32) {
    %c0_i32 = arith.constant 0 : i32
    %c0_i32_0 = arith.constant 0 : i32
    return %c0_i32, %arg1 : i32, i32
  }
  func.func @transform_4(%arg0: i32, %arg1: i32) -> (i32, i32) {
    %c0_i32 = arith.constant 0 : i32
    %c0_i32_0 = arith.constant 0 : i32
    return %c0_i32, %arg1 : i32, i32
  }
  func.func @transform_5(%arg0: i32, %arg1: i32) -> (i32, i32) {
    %c0_i32 = arith.constant 0 : i32
    return %arg0, %arg1 : i32, i32
  }
}

module attributes {stable_mosaic.version = 11 : i64} {
  func.func @_tail_kernel(%arg0: i32, %arg1: memref<2x8x128xbf16, #tpu.memory_space<vmem>>, %arg2: memref<1x128xf32, #tpu.memory_space<vmem>>, %arg3: memref<1x128xf32, #tpu.memory_space<vmem>>, %arg4: memref<128x128xbf16, #tpu.memory_space<vmem>>, %arg5: memref<1x128xf32, #tpu.memory_space<vmem>>, %arg6: memref<2x128xf32, #tpu.memory_space<vmem>>, %arg7: memref<2x128xf32, #tpu.memory_space<vmem>>) attributes {dimension_semantics = [#tpu.dimension_semantics<parallel>], iteration_bounds = array<i64: 1>, scalar_prefetch = 0 : i64, scratch_operands = 0 : i64, tpu.core_type = #tpu.core_type<tc>, window_params = [{transform_indices = @transform_0, window_bounds = array<i64: 2, 8, 128>}, {pipeline_mode = #tpu.pipeline_mode<synchronous>, transform_indices = @transform_1, window_bounds = array<i64: 1, 128>}, {pipeline_mode = #tpu.pipeline_mode<synchronous>, transform_indices = @transform_2, window_bounds = array<i64: 1, 128>}, {pipeline_mode = #tpu.pipeline_mode<synchronous>, transform_indices = @transform_3, window_bounds = array<i64: 128, 128>}, {pipeline_mode = #tpu.pipeline_mode<synchronous>, transform_indices = @transform_4, window_bounds = array<i64: 1, 128>}, {transform_indices = @transform_5, window_bounds = array<i64: 2, 128>}, {transform_indices = @transform_6, window_bounds = array<i64: 2, 128>}]} {
    %c0 = arith.constant 0 : index
    %c0_0 = arith.constant 0 : index
    %c0_1 = arith.constant 0 : index
    %0 = vector.load %arg1[%c0, %c0_0, %c0_1] : memref<2x8x128xbf16, #tpu.memory_space<vmem>>, vector<2x8x128xbf16>
    %1 = arith.extf %0 : vector<2x8x128xbf16> to vector<2x8x128xf32>
    %2 = tpu.iota {dimensions = array<i32: 0>} : vector<8x1xi32>
    %c1_i32 = arith.constant 1 : i32
    %3 = vector.broadcast %c1_i32 : i32 to vector<8x1xi32>
    %4 = arith.cmpi sge, %2, %3 : vector<8x1xi32>
    %c5_i32 = arith.constant 5 : i32
    %5 = vector.broadcast %c5_i32 : i32 to vector<8x1xi32>
    %6 = arith.cmpi slt, %2, %5 : vector<8x1xi32>
    %7 = arith.andi %4, %6 : vector<8x1xi1>
    %8 = arith.extui %7 : vector<8x1xi1> to vector<8x1xi32>
    %9 = arith.sitofp %8 : vector<8x1xi32> to vector<8x1xf32>
    %10 = vector.shape_cast %9 : vector<8x1xf32> to vector<1x8x1xf32>
    %11 = vector.broadcast %10 : vector<1x8x1xf32> to vector<2x8x128xf32>
    %12 = arith.mulf %1, %11 : vector<2x8x128xf32>
    %cst = arith.constant dense<0.000000e+00> : vector<2x128xf32>
    %13 = vector.multi_reduction <add>, %12, %cst [1] : vector<2x8x128xf32> to vector<2x128xf32>
    %cst_2 = arith.constant 2.500000e-01 : f32
    %14 = vector.broadcast %cst_2 : f32 to vector<2x128xf32>
    %15 = arith.mulf %13, %14 : vector<2x128xf32>
    %cst_3 = arith.constant dense<0.000000e+00> : vector<2xf32>
    %16 = vector.multi_reduction <add>, %15, %cst_3 [1] : vector<2x128xf32> to vector<2xf32>
    %17 = vector.shape_cast %16 : vector<2xf32> to vector<2x1xf32>
    %cst_4 = arith.constant 1.280000e+02 : f32
    %18 = vector.broadcast %cst_4 : f32 to vector<2x1xf32>
    %19 = arith.divf %17, %18 : vector<2x1xf32>
    %20 = vector.broadcast %19 : vector<2x1xf32> to vector<2x128xf32>
    %21 = arith.subf %15, %20 : vector<2x128xf32>
    %22 = arith.mulf %21, %21 : vector<2x128xf32>
    %cst_5 = arith.constant dense<0.000000e+00> : vector<2xf32>
    %23 = vector.multi_reduction <add>, %22, %cst_5 [1] : vector<2x128xf32> to vector<2xf32>
    %24 = vector.shape_cast %23 : vector<2xf32> to vector<2x1xf32>
    %cst_6 = arith.constant 1.280000e+02 : f32
    %25 = vector.broadcast %cst_6 : f32 to vector<2x1xf32>
    %26 = arith.divf %24, %25 : vector<2x1xf32>
    %27 = vector.broadcast %19 : vector<2x1xf32> to vector<2x128xf32>
    %28 = arith.subf %15, %27 : vector<2x128xf32>
    %cst_7 = arith.constant 9.99999997E-7 : f32
    %29 = vector.broadcast %cst_7 : f32 to vector<2x1xf32>
    %30 = arith.addf %26, %29 : vector<2x1xf32>
    %31 = math.rsqrt %30 : vector<2x1xf32>
    %32 = vector.broadcast %31 : vector<2x1xf32> to vector<2x128xf32>
    %33 = arith.mulf %28, %32 : vector<2x128xf32>
    %c0_8 = arith.constant 0 : index
    %c0_9 = arith.constant 0 : index
    %34 = vector.load %arg2[%c0_8, %c0_9] : memref<1x128xf32, #tpu.memory_space<vmem>>, vector<1x128xf32>
    %35 = vector.broadcast %34 : vector<1x128xf32> to vector<2x128xf32>
    %36 = arith.mulf %33, %35 : vector<2x128xf32>
    %c0_10 = arith.constant 0 : index
    %c0_11 = arith.constant 0 : index
    %37 = vector.load %arg3[%c0_10, %c0_11] : memref<1x128xf32, #tpu.memory_space<vmem>>, vector<1x128xf32>
    %38 = vector.broadcast %37 : vector<1x128xf32> to vector<2x128xf32>
    %39 = arith.addf %36, %38 : vector<2x128xf32>
    %c0_12 = arith.constant 0 : index
    %c0_13 = arith.constant 0 : index
    %40 = vector.load %arg6[%c0_12, %c0_13] : memref<2x128xf32, #tpu.memory_space<vmem>>, vector<2x128xf32>
    tpu.vector_store %arg6[%c0_12, %c0_13], %39 {strides = array<i32>} : memref<2x128xf32, #tpu.memory_space<vmem>>, vector<2x128xf32>,
    %c0_14 = arith.constant 0 : index
    %c0_15 = arith.constant 0 : index
    %41 = vector.load %arg4[%c0_14, %c0_15] : memref<128x128xbf16, #tpu.memory_space<vmem>>, vector<128x128xbf16>
    %cst_16 = arith.constant dense<0.000000e+00> : vector<2x128xf32>
    %42 = tpu.matmul %39, %41, %cst_16 {dimension_numbers = #tpu.dot_dimension_numbers<[1], [0], [0], [1], [0, 0, 1, 1], [], []>} : vector<2x128xf32>, vector<128x128xbf16>, vector<2x128xf32> -> vector<2x128xf32>
    %c0_17 = arith.constant 0 : index
    %c0_18 = arith.constant 0 : index
    %43 = vector.load %arg5[%c0_17, %c0_18] : memref<1x128xf32, #tpu.memory_space<vmem>>, vector<1x128xf32>
    %44 = vector.broadcast %43 : vector<1x128xf32> to vector<2x128xf32>
    %45 = arith.addf %42, %44 : vector<2x128xf32>
    %c0_19 = arith.constant 0 : index
    %c0_20 = arith.constant 0 : index
    %46 = vector.load %arg7[%c0_19, %c0_20] : memref<2x128xf32, #tpu.memory_space<vmem>>, vector<2x128xf32>
    tpu.vector_store %arg7[%c0_19, %c0_20], %45 {strides = array<i32>} : memref<2x128xf32, #tpu.memory_space<vmem>>, vector<2x128xf32>,
    return
  }
  func.func @transform_0(%arg0: i32) -> (i32, i32, i32) {
    %c0_i32 = arith.constant 0 : i32
    %c0_i32_0 = arith.constant 0 : i32
    %c0_i32_1 = arith.constant 0 : i32
    return %arg0, %c0_i32, %c0_i32_0 : i32, i32, i32
  }
  func.func @transform_1(%arg0: i32) -> (i32, i32) {
    %c0_i32 = arith.constant 0 : i32
    %c0_i32_0 = arith.constant 0 : i32
    %c0_i32_1 = arith.constant 0 : i32
    return %c0_i32, %c0_i32_0 : i32, i32
  }
  func.func @transform_2(%arg0: i32) -> (i32, i32) {
    %c0_i32 = arith.constant 0 : i32
    %c0_i32_0 = arith.constant 0 : i32
    %c0_i32_1 = arith.constant 0 : i32
    return %c0_i32, %c0_i32_0 : i32, i32
  }
  func.func @transform_3(%arg0: i32) -> (i32, i32) {
    %c0_i32 = arith.constant 0 : i32
    %c0_i32_0 = arith.constant 0 : i32
    %c0_i32_1 = arith.constant 0 : i32
    return %c0_i32, %c0_i32_0 : i32, i32
  }
  func.func @transform_4(%arg0: i32) -> (i32, i32) {
    %c0_i32 = arith.constant 0 : i32
    %c0_i32_0 = arith.constant 0 : i32
    %c0_i32_1 = arith.constant 0 : i32
    return %c0_i32, %c0_i32_0 : i32, i32
  }
  func.func @transform_5(%arg0: i32) -> (i32, i32) {
    %c0_i32 = arith.constant 0 : i32
    %c0_i32_0 = arith.constant 0 : i32
    return %arg0, %c0_i32 : i32, i32
  }
  func.func @transform_6(%arg0: i32) -> (i32, i32) {
    %c0_i32 = arith.constant 0 : i32
    %c0_i32_0 = arith.constant 0 : i32
    return %arg0, %c0_i32 : i32, i32
  }
}

module attributes {stable_mosaic.version = 11 : i64} {
  func.func @_matmul_kernel(%arg0: i32, %arg1: i32, %arg2: i32, %arg3: memref<16x512xbf16, #tpu.memory_space<vmem>>, %arg4: memref<512x128xbf16, #tpu.memory_space<vmem>>, %arg5: memref<1x128xf32, #tpu.memory_space<vmem>>, %arg6: memref<16x128xbf16, #tpu.memory_space<vmem>>, %arg7: memref<16x128xbf16, #tpu.memory_space<vmem>>, %arg8: memref<16x128xf32, #tpu.memory_space<vmem>>) attributes {dimension_semantics = [#tpu.dimension_semantics<parallel>, #tpu.dimension_semantics<parallel>, #tpu.dimension_semantics<arbitrary>], iteration_bounds = array<i64: 1, 1, 1>, scalar_prefetch = 0 : i64, scratch_operands = 1 : i64, tpu.core_type = #tpu.core_type<tc>, window_params = [{transform_indices = @transform_0, window_bounds = array<i64: 16, 512>}, {transform_indices = @transform_1, window_bounds = array<i64: 512, 128>}, {transform_indices = @transform_2, window_bounds = array<i64: 1, 128>}, {transform_indices = @transform_3, window_bounds = array<i64: 16, 128>}, {transform_indices = @transform_4, window_bounds = array<i64: 16, 128>}]} {
    %c0_i32 = arith.constant 0 : i32
    %0 = arith.cmpi eq, %arg2, %c0_i32 : i32
    %1 = arith.extui %0 : i1 to i32
    %c0_i32_0 = arith.constant 0 : i32
    %2 = arith.cmpi ne, %1, %c0_i32_0 : i32
    scf.if %2 {
      %cst_10 = arith.constant 0.000000e+00 : f32
      %12 = vector.broadcast %cst_10 : f32 to vector<16x128xf32>
      %c0_11 = arith.constant 0 : index
      %c0_12 = arith.constant 0 : index
      %13 = vector.load %arg8[%c0_11, %c0_12] : memref<16x128xf32, #tpu.memory_space<vmem>>, vector<16x128xf32>
      tpu.vector_store %arg8[%c0_11, %c0_12], %12 {strides = array<i32>} : memref<16x128xf32, #tpu.memory_space<vmem>>, vector<16x128xf32>,
    } else {
    }
    %c0 = arith.constant 0 : index
    %c0_1 = arith.constant 0 : index
    %3 = vector.load %arg8[%c0, %c0_1] : memref<16x128xf32, #tpu.memory_space<vmem>>, vector<16x128xf32>
    %c0_2 = arith.constant 0 : index
    %c0_3 = arith.constant 0 : index
    %4 = vector.load %arg3[%c0_2, %c0_3] : memref<16x512xbf16, #tpu.memory_space<vmem>>, vector<16x512xbf16>
    %c0_4 = arith.constant 0 : index
    %c0_5 = arith.constant 0 : index
    %5 = vector.load %arg4[%c0_4, %c0_5] : memref<512x128xbf16, #tpu.memory_space<vmem>>, vector<512x128xbf16>
    %cst = arith.constant dense<0.000000e+00> : vector<16x128xf32>
    %6 = tpu.matmul %4, %5, %cst {dimension_numbers = #tpu.dot_dimension_numbers<[1], [0], [0], [1], [0, 0, 1, 1], [], []>} : vector<16x512xbf16>, vector<512x128xbf16>, vector<16x128xf32> -> vector<16x128xf32>
    %7 = arith.addf %3, %6 : vector<16x128xf32>
    %c0_6 = arith.constant 0 : index
    %c0_7 = arith.constant 0 : index
    %8 = vector.load %arg8[%c0_6, %c0_7] : memref<16x128xf32, #tpu.memory_space<vmem>>, vector<16x128xf32>
    tpu.vector_store %arg8[%c0_6, %c0_7], %7 {strides = array<i32>} : memref<16x128xf32, #tpu.memory_space<vmem>>, vector<16x128xf32>,
    %c0_i32_8 = arith.constant 0 : i32
    %9 = arith.cmpi eq, %arg2, %c0_i32_8 : i32
    %10 = arith.extui %9 : i1 to i32
    %c0_i32_9 = arith.constant 0 : i32
    %11 = arith.cmpi ne, %10, %c0_i32_9 : i32
    scf.if %11 {
      %c0_10 = arith.constant 0 : index
      %c0_11 = arith.constant 0 : index
      %12 = vector.load %arg8[%c0_10, %c0_11] : memref<16x128xf32, #tpu.memory_space<vmem>>, vector<16x128xf32>
      %c0_12 = arith.constant 0 : index
      %c0_13 = arith.constant 0 : index
      %13 = vector.load %arg5[%c0_12, %c0_13] : memref<1x128xf32, #tpu.memory_space<vmem>>, vector<1x128xf32>
      %14 = vector.broadcast %13 : vector<1x128xf32> to vector<16x128xf32>
      %15 = arith.addf %12, %14 : vector<16x128xf32>
      %c0_14 = arith.constant 0 : index
      %c0_15 = arith.constant 0 : index
      %16 = vector.load %arg6[%c0_14, %c0_15] : memref<16x128xbf16, #tpu.memory_space<vmem>>, vector<16x128xbf16>
      %17 = arith.extf %16 : vector<16x128xbf16> to vector<16x128xf32>
      %18 = arith.addf %15, %17 : vector<16x128xf32>
      %19 = arith.truncf %18 : vector<16x128xf32> to vector<16x128xbf16>
      %c0_16 = arith.constant 0 : index
      %c0_17 = arith.constant 0 : index
      %20 = vector.load %arg7[%c0_16, %c0_17] : memref<16x128xbf16, #tpu.memory_space<vmem>>, vector<16x128xbf16>
      tpu.vector_store %arg7[%c0_16, %c0_17], %19 {strides = array<i32>} : memref<16x128xbf16, #tpu.memory_space<vmem>>, vector<16x128xbf16>,
    } else {
    }
    return
  }
  func.func @transform_0(%arg0: i32, %arg1: i32, %arg2: i32) -> (i32, i32) {
    %c0_i32 = arith.constant 0 : i32
    return %arg0, %arg2 : i32, i32
  }
  func.func @transform_1(%arg0: i32, %arg1: i32, %arg2: i32) -> (i32, i32) {
    %c0_i32 = arith.constant 0 : i32
    return %arg2, %arg1 : i32, i32
  }
  func.func @transform_2(%arg0: i32, %arg1: i32, %arg2: i32) -> (i32, i32) {
    %c0_i32 = arith.constant 0 : i32
    %c0_i32_0 = arith.constant 0 : i32
    return %c0_i32, %arg1 : i32, i32
  }
  func.func @transform_3(%arg0: i32, %arg1: i32, %arg2: i32) -> (i32, i32) {
    %c0_i32 = arith.constant 0 : i32
    return %arg0, %arg1 : i32, i32
  }
  func.func @transform_4(%arg0: i32, %arg1: i32, %arg2: i32) -> (i32, i32) {
    %c0_i32 = arith.constant 0 : i32
    return %arg0, %arg1 : i32, i32
  }
}

</mosaic_0001>

<llo_original>
// kernel: mme_vit_forward.13
$region0: #{mme_vit_forward.13}
  #allocation0 [shape = 'u32[]', space=smem, size = 0x4, offset = 0x4, fixed_abs, tag = 'smem constant byte address 0x4 - core index']
  #allocation1 [shape = 'u32[144,128]{1,0:T(1,128)}', space=vmem, size = 0x12000, scoped, tag = 'internal scratch']
  #allocation2 [shape = 'bf16[16,128]{1,0:T(16,128)(2,1)}', space=vmem, size = 0x1000, scoped, tag = 'scratch operand']
  %s0 = inlined_call_operand.vmem [shape: bf16[16,128], index: 0, kind: input, shape index: {}]
  %s1 = inlined_call_operand.vmem [shape: f32[1,128], index: 1, kind: input, shape index: {}]
  %s2 = inlined_call_operand.vmem [shape: f32[1,128], index: 2, kind: input, shape index: {}]
  %s3 = inlined_call_operand.vmem [shape: bf16[128,384], index: 3, kind: input, shape index: {}]
  %s4 = inlined_call_operand.vmem [shape: f32[1,384], index: 4, kind: input, shape index: {}]
  %s5 = inlined_call_operand.vmem [shape: bf16[16,384], index: 5, kind: output, shape index: {}]
  %s6 = sld [smem:[#allocation0]]
  $region135: #{mme_vit_forward.13} parent=0
    _
  %s8 = ssub.s32 1, %s6
  %s9 = scalar_select 0, %s8, %s6
  $region1: #{mme_vit_forward.13} parent=0
    #allocation3 [shape = 'u8[65536]{0}', space=vmem, size = 0x10000, scoped, tag = 'input window, operand 3']
    #allocation4 [shape = 'u8[8192]{0}', space=vmem, size = 0x2000, scoped, tag = 'output window, operand 0']
    loop: start=0, step=1, limit=5
    $region2: #{mme_vit_forward.13} parent=1 // loop_pre_header
      _
    $region3: #{mme_vit_forward.13} parent=1 // loop_header
      %s11 = sphi 0, %s15
      %p12 = scmp.ge.s32.totalorder %s11, 5
      %s18 = sphi 0, %s30
      %s19 = sphi 0, %s26
      %s20 = sphi 0, %s18
      %s21 = sphi 0, %s19
      %s22 = sphi 0, %s20
      %s23 = sphi 0, %s21
      %s33 = sphi 0, %s35
      %s36 = sphi 0, %s33
      %s37 = sphi 0, %s36
      %s53 = sphi 0, %s37
      %s57 = sphi 0, %s57
      %s59 = sphi 0, %s57
      %s60 = sphi 0, %s59
      %s74 = sphi 0, %s60
      %s78 = sphi 0, %s78
      %s80 = sphi 0, %s78
      %s81 = sphi 0, %s80
      %s95 = sphi 0, %s81
      %s101 = sphi 0, %s103
      %s104 = sphi 0, %s101
      %s105 = sphi 0, %s104
      %s121 = sphi 0, %s105
      %s127 = sphi 0, %s129
      %s130 = sphi 0, %s127
      %s131 = sphi 0, %s130
      %s147 = sphi 0, %s131
      %s155 = sphi 0, %s157
      %s158 = sphi 0, %s155
      %s159 = sphi 0, %s158
      %s175 = sphi 0, %s159
    $region4: #{mme_vit_forward.13} parent=1 // loop_header_branch
      %14 = sbr.rel (%p12) target = $region8
    $region5: #{mme_vit_forward.13} parent=1 // loop_body
      %s16 = ssub.s32 %s11, 1
      %s17 = ssub.s32 %s11, 2
      %s24 = sadd.s32 1, %s19
      %p25 = scmp.ge.s32.totalorder %s24, 3
      %s26 = scalar_select %p25, 0, %s24
      %s27 = sadd.s32 1, %s18
      %s28 = scalar_select %p25, %s27, %s18
      %p29 = scmp.ge.s32.totalorder %s28, 1
      %s30 = scalar_select %p29, 0, %s28
      %s31 = ssub.s32 %s18, %s30
      %p32 = scmp.eq.s32.totalorder %s31, 0
      %s34 = sadd.s32 %s33, 1
      %s35 = scalar_select %p32, %s33, %s34
      %p38 = pneg %p32
      %p39 = scmp.eq.s32.totalorder %s11, 2
      %p40 = por %p38, %p39
      %p41 = scmp.ne.s32.totalorder %s33, %s36
      %p42 = scmp.eq.s32.totalorder %s11, 0
      %p43 = por %p41, %p42
      %p44 = scmp.ne.s32.totalorder %s33, %s36
      %p45 = scmp.eq.s32.totalorder %s16, 2
      %p46 = por %p44, %p45
      %p47 = scmp.ne.s32.totalorder %s36, %s37
      %p48 = scmp.eq.s32.totalorder %s16, 0
      %p49 = por %p47, %p48
      %p50 = scmp.ne.s32.totalorder %s36, %s37
      %p51 = scmp.eq.s32.totalorder %s17, 2
      %p52 = por %p50, %p51
      %p54 = scmp.ne.s32.totalorder %s37, %s53
      %p55 = scmp.eq.s32.totalorder %s17, 0
      %p56 = por %p54, %p55
      %s58 = sadd.s32 %s57, 1
      %p61 = scmp.eq.s32.totalorder %s11, 2
      %p62 = scmp.ne.s32.totalorder %s57, %s59
      %p63 = scmp.eq.s32.totalorder %s11, 0
      %p64 = por %p62, %p63
      %p65 = scmp.ne.s32.totalorder %s57, %s59
      %p66 = scmp.eq.s32.totalorder %s16, 2
      %p67 = por %p65, %p66
      %p68 = scmp.ne.s32.totalorder %s59, %s60
      %p69 = scmp.eq.s32.totalorder %s16, 0
      %p70 = por %p68, %p69
      %p71 = scmp.ne.s32.totalorder %s59, %s60
      %p72 = scmp.eq.s32.totalorder %s17, 2
      %p73 = por %p71, %p72
      %p75 = scmp.ne.s32.totalorder %s60, %s74
      %p76 = scmp.eq.s32.totalorder %s17, 0
      %p77 = por %p75, %p76
      %s79 = sadd.s32 %s78, 1
      %p82 = scmp.eq.s32.totalorder %s11, 2
      %p83 = scmp.ne.s32.totalorder %s78, %s80
      %p84 = scmp.eq.s32.totalorder %s11, 0
      %p85 = por %p83, %p84
      %p86 = scmp.ne.s32.totalorder %s78, %s80
      %p87 = scmp.eq.s32.totalorder %s16, 2
      %p88 = por %p86, %p87
      %p89 = scmp.ne.s32.totalorder %s80, %s81
      %p90 = scmp.eq.s32.totalorder %s16, 0
      %p91 = por %p89, %p90
      %p92 = scmp.ne.s32.totalorder %s80, %s81
      %p93 = scmp.eq.s32.totalorder %s17, 2
      %p94 = por %p92, %p93
      %p96 = scmp.ne.s32.totalorder %s81, %s95
      %p97 = scmp.eq.s32.totalorder %s17, 0
      %p98 = por %p96, %p97
      %s99 = ssub.s32 %s19, %s26
      %p100 = scmp.eq.s32.totalorder %s99, 0
      %s102 = sadd.s32 %s101, 1
      %s103 = scalar_select %p100, %s101, %s102
      %p106 = pneg %p100
      %p107 = scmp.eq.s32.totalorder %s11, 2
      %p108 = por %p106, %p107
      %p109 = scmp.ne.s32.totalorder %s101, %s104
      %p110 = scmp.eq.s32.totalorder %s11, 0
      %p111 = por %p109, %p110
      %p112 = scmp.ne.s32.totalorder %s101, %s104
      %p113 = scmp.eq.s32.totalorder %s16, 2
      %p114 = por %p112, %p113
      %p115 = scmp.ne.s32.totalorder %s104, %s105
      %p116 = scmp.eq.s32.totalorder %s16, 0
      %p117 = por %p115, %p116
      %p118 = scmp.ne.s32.totalorder %s104, %s105
      %p119 = scmp.eq.s32.totalorder %s17, 2
      %p120 = por %p118, %p119
      %p122 = scmp.ne.s32.totalorder %s105, %s121
      %p123 = scmp.eq.s32.totalorder %s17, 0
      %p124 = por %p122, %p123
      %s125 = ssub.s32 %s19, %s26
      %p126 = scmp.eq.s32.totalorder %s125, 0
      %s128 = sadd.s32 %s127, 1
      %s129 = scalar_select %p126, %s127, %s128
      %p132 = pneg %p126
      %p133 = scmp.eq.s32.totalorder %s11, 2
      %p134 = por %p132, %p133
      %p135 = scmp.ne.s32.totalorder %s127, %s130
      %p136 = scmp.eq.s32.totalorder %s11, 0
      %p137 = por %p135, %p136
      %p138 = scmp.ne.s32.totalorder %s127, %s130
      %p139 = scmp.eq.s32.totalorder %s16, 2
      %p140 = por %p138, %p139
      %p141 = scmp.ne.s32.totalorder %s130, %s131
      %p142 = scmp.eq.s32.totalorder %s16, 0
      %p143 = por %p141, %p142
      %p144 = scmp.ne.s32.totalorder %s130, %s131
      %p145 = scmp.eq.s32.totalorder %s17, 2
      %p146 = por %p144, %p145
      %p148 = scmp.ne.s32.totalorder %s131, %s147
      %p149 = scmp.eq.s32.totalorder %s17, 0
      %p150 = por %p148, %p149
      %s151 = ssub.s32 %s18, %s30
      %s152 = ssub.s32 %s19, %s26
      %s153 = sor.u32 %s151, %s152
      %p154 = scmp.eq.s32.totalorder %s153, 0
      %s156 = sadd.s32 %s155, 1
      %s157 = scalar_select %p154, %s155, %s156
      %p160 = pneg %p154
      %p161 = scmp.eq.s32.totalorder %s11, 2
      %p162 = por %p160, %p161
      %p163 = scmp.ne.s32.totalorder %s155, %s158
      %p164 = scmp.eq.s32.totalorder %s11, 0
      %p165 = por %p163, %p164
      %p166 = scmp.ne.s32.totalorder %s155, %s158
      %p167 = scmp.eq.s32.totalorder %s16, 2
      %p168 = por %p166, %p167
      %p169 = scmp.ne.s32.totalorder %s158, %s159
      %p170 = scmp.eq.s32.totalorder %s16, 0
      %p171 = por %p169, %p170
      %p172 = scmp.ne.s32.totalorder %s158, %s159
      %p173 = scmp.eq.s32.totalorder %s17, 2
      %p174 = por %p172, %p173
      %p176 = scmp.ne.s32.totalorder %s159, %s175
      %p177 = scmp.eq.s32.totalorder %s17, 0
      %p178 = por %p176, %p177
      %p179 = scmp.le.s32.totalorder 1, %s11
      %p180 = scmp.lt.s32.totalorder %s11, 4
      %p181 = pnand %p179, %p180
      %p182 = pneg %p181
      // Predicated region
      $region9: #{mme_vit_forward.13} parent=5 // pred_check
        _
      $region10: #{mme_vit_forward.13} parent=5 // pred_check_branch
        %184 = sbr.rel (%p181) target = $region12
      $region11: #{mme_vit_forward.13} parent=5 // pred_region
        %s185 = ssub.s32 %s11, 1
        // Predicated region
        $region13: #{mme_vit_forward.13} parent=11 // pred_check
          %p186 = pneg %p49
        $region14: #{mme_vit_forward.13} parent=11 // pred_check_branch
          %188 = sbr.rel (%p186) target = $region16
        $region15: #{mme_vit_forward.13} parent=11 // pred_region
          %s189 = smul.u32 2, %s20
          %p190 = scmp.lt.s32.totalorder %s189, 1
          %s191 = scalar_select %p190, %s189, 1
          %s192 = smul.addr %s191, 4
          %s193 = scalar_lea.vmem %s0, %s192
          %s194 = smul.u32 2, %s20
        $region16: #{mme_vit_forward.13} parent=11 // pred_fallthru
          _
        // Predicated region
        $region17: #{mme_vit_forward.13} parent=11 // pred_check
          %p195 = pneg %p70
        $region18: #{mme_vit_forward.13} parent=11 // pred_check_branch
          %197 = sbr.rel (%p195) target = $region20
        $region19: #{mme_vit_forward.13} parent=11 // pred_region
          _
        $region20: #{mme_vit_forward.13} parent=11 // pred_fallthru
          _
        // Predicated region
        $region21: #{mme_vit_forward.13} parent=11 // pred_check
          %p198 = pneg %p91
        $region22: #{mme_vit_forward.13} parent=11 // pred_check_branch
          %200 = sbr.rel (%p198) target = $region24
        $region23: #{mme_vit_forward.13} parent=11 // pred_region
          _
        $region24: #{mme_vit_forward.13} parent=11 // pred_fallthru
          _
      $region12: #{mme_vit_forward.13} parent=5 // pred_fallthru
        _
      %p201 = scmp.lt.s32.totalorder %s11, 3
      // Predicated region
      $region25: #{mme_vit_forward.13} parent=5 // pred_check
        %p202 = pneg %p201
      $region26: #{mme_vit_forward.13} parent=5 // pred_check_branch
        %204 = sbr.rel (%p202) target = $region28
      $region27: #{mme_vit_forward.13} parent=5 // pred_region
        // Predicated region
        $region29: #{mme_vit_forward.13} parent=27 // pred_check
          %p205 = pneg %p111
        $region30: #{mme_vit_forward.13} parent=27 // pred_check_branch
          %207 = sbr.rel (%p205) target = $region32
        $region31: #{mme_vit_forward.13} parent=27 // pred_region
          %s208 = sand.u32 %s101, 1
          %s209 = sand.u32 %s101, 1
          %s210 = smul.addr %s209, 64
          %s211 = scalar_lea.vmem [#allocation3], %s210
          %s212 = smul.addr %s19, 4
          %s213 = scalar_lea.vmem %s3, %s212
          // Predicated region
          $region33: #{mme_vit_forward.13} parent=31 // pred_check
            _
          $region34: #{mme_vit_forward.13} parent=31 // pred_check_branch
            %215 = sbr.rel (0) target = $region36
          $region35: #{mme_vit_forward.13} parent=31 // pred_region
            // Predicated region
            $region37: #{mme_vit_forward.13} parent=35 // pred_check
              _
            $region38: #{mme_vit_forward.13} parent=35 // pred_check_branch
              %217 = sbr.rel target = $region40
            $region39: #{mme_vit_forward.13} parent=35 // pred_region
              // Predicated region
              $region52: #{mme_vit_forward.13} parent=39 // pred_check
                _
              $region53: #{mme_vit_forward.13} parent=39 // pred_check_branch
                %262 = sbr.rel (0) target = $region55
              $region54: #{mme_vit_forward.13} parent=39 // pred_region
                loop: start=0, step=1, limit=1
                $region56: #{mme_vit_forward.13} parent=54 // loop_pre_header
                  _
                $region57: #{mme_vit_forward.13} parent=54 // loop_header
                  %s264 = sphi 0, %s268
                  %p265 = scmp.ge.s32.totalorder %s264, 1
                  %s269 = sphi %s213, %s213
                  %s270 = sphi %s211, %s211
                $region58: #{mme_vit_forward.13} parent=54 // loop_header_branch
                  %267 = sbr.rel (%p265) target = $region62
                $region59: #{mme_vit_forward.13} parent=54 // loop_body
                  _
                $region60: #{mme_vit_forward.13} parent=54 // loop_footer
                  %s268 = sadd.s32 1, %s264
                $region61: #{mme_vit_forward.13} parent=54 // loop_footer_branch
                  %263 = sbr.rel target = $region57
                $region62: #{mme_vit_forward.13} parent=54 // loop_exit
                  _
                loop: start=0, step=1, limit=1
                $region63: #{mme_vit_forward.13} parent=54 // loop_pre_header
                  _
                $region64: #{mme_vit_forward.13} parent=54 // loop_header
                  %s273 = sphi 0, %s277
                  %p274 = scmp.ge.s32.totalorder %s273, 1
                  %s278 = sphi %s213, %s213
                  %s279 = sphi %s211, %s211
                $region65: #{mme_vit_forward.13} parent=54 // loop_header_branch
                  %276 = sbr.rel (%p274) target = $region69
                $region66: #{mme_vit_forward.13} parent=54 // loop_body
                  %v280 = vld [vmem:[%s278] sm:$0xf]
                  %281 = vst [vmem:[%s279] sm:$0xf] %v280
                  %v282 = vld [vmem:[%s278 + $0xc] sm:$0xf]
                  %283 = vst [vmem:[%s279 + $0x4] sm:$0xf] %v282
                  %v284 = vld [vmem:[%s278 + $0x18] sm:$0xf]
                  %285 = vst [vmem:[%s279 + $0x8] sm:$0xf] %v284
                  %v286 = vld [vmem:[%s278 + $0x24] sm:$0xf]
                  %287 = vst [vmem:[%s279 + $0xc] sm:$0xf] %v286
                  %v288 = vld [vmem:[%s278 + $0x30] sm:$0xf]
                  %289 = vst [vmem:[%s279 + $0x10] sm:$0xf] %v288
                  %v290 = vld [vmem:[%s278 + $0x3c] sm:$0xf]
                  %291 = vst [vmem:[%s279 + $0x14] sm:$0xf] %v290
                  %v292 = vld [vmem:[%s278 + $0x48] sm:$0xf]
                  %293 = vst [vmem:[%s279 + $0x18] sm:$0xf] %v292
                  %v294 = vld [vmem:[%s278 + $0x54] sm:$0xf]
                  %295 = vst [vmem:[%s279 + $0x1c] sm:$0xf] %v294
                  %v296 = vld [vmem:[%s278 + $0x60] sm:$0xf]
                  %297 = vst [vmem:[%s279 + $0x20] sm:$0xf] %v296
                  %v298 = vld [vmem:[%s278 + $0x6c] sm:$0xf]
                  %299 = vst [vmem:[%s279 + $0x24] sm:$0xf] %v298
                  %v300 = vld [vmem:[%s278 + $0x78] sm:$0xf]
                  %301 = vst [vmem:[%s279 + $0x28] sm:$0xf] %v300
                  %v302 = vld [vmem:[%s278 + $0x84] sm:$0xf]
                  %303 = vst [vmem:[%s279 + $0x2c] sm:$0xf] %v302
                  %v304 = vld [vmem:[%s278 + $0x90] sm:$0xf]
                  %305 = vst [vmem:[%s279 + $0x30] sm:$0xf] %v304
                  %v306 = vld [vmem:[%s278 + $0x9c] sm:$0xf]
                  %307 = vst [vmem:[%s279 + $0x34] sm:$0xf] %v306
                  %v308 = vld [vmem:[%s278 + $0xa8] sm:$0xf]
                  %309 = vst [vmem:[%s279 + $0x38] sm:$0xf] %v308
                  %v310 = vld [vmem:[%s278 + $0xb4] sm:$0xf]
                  %311 = vst [vmem:[%s279 + $0x3c] sm:$0xf] %v310
                $region67: #{mme_vit_forward.13} parent=54 // loop_footer
                  %s277 = sadd.s32 1, %s273
                $region68: #{mme_vit_forward.13} parent=54 // loop_footer_branch
                  %272 = sbr.rel target = $region64
                $region69: #{mme_vit_forward.13} parent=54 // loop_exit
                  _
              $region55: #{mme_vit_forward.13} parent=39 // pred_fallthru
                _
            $region40: #{mme_vit_forward.13} parent=35 // pred_fallthru
              _
            // Predicated region
            $region41: #{mme_vit_forward.13} parent=35 // pred_check
              _
            $region42: #{mme_vit_forward.13} parent=35 // pred_check_branch
              %219 = sbr.rel (0) target = $region44
            $region43: #{mme_vit_forward.13} parent=35 // pred_region
              loop: start=0, step=1, limit=1
              $region45: #{mme_vit_forward.13} parent=43 // loop_pre_header
                _
              $region46: #{mme_vit_forward.13} parent=43 // loop_header
                %s222 = sphi 0, %s226
                %p223 = scmp.ge.s32.totalorder %s222, 1
                %s227 = sphi %s213, %s213
                %s228 = sphi %s211, %s211
              $region47: #{mme_vit_forward.13} parent=43 // loop_header_branch
                %225 = sbr.rel (%p223) target = $region51
              $region48: #{mme_vit_forward.13} parent=43 // loop_body
                %v229 = vld [vmem:[%s227] sm:$0xf]
                %230 = vst [vmem:[%s228] sm:$0xf] %v229
                %v231 = vld [vmem:[%s227 + $0xc] sm:$0xf]
                %232 = vst [vmem:[%s228 + $0x4] sm:$0xf] %v231
                %v233 = vld [vmem:[%s227 + $0x18] sm:$0xf]
                %234 = vst [vmem:[%s228 + $0x8] sm:$0xf] %v233
                %v235 = vld [vmem:[%s227 + $0x24] sm:$0xf]
                %236 = vst [vmem:[%s228 + $0xc] sm:$0xf] %v235
                %v237 = vld [vmem:[%s227 + $0x30] sm:$0xf]
                %238 = vst [vmem:[%s228 + $0x10] sm:$0xf] %v237
                %v239 = vld [vmem:[%s227 + $0x3c] sm:$0xf]
                %240 = vst [vmem:[%s228 + $0x14] sm:$0xf] %v239
                %v241 = vld [vmem:[%s227 + $0x48] sm:$0xf]
                %242 = vst [vmem:[%s228 + $0x18] sm:$0xf] %v241
                %v243 = vld [vmem:[%s227 + $0x54] sm:$0xf]
                %244 = vst [vmem:[%s228 + $0x1c] sm:$0xf] %v243
                %v245 = vld [vmem:[%s227 + $0x60] sm:$0xf]
                %246 = vst [vmem:[%s228 + $0x20] sm:$0xf] %v245
                %v247 = vld [vmem:[%s227 + $0x6c] sm:$0xf]
                %248 = vst [vmem:[%s228 + $0x24] sm:$0xf] %v247
                %v249 = vld [vmem:[%s227 + $0x78] sm:$0xf]
                %250 = vst [vmem:[%s228 + $0x28] sm:$0xf] %v249
                %v251 = vld [vmem:[%s227 + $0x84] sm:$0xf]
                %252 = vst [vmem:[%s228 + $0x2c] sm:$0xf] %v251
                %v253 = vld [vmem:[%s227 + $0x90] sm:$0xf]
                %254 = vst [vmem:[%s228 + $0x30] sm:$0xf] %v253
                %v255 = vld [vmem:[%s227 + $0x9c] sm:$0xf]
                %256 = vst [vmem:[%s228 + $0x34] sm:$0xf] %v255
                %v257 = vld [vmem:[%s227 + $0xa8] sm:$0xf]
                %258 = vst [vmem:[%s228 + $0x38] sm:$0xf] %v257
                %v259 = vld [vmem:[%s227 + $0xb4] sm:$0xf]
                %260 = vst [vmem:[%s228 + $0x3c] sm:$0xf] %v259
              $region49: #{mme_vit_forward.13} parent=43 // loop_footer
                %s226 = sadd.s32 1, %s222
              $region50: #{mme_vit_forward.13} parent=43 // loop_footer_branch
                %221 = sbr.rel target = $region46
              $region51: #{mme_vit_forward.13} parent=43 // loop_exit
                _
            $region44: #{mme_vit_forward.13} parent=35 // pred_fallthru
              _
          $region36: #{mme_vit_forward.13} parent=31 // pred_fallthru
            _
          %312 = vnop
        $region32: #{mme_vit_forward.13} parent=27 // pred_fallthru
          _
        // Predicated region
        $region70: #{mme_vit_forward.13} parent=27 // pred_check
          %p313 = pneg %p137
        $region71: #{mme_vit_forward.13} parent=27 // pred_check_branch
          %315 = sbr.rel (%p313) target = $region73
        $region72: #{mme_vit_forward.13} parent=27 // pred_region
          %p316 = scmp.lt.s32.totalorder %s19, 2
          %s317 = scalar_select %p316, %s19, 2
          %s318 = scalar_lea.vmem %s4, %s317
        $region73: #{mme_vit_forward.13} parent=27 // pred_fallthru
          _
      $region28: #{mme_vit_forward.13} parent=5 // pred_fallthru
        _
      %p319 = scmp.le.s32.totalorder 1, %s11
      %p320 = scmp.lt.s32.totalorder %s11, 4
      %p321 = pnand %p319, %p320
      %p322 = pneg %p321
      // Predicated region
      $region74: #{mme_vit_forward.13} parent=5 // pred_check
        _
      $region75: #{mme_vit_forward.13} parent=5 // pred_check_branch
        %324 = sbr.rel (%p321) target = $region77
      $region76: #{mme_vit_forward.13} parent=5 // pred_region
        %s325 = ssub.s32 %s11, 1
        %s326 = sand.u32 %s104, 1
        %s327 = sand.u32 %s104, 1
        %s328 = smul.addr %s327, 64
        %s329 = scalar_lea.vmem [#allocation3], %s328
        // Predicated region
        $region78: #{mme_vit_forward.13} parent=76 // pred_check
          %p330 = pneg %p117
        $region79: #{mme_vit_forward.13} parent=76 // pred_check_branch
          %332 = sbr.rel (%p330) target = $region81
        $region80: #{mme_vit_forward.13} parent=76 // pred_region
          _
        $region81: #{mme_vit_forward.13} parent=76 // pred_fallthru
          _
        %s333 = smul.u32 2, %s20
        %p334 = scmp.lt.s32.totalorder %s333, 1
        %s335 = scalar_select %p334, %s333, 1
        %s336 = smul.addr %s335, 4
        %s337 = scalar_lea.vmem %s0, %s336
        %p338 = pneg %p49
        %p339 = pneg %p46
        %p340 = pneg %p70
        %p341 = pneg %p67
        %p342 = pneg %p91
        %p343 = pneg %p88
        %s344 = sand.u32 %s104, 1
        %s345 = sand.u32 %s104, 1
        %s346 = smul.addr %s345, 64
        %s347 = scalar_lea.vmem [#allocation3], %s346
        %p348 = pneg %p117
        %p349 = pneg %p114
        %p350 = scmp.lt.s32.totalorder %s21, 2
        %s351 = scalar_select %p350, %s21, 2
        %s352 = scalar_lea.vmem %s4, %s351
        %p353 = pneg %p143
        %p354 = pneg %p140
        %p355 = pneg %p171
        %p356 = pneg %p168
        %s357 = sand.u32 %s158, 1
        %s358 = sand.u32 %s158, 1
        %s359 = smul.addr %s358, 8
        %s360 = scalar_lea.vmem [#allocation4], %s359
        %s361 = smul.u32 2, %s20
        %p362 = scmp.lt.s32.totalorder %s361, 1
        %s363 = scalar_select %p362, %s361, 1
        %s364 = smul.addr %s363, 4
        %s365 = scalar_lea.vmem %s0, %s364
        %s366 = smul.u32 2, %s20
        %p367 = scmp.lt.s32.totalorder %s21, 2
        %s368 = scalar_select %p367, %s21, 2
        %s369 = scalar_lea.vmem %s4, %s368
        %s370 = smul.u32 2, %s20
        %p372 = scmp.eq.s32.totalorder %s21, 0
        // Predicated region
        $region82: #{mme_vit_forward.13} parent=76 // pred_check
          %p373 = pneg %p372
        $region83: #{mme_vit_forward.13} parent=76 // pred_check_branch
          %375 = sbr.rel (%p373) target = $region85
        $region84: #{mme_vit_forward.13} parent=76 // pred_region
          %v376 = vld [vmem:[%s365] sm:$0xf]
          %v377 = vld [vmem:[%s365 + $0x4] sm:$0xf]
          %v378 = vunpack.c.l.bf16 %v376
          %v379 = vunpack.c.l.bf16 %v377
          %380 = vadd.xlane.f32.xlu0 %v378
          %v381 = vpop.xlane.xlu0 %380
          %382 = vadd.xlane.f32.xlu0 %v379
          %v383 = vpop.xlane.xlu0 %382
          %v384 = vrcp.pop 128.0
          %v385 = vmul.f32 %v381, %v384
          %v386 = vmul.f32 %v383, %v384
          %v387 = vsub.f32 %v378, %v385
          %v388 = vsub.f32 %v379, %v386
          %v389 = vmul.f32 %v387, %v387
          %v390 = vmul.f32 %v388, %v388
          %391 = vadd.xlane.f32.xlu0 %v389
          %v392 = vpop.xlane.xlu0 %391
          %393 = vadd.xlane.f32.xlu0 %v390
          %v394 = vpop.xlane.xlu0 %393
          %v395 = vmul.f32 %v392, %v384
          %v396 = vmul.f32 %v394, %v384
          %v397 = vadd.f32 %v395, 1e-06
          %v398 = vadd.f32 %v396, 1e-06
          %v399 = vrsqrt.pop %v397
          %v400 = vrsqrt.pop %v398
          %v401 = vmul.f32 %v387, %v399
          %v402 = vmul.f32 %v388, %v400
          %v403 = vld [vmem:[%s1] sm:$0x1]
          %v405 = vlaneseq
          %v406 = vshrl.u32 %v405, 7
          %v407 = vsub.s32 0, %v406
          %v408 = vrot.slane %v403, %v407
          %v410 = vmul.f32 %v401, %v408
          %v411 = vmul.f32 %v402, %v408
          %v412 = vld [vmem:[%s2] sm:$0x1]
          %v414 = vlaneseq
          %v415 = vshrl.u32 %v414, 7
          %v416 = vsub.s32 0, %v415
          %v417 = vrot.slane %v412, %v416
          %v419 = vadd.f32 %v410, %v417
          %v420 = vadd.f32 %v411, %v417
          %v421 = vpack.c.bf16 %v420, %v419
          %422 = vst [vmem:[#allocation2] sm:$0xff] %v421
        $region85: #{mme_vit_forward.13} parent=76 // pred_fallthru
          _
        %v423 = vld [vmem:[#allocation2] sm:$0xff]
        %v424 = vld [vmem:[%s329] sm:$0xf]
        %v425 = vld [vmem:[%s329 + $0x4] sm:$0xf]
        %v426 = vld [vmem:[%s329 + $0x8] sm:$0xf]
        %v427 = vld [vmem:[%s329 + $0xc] sm:$0xf]
        %v428 = vld [vmem:[%s329 + $0x10] sm:$0xf]
        %v429 = vld [vmem:[%s329 + $0x14] sm:$0xf]
        %v430 = vld [vmem:[%s329 + $0x18] sm:$0xf]
        %v431 = vld [vmem:[%s329 + $0x1c] sm:$0xf]
        %v432 = vld [vmem:[%s329 + $0x20] sm:$0xf]
        %v433 = vld [vmem:[%s329 + $0x24] sm:$0xf]
        %v434 = vld [vmem:[%s329 + $0x28] sm:$0xf]
        %v435 = vld [vmem:[%s329 + $0x2c] sm:$0xf]
        %v436 = vld [vmem:[%s329 + $0x30] sm:$0xf]
        %v437 = vld [vmem:[%s329 + $0x34] sm:$0xf]
        %v438 = vld [vmem:[%s329 + $0x38] sm:$0xf]
        %v439 = vld [vmem:[%s329 + $0x3c] sm:$0xf]
        %v440 = vld [vmem:[%s369] sm:$0x1]
        %v442 = vlaneseq
        %v443 = vshrl.u32 %v442, 7
        %v444 = vsub.s32 0, %v443
        %v445 = vrot.slane %v440, %v444
        %v463 = vunpack.c.l.b16 %v424
        %v464 = vunpack.c.l.b16 %v425
        %v465 = vunpack.c.l.b16 %v426
        %v466 = vunpack.c.l.b16 %v427
        %v467 = vunpack.c.l.b16 %v428
        %v468 = vunpack.c.l.b16 %v429
        %v469 = vunpack.c.l.b16 %v430
        %v470 = vunpack.c.l.b16 %v431
        %v471 = vunpack.c.l.b16 %v432
        %v472 = vunpack.c.l.b16 %v433
        %v473 = vunpack.c.l.b16 %v434
        %v474 = vunpack.c.l.b16 %v435
        %v475 = vunpack.c.l.b16 %v436
        %v476 = vunpack.c.l.b16 %v437
        %v477 = vunpack.c.l.b16 %v438
        %v478 = vunpack.c.l.b16 %v439
        %v479 = vpack.c.b16 %v464, %v463
        %v480 = vpack.c.b16 %v466, %v465
        %v481 = vpack.c.b16 %v468, %v467
        %v482 = vpack.c.b16 %v470, %v469
        %v483 = vpack.c.b16 %v472, %v471
        %v484 = vpack.c.b16 %v474, %v473
        %v485 = vpack.c.b16 %v476, %v475
        %v486 = vpack.c.b16 %v478, %v477
        %495 = vmatprep.subr.bf16.mxu0 0
        %496 = vmatpush1.bf16.msra.mxu0 %v479
        %497 = vmatprep.subr.bf16.mxu0 0
        %498 = vmatpush1.bf16.msra.mxu0 %v480
        %499 = vmatprep.subr.bf16.mxu0 0
        %500 = vmatpush1.bf16.msra.mxu0 %v481
        %501 = vmatprep.subr.bf16.mxu0 0
        %502 = vmatpush1.bf16.msra.mxu0 %v482
        %503 = vmatprep.subr.bf16.mxu0 0
        %504 = vmatpush1.bf16.msra.mxu0 %v483
        %505 = vmatprep.subr.bf16.mxu0 0
        %506 = vmatpush1.bf16.msra.mxu0 %v484
        %507 = vmatprep.subr.bf16.mxu0 0
        %508 = vmatpush1.bf16.msra.mxu0 %v485
        %509 = vmatprep.subr.bf16.mxu0 0
        %510 = vmatpush1.bf16.msra.mxu0 %v486
        %511 = vmatprep.subr.bf16.mxu0 0
        %512 = vmatpush1.bf16.msra.mxu0 0
        %513 = vmatprep.subr.bf16.mxu0 0
        %514 = vmatpush1.bf16.msra.mxu0 0
        %515 = vmatprep.subr.bf16.mxu0 0
        %516 = vmatpush1.bf16.msra.mxu0 0
        %517 = vmatprep.subr.bf16.mxu0 0
        %518 = vmatpush1.bf16.msra.mxu0 0
        %519 = vmatprep.subr.bf16.mxu0 0
        %520 = vmatpush1.bf16.msra.mxu0 0
        %521 = vmatprep.subr.bf16.mxu0 0
        %522 = vmatpush1.bf16.msra.mxu0 0
        %523 = vmatprep.subr.bf16.mxu0 0
        %524 = vmatpush1.bf16.msra.mxu0 0
        %525 = vmatprep.subr.bf16.mxu0 0
        %526 = vmatpush1.bf16.msra.mxu0 0
        %527 = vmatprep.mubr.bf16.mxu0 0
        %528 = vmatmul.mubr.bf16.gmra.mrb[0].mxu0 %v423
        %v529 = vpop.f32.mrb[0].mxu0
        %v530 = vadd.f32 %v445, %v529
        %v531 = vpop.f32.mrb[0].mxu0
        %v532 = vpop.f32.mrb[0].mxu0
        %v533 = vadd.f32 %v445, %v532
        %v534 = vpop.f32.mrb[0].mxu0
        %535 = vdwg.mxu0
        %v536 = vpack.c.bf16 %v533, %v530
        %v538 = vunpack.c.l.b16 %v536
        %v539 = vunpack.c.h.b16 %v536
        %v540 = vpack.c.b16 %v538, %v538
        %v541 = vpack.c.b16 %v539, %v539
        %544 = vst [vmem:[%s360] sm:$0xf] %v540
        %545 = vst [vmem:[%s360 + $0x4] sm:$0xf] %v541
        %s546 = sand.u32 %s158, 1
        %s547 = sand.u32 %s158, 1
        %s548 = smul.addr %s547, 8
        %s549 = scalar_lea.vmem [#allocation4], %s548
        // Predicated region
        $region86: #{mme_vit_forward.13} parent=76 // pred_check
          %p550 = pneg %p168
        $region87: #{mme_vit_forward.13} parent=76 // pred_check_branch
          %552 = sbr.rel (%p550) target = $region89
        $region88: #{mme_vit_forward.13} parent=76 // pred_region
          %s553 = smul.u32 2, %s20
          %s554 = smul.addr %s553, 3
          %s555 = sadd.s32 %s21, %s554
          %s556 = smul.addr %s555, 4
          %s557 = scalar_lea.vmem %s5, %s556
          // Predicated region
          $region90: #{mme_vit_forward.13} parent=88 // pred_check
            _
          $region91: #{mme_vit_forward.13} parent=88 // pred_check_branch
            %559 = sbr.rel (0) target = $region93
          $region92: #{mme_vit_forward.13} parent=88 // pred_region
            // Predicated region
            $region94: #{mme_vit_forward.13} parent=92 // pred_check
              _
            $region95: #{mme_vit_forward.13} parent=92 // pred_check_branch
              %561 = sbr.rel target = $region97
            $region96: #{mme_vit_forward.13} parent=92 // pred_region
              // Predicated region
              $region109: #{mme_vit_forward.13} parent=96 // pred_check
                _
              $region110: #{mme_vit_forward.13} parent=96 // pred_check_branch
                %578 = sbr.rel (0) target = $region112
              $region111: #{mme_vit_forward.13} parent=96 // pred_region
                loop: start=0, step=1, limit=1
                $region113: #{mme_vit_forward.13} parent=111 // loop_pre_header
                  _
                $region114: #{mme_vit_forward.13} parent=111 // loop_header
                  %s580 = sphi 0, %s584
                  %p581 = scmp.ge.s32.totalorder %s580, 1
                  %s585 = sphi %s549, %s549
                  %s586 = sphi %s557, %s557
                $region115: #{mme_vit_forward.13} parent=111 // loop_header_branch
                  %583 = sbr.rel (%p581) target = $region119
                $region116: #{mme_vit_forward.13} parent=111 // loop_body
                  _
                $region117: #{mme_vit_forward.13} parent=111 // loop_footer
                  %s584 = sadd.s32 1, %s580
                $region118: #{mme_vit_forward.13} parent=111 // loop_footer_branch
                  %579 = sbr.rel target = $region114
                $region119: #{mme_vit_forward.13} parent=111 // loop_exit
                  _
                loop: start=0, step=1, limit=1
                $region120: #{mme_vit_forward.13} parent=111 // loop_pre_header
                  _
                $region121: #{mme_vit_forward.13} parent=111 // loop_header
                  %s589 = sphi 0, %s593
                  %p590 = scmp.ge.s32.totalorder %s589, 1
                  %s594 = sphi %s549, %s549
                  %s595 = sphi %s557, %s557
                $region122: #{mme_vit_forward.13} parent=111 // loop_header_branch
                  %592 = sbr.rel (%p590) target = $region126
                $region123: #{mme_vit_forward.13} parent=111 // loop_body
                  %v596 = vld [vmem:[%s594] sm:$0xf]
                  %597 = vst [vmem:[%s595] sm:$0xf] %v596
                  %v598 = vld [vmem:[%s594 + $0x4] sm:$0xf]
                  %599 = vst [vmem:[%s595 + $0xc] sm:$0xf] %v598
                $region124: #{mme_vit_forward.13} parent=111 // loop_footer
                  %s593 = sadd.s32 1, %s589
                $region125: #{mme_vit_forward.13} parent=111 // loop_footer_branch
                  %588 = sbr.rel target = $region121
                $region126: #{mme_vit_forward.13} parent=111 // loop_exit
                  _
              $region112: #{mme_vit_forward.13} parent=96 // pred_fallthru
                _
            $region97: #{mme_vit_forward.13} parent=92 // pred_fallthru
              _
            // Predicated region
            $region98: #{mme_vit_forward.13} parent=92 // pred_check
              _
            $region99: #{mme_vit_forward.13} parent=92 // pred_check_branch
              %563 = sbr.rel (0) target = $region101
            $region100: #{mme_vit_forward.13} parent=92 // pred_region
              loop: start=0, step=1, limit=1
              $region102: #{mme_vit_forward.13} parent=100 // loop_pre_header
                _
              $region103: #{mme_vit_forward.13} parent=100 // loop_header
                %s566 = sphi 0, %s570
                %p567 = scmp.ge.s32.totalorder %s566, 1
                %s571 = sphi %s549, %s549
                %s572 = sphi %s557, %s557
              $region104: #{mme_vit_forward.13} parent=100 // loop_header_branch
                %569 = sbr.rel (%p567) target = $region108
              $region105: #{mme_vit_forward.13} parent=100 // loop_body
                %v573 = vld [vmem:[%s571] sm:$0xf]
                %574 = vst [vmem:[%s572] sm:$0xf] %v573
                %v575 = vld [vmem:[%s571 + $0x4] sm:$0xf]
                %576 = vst [vmem:[%s572 + $0xc] sm:$0xf] %v575
              $region106: #{mme_vit_forward.13} parent=100 // loop_footer
                %s570 = sadd.s32 1, %s566
              $region107: #{mme_vit_forward.13} parent=100 // loop_footer_branch
                %565 = sbr.rel target = $region103
              $region108: #{mme_vit_forward.13} parent=100 // loop_exit
                _
            $region101: #{mme_vit_forward.13} parent=92 // pred_fallthru
              _
          $region93: #{mme_vit_forward.13} parent=88 // pred_fallthru
            _
          %600 = vnop
        $region89: #{mme_vit_forward.13} parent=76 // pred_fallthru
          _
      $region77: #{mme_vit_forward.13} parent=5 // pred_fallthru
        _
      %p601 = scmp.le.s32.totalorder 2, %s11
      // Predicated region
      $region127: #{mme_vit_forward.13} parent=5 // pred_check
        %p602 = pneg %p601
      $region128: #{mme_vit_forward.13} parent=5 // pred_check_branch
        %604 = sbr.rel (%p602) target = $region130
      $region129: #{mme_vit_forward.13} parent=5 // pred_region
        %s605 = ssub.s32 %s11, 2
        // Predicated region
        $region131: #{mme_vit_forward.13} parent=129 // pred_check
          %p606 = pneg %p174
        $region132: #{mme_vit_forward.13} parent=129 // pred_check_branch
          %608 = sbr.rel (%p606) target = $region134
        $region133: #{mme_vit_forward.13} parent=129 // pred_region
          %s609 = sand.u32 %s159, 1
          %s610 = sand.u32 %s159, 1
          %s611 = smul.addr %s610, 8
          %s612 = scalar_lea.vmem [#allocation4], %s611
        $region134: #{mme_vit_forward.13} parent=129 // pred_fallthru
          _
      $region130: #{mme_vit_forward.13} parent=5 // pred_fallthru
        _
    $region6: #{mme_vit_forward.13} parent=1 // loop_footer
      %s15 = sadd.s32 1, %s11
    $region7: #{mme_vit_forward.13} parent=1 // loop_footer_branch
      %10 = sbr.rel target = $region3
    $region8: #{mme_vit_forward.13} parent=1 // loop_exit
      _

// kernel: mme_vit_forward.12
$region0: #{mme_vit_forward.12}
  #allocation0 [shape = 'u32[]', space=smem, size = 0x4, offset = 0x4, fixed_abs, tag = 'smem constant byte address 0x4 - core index']
  #allocation1 [shape = 'u32[144,128]{1,0:T(1,128)}', space=vmem, size = 0x12000, scoped, tag = 'internal scratch']
  %s0 = inlined_call_operand.vmem [shape: bf16[2,4,192], index: 0, kind: input, shape index: {}]
  %s1 = inlined_call_operand.vmem [shape: bf16[192,128], index: 1, kind: input, shape index: {}]
  %s2 = inlined_call_operand.vmem [shape: f32[1,128], index: 2, kind: input, shape index: {}]
  %s3 = inlined_call_operand.vmem [shape: f32[1,1,128], index: 3, kind: input, shape index: {}]
  %s4 = inlined_call_operand.vmem [shape: f32[1,5,128], index: 4, kind: input, shape index: {}]
  %s5 = inlined_call_operand.vmem [shape: bf16[2,8,128], index: 5, kind: output, shape index: {}]
  %s6 = sld [smem:[#allocation0]]
  $region53: #{mme_vit_forward.12} parent=0
    _
  %s8 = ssub.s32 1, %s6
  %s9 = scalar_select 0, %s8, %s6
  loop: start=0, step=1, limit=4
  $region2: #{mme_vit_forward.12} parent=0 // loop_pre_header
    _
  $region3: #{mme_vit_forward.12} parent=0 // loop_header
    %s11 = sphi 0, %s15
    %p12 = scmp.ge.s32.totalorder %s11, 4
    %s21 = sphi 0, %s23
    %s24 = sphi 0, %s21
    %s25 = sphi 0, %s24
    %s41 = sphi 0, %s25
    %s45 = sphi 0, %s45
    %s47 = sphi 0, %s45
    %s48 = sphi 0, %s47
    %s62 = sphi 0, %s48
    %s66 = sphi 0, %s66
    %s68 = sphi 0, %s66
    %s69 = sphi 0, %s68
    %s83 = sphi 0, %s69
    %s87 = sphi 0, %s87
    %s89 = sphi 0, %s87
    %s90 = sphi 0, %s89
    %s104 = sphi 0, %s90
    %s108 = sphi 0, %s108
    %s110 = sphi 0, %s108
    %s111 = sphi 0, %s110
    %s125 = sphi 0, %s111
    %s131 = sphi 0, %s133
    %s134 = sphi 0, %s131
    %s135 = sphi 0, %s134
    %s151 = sphi 0, %s135
  $region4: #{mme_vit_forward.12} parent=0 // loop_header_branch
    %14 = sbr.rel (%p12) target = $region8
  $region5: #{mme_vit_forward.12} parent=0 // loop_body
    %s16 = ssub.s32 %s11, 1
    %s17 = ssub.s32 %s11, 2
    %s18 = sadd.s32 %s11, 1
    %s19 = ssub.s32 %s11, %s18
    %p20 = scmp.eq.s32.totalorder %s19, 0
    %s22 = sadd.s32 %s21, 1
    %s23 = scalar_select %p20, %s21, %s22
    %p26 = pneg %p20
    %p27 = scmp.eq.s32.totalorder %s11, 1
    %p28 = por %p26, %p27
    %p29 = scmp.ne.s32.totalorder %s21, %s24
    %p30 = scmp.eq.s32.totalorder %s11, 0
    %p31 = por %p29, %p30
    %p32 = scmp.ne.s32.totalorder %s21, %s24
    %p33 = scmp.eq.s32.totalorder %s16, 1
    %p34 = por %p32, %p33
    %p35 = scmp.ne.s32.totalorder %s24, %s25
    %p36 = scmp.eq.s32.totalorder %s16, 0
    %p37 = por %p35, %p36
    %p38 = scmp.ne.s32.totalorder %s24, %s25
    %p39 = scmp.eq.s32.totalorder %s17, 1
    %p40 = por %p38, %p39
    %p42 = scmp.ne.s32.totalorder %s25, %s41
    %p43 = scmp.eq.s32.totalorder %s17, 0
    %p44 = por %p42, %p43
    %s46 = sadd.s32 %s45, 1
    %p49 = scmp.eq.s32.totalorder %s11, 1
    %p50 = scmp.ne.s32.totalorder %s45, %s47
    %p51 = scmp.eq.s32.totalorder %s11, 0
    %p52 = por %p50, %p51
    %p53 = scmp.ne.s32.totalorder %s45, %s47
    %p54 = scmp.eq.s32.totalorder %s16, 1
    %p55 = por %p53, %p54
    %p56 = scmp.ne.s32.totalorder %s47, %s48
    %p57 = scmp.eq.s32.totalorder %s16, 0
    %p58 = por %p56, %p57
    %p59 = scmp.ne.s32.totalorder %s47, %s48
    %p60 = scmp.eq.s32.totalorder %s17, 1
    %p61 = por %p59, %p60
    %p63 = scmp.ne.s32.totalorder %s48, %s62
    %p64 = scmp.eq.s32.totalorder %s17, 0
    %p65 = por %p63, %p64
    %s67 = sadd.s32 %s66, 1
    %p70 = scmp.eq.s32.totalorder %s11, 1
    %p71 = scmp.ne.s32.totalorder %s66, %s68
    %p72 = scmp.eq.s32.totalorder %s11, 0
    %p73 = por %p71, %p72
    %p74 = scmp.ne.s32.totalorder %s66, %s68
    %p75 = scmp.eq.s32.totalorder %s16, 1
    %p76 = por %p74, %p75
    %p77 = scmp.ne.s32.totalorder %s68, %s69
    %p78 = scmp.eq.s32.totalorder %s16, 0
    %p79 = por %p77, %p78
    %p80 = scmp.ne.s32.totalorder %s68, %s69
    %p81 = scmp.eq.s32.totalorder %s17, 1
    %p82 = por %p80, %p81
    %p84 = scmp.ne.s32.totalorder %s69, %s83
    %p85 = scmp.eq.s32.totalorder %s17, 0
    %p86 = por %p84, %p85
    %s88 = sadd.s32 %s87, 1
    %p91 = scmp.eq.s32.totalorder %s11, 1
    %p92 = scmp.ne.s32.totalorder %s87, %s89
    %p93 = scmp.eq.s32.totalorder %s11, 0
    %p94 = por %p92, %p93
    %p95 = scmp.ne.s32.totalorder %s87, %s89
    %p96 = scmp.eq.s32.totalorder %s16, 1
    %p97 = por %p95, %p96
    %p98 = scmp.ne.s32.totalorder %s89, %s90
    %p99 = scmp.eq.s32.totalorder %s16, 0
    %p100 = por %p98, %p99
    %p101 = scmp.ne.s32.totalorder %s89, %s90
    %p102 = scmp.eq.s32.totalorder %s17, 1
    %p103 = por %p101, %p102
    %p105 = scmp.ne.s32.totalorder %s90, %s104
    %p106 = scmp.eq.s32.totalorder %s17, 0
    %p107 = por %p105, %p106
    %s109 = sadd.s32 %s108, 1
    %p112 = scmp.eq.s32.totalorder %s11, 1
    %p113 = scmp.ne.s32.totalorder %s108, %s110
    %p114 = scmp.eq.s32.totalorder %s11, 0
    %p115 = por %p113, %p114
    %p116 = scmp.ne.s32.totalorder %s108, %s110
    %p117 = scmp.eq.s32.totalorder %s16, 1
    %p118 = por %p116, %p117
    %p119 = scmp.ne.s32.totalorder %s110, %s111
    %p120 = scmp.eq.s32.totalorder %s16, 0
    %p121 = por %p119, %p120
    %p122 = scmp.ne.s32.totalorder %s110, %s111
    %p123 = scmp.eq.s32.totalorder %s17, 1
    %p124 = por %p122, %p123
    %p126 = scmp.ne.s32.totalorder %s111, %s125
    %p127 = scmp.eq.s32.totalorder %s17, 0
    %p128 = por %p126, %p127
    %s129 = ssub.s32 %s11, %s18
    %p130 = scmp.eq.s32.totalorder %s129, 0
    %s132 = sadd.s32 %s131, 1
    %s133 = scalar_select %p130, %s131, %s132
    %p136 = pneg %p130
    %p137 = scmp.eq.s32.totalorder %s11, 1
    %p138 = por %p136, %p137
    %p139 = scmp.ne.s32.totalorder %s131, %s134
    %p140 = scmp.eq.s32.totalorder %s11, 0
    %p141 = por %p139, %p140
    %p142 = scmp.ne.s32.totalorder %s131, %s134
    %p143 = scmp.eq.s32.totalorder %s16, 1
    %p144 = por %p142, %p143
    %p145 = scmp.ne.s32.totalorder %s134, %s135
    %p146 = scmp.eq.s32.totalorder %s16, 0
    %p147 = por %p145, %p146
    %p148 = scmp.ne.s32.totalorder %s134, %s135
    %p149 = scmp.eq.s32.totalorder %s17, 1
    %p150 = por %p148, %p149
    %p152 = scmp.ne.s32.totalorder %s135, %s151
    %p153 = scmp.eq.s32.totalorder %s17, 0
    %p154 = por %p152, %p153
    %p155 = scmp.le.s32.totalorder 1, %s11
    %p156 = scmp.lt.s32.totalorder %s11, 3
    %p157 = pnand %p155, %p156
    %p158 = pneg %p157
    // Predicated region
    $region9: #{mme_vit_forward.12} parent=5 // pred_check
      _
    $region10: #{mme_vit_forward.12} parent=5 // pred_check_branch
      %160 = sbr.rel (%p157) target = $region12
    $region11: #{mme_vit_forward.12} parent=5 // pred_region
      %s161 = ssub.s32 %s11, 1
      // Predicated region
      $region13: #{mme_vit_forward.12} parent=11 // pred_check
        %p162 = pneg %p58
      $region14: #{mme_vit_forward.12} parent=11 // pred_check_branch
        %164 = sbr.rel (%p162) target = $region16
      $region15: #{mme_vit_forward.12} parent=11 // pred_region
        _
      $region16: #{mme_vit_forward.12} parent=11 // pred_fallthru
        _
      // Predicated region
      $region17: #{mme_vit_forward.12} parent=11 // pred_check
        %p165 = pneg %p79
      $region18: #{mme_vit_forward.12} parent=11 // pred_check_branch
        %167 = sbr.rel (%p165) target = $region20
      $region19: #{mme_vit_forward.12} parent=11 // pred_region
        _
      $region20: #{mme_vit_forward.12} parent=11 // pred_fallthru
        _
      // Predicated region
      $region21: #{mme_vit_forward.12} parent=11 // pred_check
        %p168 = pneg %p100
      $region22: #{mme_vit_forward.12} parent=11 // pred_check_branch
        %170 = sbr.rel (%p168) target = $region24
      $region23: #{mme_vit_forward.12} parent=11 // pred_region
        _
      $region24: #{mme_vit_forward.12} parent=11 // pred_fallthru
        _
      // Predicated region
      $region25: #{mme_vit_forward.12} parent=11 // pred_check
        %p171 = pneg %p121
      $region26: #{mme_vit_forward.12} parent=11 // pred_check_branch
        %173 = sbr.rel (%p171) target = $region28
      $region27: #{mme_vit_forward.12} parent=11 // pred_region
        _
      $region28: #{mme_vit_forward.12} parent=11 // pred_fallthru
        _
    $region12: #{mme_vit_forward.12} parent=5 // pred_fallthru
      _
    %p174 = scmp.lt.s32.totalorder %s11, 2
    // Predicated region
    $region29: #{mme_vit_forward.12} parent=5 // pred_check
      %p175 = pneg %p174
    $region30: #{mme_vit_forward.12} parent=5 // pred_check_branch
      %177 = sbr.rel (%p175) target = $region32
    $region31: #{mme_vit_forward.12} parent=5 // pred_region
      // Predicated region
      $region33: #{mme_vit_forward.12} parent=31 // pred_check
        %p178 = pneg %p31
      $region34: #{mme_vit_forward.12} parent=31 // pred_check_branch
        %180 = sbr.rel (%p178) target = $region36
      $region35: #{mme_vit_forward.12} parent=31 // pred_region
        %p181 = scmp.lt.s32.totalorder %s11, 1
        %s182 = scalar_select %p181, %s11, 1
        %s183 = smul.addr %s182, 2
        %s184 = smul.addr %s183, 2
        %s185 = scalar_lea.vmem %s0, %s184
      $region36: #{mme_vit_forward.12} parent=31 // pred_fallthru
        _
    $region32: #{mme_vit_forward.12} parent=5 // pred_fallthru
      _
    %p186 = scmp.le.s32.totalorder 1, %s11
    %p187 = scmp.lt.s32.totalorder %s11, 3
    %p188 = pnand %p186, %p187
    %p189 = pneg %p188
    // Predicated region
    $region37: #{mme_vit_forward.12} parent=5 // pred_check
      _
    $region38: #{mme_vit_forward.12} parent=5 // pred_check_branch
      %191 = sbr.rel (%p188) target = $region40
    $region39: #{mme_vit_forward.12} parent=5 // pred_region
      %s192 = ssub.s32 %s11, 1
      %p193 = scmp.lt.s32.totalorder %s16, 1
      %s194 = scalar_select %p193, %s16, 1
      %s195 = smul.addr %s194, 2
      %s196 = smul.addr %s195, 2
      %s197 = scalar_lea.vmem %s0, %s196
      %p198 = pneg %p37
      %p199 = pneg %p34
      %p200 = pneg %p58
      %p201 = pneg %p55
      %p202 = pneg %p79
      %p203 = pneg %p76
      %p204 = pneg %p100
      %p205 = pneg %p97
      %p206 = pneg %p121
      %p207 = pneg %p118
      %p208 = pneg %p147
      %p209 = pneg %p144
      %p210 = scmp.lt.s32.totalorder %s16, 1
      %s211 = scalar_select %p210, %s16, 1
      %s212 = smul.addr %s211, 4
      %s213 = scalar_lea.vmem %s5, %s212
      %p214 = scmp.lt.s32.totalorder %s16, 1
      %s215 = scalar_select %p214, %s16, 1
      %s216 = smul.addr %s215, 2
      %s217 = smul.addr %s216, 2
      %s218 = scalar_lea.vmem %s0, %s217
      %p219 = scmp.lt.s32.totalorder %s16, 1
      %s220 = scalar_select %p219, %s16, 1
      %s221 = smul.addr %s220, 4
      %s222 = scalar_lea.vmem %s5, %s221
      %v224 = vld [vmem:[%s218] sm:$0xf]
      %v225 = vld [vmem:[%s4] sm:$0x1f]
      %v226 = vld [vmem:[%s1] sm:$0xf]
      %v227 = vld [vmem:[%s1 + $0x4] sm:$0xf]
      %v228 = vld [vmem:[%s1 + $0x8] sm:$0xf]
      %v229 = vld [vmem:[%s1 + $0xc] sm:$0xf]
      %v230 = vld [vmem:[%s1 + $0x10] sm:$0xf]
      %v231 = vld [vmem:[%s1 + $0x14] sm:$0xf]
      %v232 = vld [vmem:[%s1 + $0x18] sm:$0xf]
      %v233 = vld [vmem:[%s1 + $0x1c] sm:$0xf]
      %v234 = vld [vmem:[%s1 + $0x20] sm:$0xf]
      %v235 = vld [vmem:[%s1 + $0x24] sm:$0xf]
      %v236 = vld [vmem:[%s1 + $0x28] sm:$0xf]
      %v237 = vld [vmem:[%s1 + $0x2c] sm:$0xf]
      %v238 = vld [vmem:[%s1 + $0x30] sm:$0xf]
      %v239 = vld [vmem:[%s1 + $0x34] sm:$0xf]
      %v240 = vld [vmem:[%s1 + $0x38] sm:$0xf]
      %v241 = vld [vmem:[%s1 + $0x3c] sm:$0xf]
      %v242 = vld [vmem:[%s1 + $0x40] sm:$0xf]
      %v243 = vld [vmem:[%s1 + $0x44] sm:$0xf]
      %v244 = vld [vmem:[%s1 + $0x48] sm:$0xf]
      %v245 = vld [vmem:[%s1 + $0x4c] sm:$0xf]
      %v246 = vld [vmem:[%s1 + $0x50] sm:$0xf]
      %v247 = vld [vmem:[%s1 + $0x54] sm:$0xf]
      %v248 = vld [vmem:[%s1 + $0x58] sm:$0xf]
      %v249 = vld [vmem:[%s1 + $0x5c] sm:$0xf]
      %v250 = vld [vmem:[%s2] sm:$0x1]
      %v252 = vlaneseq
      %v253 = vshrl.u32 %v252, 7
      %v254 = vsub.s32 0, %v253
      %v255 = vrot.slane %v250, %v254
      %v259 = vunpack.c.l.s4 1983009808
      %v260 = vunpack.c.0.s8 %v259
      %v261 = vlaneseq
      %v262 = vshrl.u32 %v261, 7
      %v263 = vsub.s32 %v260, %v262
      %v264 = vrot.slane %v224, %v263
      %v265 = vcombine.high %v264, %v264
      %v291 = vunpack.c.l.b16 %v226
      %v292 = vunpack.c.l.b16 %v227
      %v293 = vunpack.c.l.b16 %v228
      %v294 = vunpack.c.l.b16 %v229
      %v295 = vunpack.c.l.b16 %v230
      %v296 = vunpack.c.l.b16 %v231
      %v297 = vunpack.c.l.b16 %v232
      %v298 = vunpack.c.l.b16 %v233
      %v299 = vunpack.c.l.b16 %v234
      %v300 = vunpack.c.l.b16 %v235
      %v301 = vunpack.c.l.b16 %v236
      %v302 = vunpack.c.l.b16 %v237
      %v303 = vunpack.c.l.b16 %v238
      %v304 = vunpack.c.l.b16 %v239
      %v305 = vunpack.c.l.b16 %v240
      %v306 = vunpack.c.l.b16 %v241
      %v307 = vunpack.c.l.b16 %v242
      %v308 = vunpack.c.l.b16 %v243
      %v309 = vunpack.c.l.b16 %v244
      %v310 = vunpack.c.l.b16 %v245
      %v311 = vunpack.c.l.b16 %v246
      %v312 = vunpack.c.l.b16 %v247
      %v313 = vunpack.c.l.b16 %v248
      %v314 = vunpack.c.l.b16 %v249
      %v315 = vpack.c.b16 %v292, %v291
      %v316 = vpack.c.b16 %v294, %v293
      %v317 = vpack.c.b16 %v296, %v295
      %v318 = vpack.c.b16 %v298, %v297
      %v319 = vpack.c.b16 %v300, %v299
      %v320 = vpack.c.b16 %v302, %v301
      %v321 = vpack.c.b16 %v304, %v303
      %v322 = vpack.c.b16 %v306, %v305
      %v323 = vpack.c.b16 %v308, %v307
      %v324 = vpack.c.b16 %v310, %v309
      %v325 = vpack.c.b16 %v312, %v311
      %v326 = vpack.c.b16 %v314, %v313
      %vm339 = vcmask 523264
      %v341 = vsel %vm339, %v265, 0
      %343 = vmatprep.subr.bf16.mxu0 0
      %344 = vmatpush1.bf16.msra.mxu0 %v315
      %345 = vmatprep.subr.bf16.mxu0 0
      %346 = vmatpush1.bf16.msra.mxu0 %v316
      %347 = vmatprep.subr.bf16.mxu0 0
      %348 = vmatpush1.bf16.msra.mxu0 %v317
      %349 = vmatprep.subr.bf16.mxu0 0
      %350 = vmatpush1.bf16.msra.mxu0 %v318
      %351 = vmatprep.subr.bf16.mxu0 0
      %352 = vmatpush1.bf16.msra.mxu0 %v319
      %353 = vmatprep.subr.bf16.mxu0 0
      %354 = vmatpush1.bf16.msra.mxu0 %v320
      %355 = vmatprep.subr.bf16.mxu0 0
      %356 = vmatpush1.bf16.msra.mxu0 %v321
      %357 = vmatprep.subr.bf16.mxu0 0
      %358 = vmatpush1.bf16.msra.mxu0 %v322
      %359 = vmatprep.subr.bf16.mxu0 0
      %360 = vmatpush1.bf16.msra.mxu0 %v323
      %361 = vmatprep.subr.bf16.mxu0 0
      %362 = vmatpush1.bf16.msra.mxu0 %v324
      %363 = vmatprep.subr.bf16.mxu0 0
      %364 = vmatpush1.bf16.msra.mxu0 %v325
      %365 = vmatprep.subr.bf16.mxu0 0
      %366 = vmatpush1.bf16.msra.mxu0 %v326
      %367 = vmatprep.subr.bf16.mxu0 0
      %368 = vmatpush1.bf16.msra.mxu0 0
      %369 = vmatprep.subr.bf16.mxu0 0
      %370 = vmatpush1.bf16.msra.mxu0 0
      %371 = vmatprep.subr.bf16.mxu0 0
      %372 = vmatpush1.bf16.msra.mxu0 0
      %373 = vmatprep.subr.bf16.mxu0 0
      %374 = vmatpush1.bf16.msra.mxu0 0
      %375 = vmatprep.mubr.bf16.mxu0 %v341
      %376 = vmatmul.mubr.bf16.gmra.mrb[0].mxu0 %v264
      %v377 = vpop.f32.mrb[0].mxu0
      %v378 = vadd.f32 %v255, %v377
      %v379 = vpop.f32.mrb[0].mxu0
      %v380 = vpop.f32.mrb[0].mxu0
      %v381 = vpop.f32.mrb[0].mxu0
      %382 = vdwg.mxu0
      %v384 = vrot.slane %v225, 1
      %v386 = vadd.f32 %v378, %v384
      %v387 = vld [vmem:[%s3] sm:$0x1]
      %v388 = vadd.f32 %v387, %v225
      %v390 = vrot.slane %v386, 7
      %vm392 = vcmask 1040384
      %v393 = vsel %vm392, %v388, %v390
      %vm394 = vcmask 1044480
      %v395 = vsel %vm394, %v393, 0.0
      %v396 = vpack.c.bf16 %v395, %v395
      %397 = vst [vmem:[%s222] sm:$0xf] %v396
      %p398 = scmp.lt.s32.totalorder %s16, 1
      %s399 = scalar_select %p398, %s16, 1
      %s400 = smul.addr %s399, 4
      %s401 = scalar_lea.vmem %s5, %s400
      // Predicated region
      $region41: #{mme_vit_forward.12} parent=39 // pred_check
        %p402 = pneg %p144
      $region42: #{mme_vit_forward.12} parent=39 // pred_check_branch
        %404 = sbr.rel (%p402) target = $region44
      $region43: #{mme_vit_forward.12} parent=39 // pred_region
        _
      $region44: #{mme_vit_forward.12} parent=39 // pred_fallthru
        _
    $region40: #{mme_vit_forward.12} parent=5 // pred_fallthru
      _
    %p405 = scmp.le.s32.totalorder 2, %s11
    // Predicated region
    $region45: #{mme_vit_forward.12} parent=5 // pred_check
      %p406 = pneg %p405
    $region46: #{mme_vit_forward.12} parent=5 // pred_check_branch
      %408 = sbr.rel (%p406) target = $region48
    $region47: #{mme_vit_forward.12} parent=5 // pred_region
      %s409 = ssub.s32 %s11, 2
      // Predicated region
      $region49: #{mme_vit_forward.12} parent=47 // pred_check
        %p410 = pneg %p150
      $region50: #{mme_vit_forward.12} parent=47 // pred_check_branch
        %412 = sbr.rel (%p410) target = $region52
      $region51: #{mme_vit_forward.12} parent=47 // pred_region
        %p413 = scmp.lt.s32.totalorder %s17, 1
        %s414 = scalar_select %p413, %s17, 1
        %s415 = smul.addr %s414, 4
        %s416 = scalar_lea.vmem %s5, %s415
      $region52: #{mme_vit_forward.12} parent=47 // pred_fallthru
        _
    $region48: #{mme_vit_forward.12} parent=5 // pred_fallthru
      _
  $region6: #{mme_vit_forward.12} parent=0 // loop_footer
    %s15 = sadd.s32 1, %s11
  $region7: #{mme_vit_forward.12} parent=0 // loop_footer_branch
    %10 = sbr.rel target = $region3
  $region8: #{mme_vit_forward.12} parent=0 // loop_exit
    _

// kernel: mme_vit_forward.15
$region0: #{mme_vit_forward.15}
  #allocation0 [shape = 'u32[]', space=smem, size = 0x4, offset = 0x4, fixed_abs, tag = 'smem constant byte address 0x4 - core index']
  #allocation1 [shape = 'u32[144,128]{1,0:T(1,128)}', space=vmem, size = 0x12000, scoped, tag = 'internal scratch']
  #allocation2 [shape = 'f32[16,128]{1,0:T(8,128)}', space=vmem, size = 0x2000, scoped, tag = 'scratch operand']
  %s0 = inlined_call_operand.vmem [shape: bf16[16,128], index: 0, kind: input, shape index: {}]
  %s1 = inlined_call_operand.vmem [shape: bf16[128,128], index: 1, kind: input, shape index: {}]
  %s2 = inlined_call_operand.vmem [shape: f32[1,128], index: 2, kind: input, shape index: {}]
  %s3 = inlined_call_operand.vmem [shape: bf16[16,128], index: 3, kind: input, shape index: {}]
  %s4 = inlined_call_operand.vmem [shape: bf16[16,128], index: 4, kind: output, shape index: {}]
  %s5 = sld [smem:[#allocation0]]
  $region34: #{mme_vit_forward.15} parent=0
    _
  %s7 = ssub.s32 1, %s5
  %s8 = scalar_select 0, %s7, %s5
  // Predicated region
  $region2: #{mme_vit_forward.15} parent=0 // pred_check
    _
  $region3: #{mme_vit_forward.15} parent=0 // pred_check_branch
    %10 = sbr.rel (0) target = $region5
  $region4: #{mme_vit_forward.15} parent=0 // pred_region
    _
  $region5: #{mme_vit_forward.15} parent=0 // pred_fallthru
    _
  // Predicated region
  $region6: #{mme_vit_forward.15} parent=0 // pred_check
    _
  $region7: #{mme_vit_forward.15} parent=0 // pred_check_branch
    %12 = sbr.rel (0) target = $region9
  $region8: #{mme_vit_forward.15} parent=0 // pred_region
    _
  $region9: #{mme_vit_forward.15} parent=0 // pred_fallthru
    _
  // Predicated region
  $region10: #{mme_vit_forward.15} parent=0 // pred_check
    _
  $region11: #{mme_vit_forward.15} parent=0 // pred_check_branch
    %14 = sbr.rel (0) target = $region13
  $region12: #{mme_vit_forward.15} parent=0 // pred_region
    _
  $region13: #{mme_vit_forward.15} parent=0 // pred_fallthru
    _
  // Predicated region
  $region14: #{mme_vit_forward.15} parent=0 // pred_check
    _
  $region15: #{mme_vit_forward.15} parent=0 // pred_check_branch
    %16 = sbr.rel (0) target = $region17
  $region16: #{mme_vit_forward.15} parent=0 // pred_region
    _
  $region17: #{mme_vit_forward.15} parent=0 // pred_fallthru
    _
  %p18 = scmp.eq.s32.totalorder 0, 0
  // Predicated region
  $region18: #{mme_vit_forward.15} parent=0 // pred_check
    %p19 = pneg %p18
  $region19: #{mme_vit_forward.15} parent=0 // pred_check_branch
    %21 = sbr.rel (%p19) target = $region21
  $region20: #{mme_vit_forward.15} parent=0 // pred_region
    %22 = vst [vmem:[#allocation2] sm:$0xff] 0.0
    %23 = vst [vmem:[#allocation2 + $0x8] sm:$0xff] 0.0
  $region21: #{mme_vit_forward.15} parent=0 // pred_fallthru
    _
  %v24 = vld [vmem:[#allocation2] sm:$0xff]
  %v25 = vld [vmem:[#allocation2 + $0x8] sm:$0xff]
  %v26 = vld [vmem:[%s0] sm:$0xf]
  %v27 = vld [vmem:[%s0 + $0x4] sm:$0xf]
  %v28 = vld [vmem:[%s1] sm:$0xf]
  %v29 = vld [vmem:[%s1 + $0x4] sm:$0xf]
  %v30 = vld [vmem:[%s1 + $0x8] sm:$0xf]
  %v31 = vld [vmem:[%s1 + $0xc] sm:$0xf]
  %v32 = vld [vmem:[%s1 + $0x10] sm:$0xf]
  %v33 = vld [vmem:[%s1 + $0x14] sm:$0xf]
  %v34 = vld [vmem:[%s1 + $0x18] sm:$0xf]
  %v35 = vld [vmem:[%s1 + $0x1c] sm:$0xf]
  %v36 = vld [vmem:[%s1 + $0x20] sm:$0xf]
  %v37 = vld [vmem:[%s1 + $0x24] sm:$0xf]
  %v38 = vld [vmem:[%s1 + $0x28] sm:$0xf]
  %v39 = vld [vmem:[%s1 + $0x2c] sm:$0xf]
  %v40 = vld [vmem:[%s1 + $0x30] sm:$0xf]
  %v41 = vld [vmem:[%s1 + $0x34] sm:$0xf]
  %v42 = vld [vmem:[%s1 + $0x38] sm:$0xf]
  %v43 = vld [vmem:[%s1 + $0x3c] sm:$0xf]
  %v46 = vunpack.c.l.b16 %v26
  %v47 = vunpack.c.l.b16 %v27
  %v48 = vpack.c.b16 %v47, %v46
  %v66 = vunpack.c.l.b16 %v28
  %v67 = vunpack.c.l.b16 %v29
  %v68 = vunpack.c.l.b16 %v30
  %v69 = vunpack.c.l.b16 %v31
  %v70 = vunpack.c.l.b16 %v32
  %v71 = vunpack.c.l.b16 %v33
  %v72 = vunpack.c.l.b16 %v34
  %v73 = vunpack.c.l.b16 %v35
  %v74 = vunpack.c.l.b16 %v36
  %v75 = vunpack.c.l.b16 %v37
  %v76 = vunpack.c.l.b16 %v38
  %v77 = vunpack.c.l.b16 %v39
  %v78 = vunpack.c.l.b16 %v40
  %v79 = vunpack.c.l.b16 %v41
  %v80 = vunpack.c.l.b16 %v42
  %v81 = vunpack.c.l.b16 %v43
  %v82 = vpack.c.b16 %v67, %v66
  %v83 = vpack.c.b16 %v69, %v68
  %v84 = vpack.c.b16 %v71, %v70
  %v85 = vpack.c.b16 %v73, %v72
  %v86 = vpack.c.b16 %v75, %v74
  %v87 = vpack.c.b16 %v77, %v76
  %v88 = vpack.c.b16 %v79, %v78
  %v89 = vpack.c.b16 %v81, %v80
  %98 = vmatprep.subr.bf16.mxu0 0
  %99 = vmatpush1.bf16.msra.mxu0 %v82
  %100 = vmatprep.subr.bf16.mxu0 0
  %101 = vmatpush1.bf16.msra.mxu0 %v83
  %102 = vmatprep.subr.bf16.mxu0 0
  %103 = vmatpush1.bf16.msra.mxu0 %v84
  %104 = vmatprep.subr.bf16.mxu0 0
  %105 = vmatpush1.bf16.msra.mxu0 %v85
  %106 = vmatprep.subr.bf16.mxu0 0
  %107 = vmatpush1.bf16.msra.mxu0 %v86
  %108 = vmatprep.subr.bf16.mxu0 0
  %109 = vmatpush1.bf16.msra.mxu0 %v87
  %110 = vmatprep.subr.bf16.mxu0 0
  %111 = vmatpush1.bf16.msra.mxu0 %v88
  %112 = vmatprep.subr.bf16.mxu0 0
  %113 = vmatpush1.bf16.msra.mxu0 %v89
  %114 = vmatprep.subr.bf16.mxu0 0
  %115 = vmatpush1.bf16.msra.mxu0 0
  %116 = vmatprep.subr.bf16.mxu0 0
  %117 = vmatpush1.bf16.msra.mxu0 0
  %118 = vmatprep.subr.bf16.mxu0 0
  %119 = vmatpush1.bf16.msra.mxu0 0
  %120 = vmatprep.subr.bf16.mxu0 0
  %121 = vmatpush1.bf16.msra.mxu0 0
  %122 = vmatprep.subr.bf16.mxu0 0
  %123 = vmatpush1.bf16.msra.mxu0 0
  %124 = vmatprep.subr.bf16.mxu0 0
  %125 = vmatpush1.bf16.msra.mxu0 0
  %126 = vmatprep.subr.bf16.mxu0 0
  %127 = vmatpush1.bf16.msra.mxu0 0
  %128 = vmatprep.subr.bf16.mxu0 0
  %129 = vmatpush1.bf16.msra.mxu0 0
  %130 = vmatprep.mubr.bf16.mxu0 0
  %131 = vmatmul.mubr.bf16.gmra.mrb[0].mxu0 %v48
  %v132 = vpop.f32.mrb[0].mxu0
  %v133 = vadd.f32 0.0, %v132
  %v134 = vpop.f32.mrb[0].mxu0
  %v135 = vpop.f32.mrb[0].mxu0
  %v136 = vadd.f32 0.0, %v135
  %v137 = vpop.f32.mrb[0].mxu0
  %138 = vdwg.mxu0
  %v139 = vadd.f32 %v24, %v133
  %v140 = vadd.f32 %v25, %v136
  %141 = vst [vmem:[#allocation2] sm:$0xff] %v139
  %142 = vst [vmem:[#allocation2 + $0x8] sm:$0xff] %v140
  // Predicated region
  $region22: #{mme_vit_forward.15} parent=0 // pred_check
    %p143 = pneg %p18
  $region23: #{mme_vit_forward.15} parent=0 // pred_check_branch
    %145 = sbr.rel (%p143) target = $region25
  $region24: #{mme_vit_forward.15} parent=0 // pred_region
    %v146 = vld [vmem:[#allocation2] sm:$0xff]
    %v147 = vld [vmem:[#allocation2 + $0x8] sm:$0xff]
    %v148 = vld [vmem:[%s2] sm:$0x1]
    %v150 = vlaneseq
    %v151 = vshrl.u32 %v150, 7
    %v152 = vsub.s32 0, %v151
    %v153 = vrot.slane %v148, %v152
    %v155 = vadd.f32 %v146, %v153
    %v156 = vadd.f32 %v147, %v153
    %v157 = vld [vmem:[%s3] sm:$0xf]
    %v158 = vld [vmem:[%s3 + $0x4] sm:$0xf]
    %v159 = vunpack.c.l.bf16 %v157
    %v160 = vunpack.c.l.bf16 %v158
    %v161 = vadd.f32 %v155, %v159
    %v162 = vadd.f32 %v156, %v160
    %v163 = vpack.c.bf16 %v162, %v161
    %v165 = vunpack.c.l.b16 %v163
    %v166 = vunpack.c.h.b16 %v163
    %v167 = vpack.c.b16 %v165, %v165
    %v168 = vpack.c.b16 %v166, %v166
    %171 = vst [vmem:[%s4] sm:$0xf] %v167
    %172 = vst [vmem:[%s4 + $0x4] sm:$0xf] %v168
  $region25: #{mme_vit_forward.15} parent=0 // pred_fallthru
    _
  // Predicated region
  $region26: #{mme_vit_forward.15} parent=0 // pred_check
    _
  $region27: #{mme_vit_forward.15} parent=0 // pred_check_branch
    %174 = sbr.rel (0) target = $region29
  $region28: #{mme_vit_forward.15} parent=0 // pred_region
    _
  $region29: #{mme_vit_forward.15} parent=0 // pred_fallthru
    _
  // Predicated region
  $region30: #{mme_vit_forward.15} parent=0 // pred_check
    _
  $region31: #{mme_vit_forward.15} parent=0 // pred_check_branch
    %176 = sbr.rel (0) target = $region33
  $region32: #{mme_vit_forward.15} parent=0 // pred_region
    _
  $region33: #{mme_vit_forward.15} parent=0 // pred_fallthru
    _

// kernel: mme_vit_forward.14
$region0: #{mme_vit_forward.14}
  #allocation0 [shape = 'u32[]', space=smem, size = 0x4, offset = 0x4, fixed_abs, tag = 'smem constant byte address 0x4 - core index']
  #allocation1 [shape = 'u32[144,128]{1,0:T(1,128)}', space=vmem, size = 0x12000, scoped, tag = 'internal scratch']
  #allocation2 [shape = 'f32[4,8,1]{2,1,0:T(8,128)}', space=vmem, size = 0x4000, scoped, tag = 'scratch operand']
  #allocation3 [shape = 'f32[4,8,1]{2,1,0:T(8,128)}', space=vmem, size = 0x4000, scoped, tag = 'scratch operand']
  #allocation4 [shape = 'f32[4,8,32]{2,1,0:T(8,128)}', space=vmem, size = 0x4000, scoped, tag = 'scratch operand']
  %s0 = inlined_call_operand.vmem [shape: bf16[2,8,384], index: 0, kind: input, shape index: {}, may-alias: {0,1,2}]
  %s1 = inlined_call_operand.vmem [shape: bf16[2,8,384], index: 1, kind: input, shape index: {}, may-alias: {0,1,2}]
  %s2 = inlined_call_operand.vmem [shape: bf16[2,8,384], index: 2, kind: input, shape index: {}, may-alias: {0,1,2}]
  %s3 = inlined_call_operand.vmem [shape: f32[1,8], index: 3, kind: input, shape index: {}]
  %s4 = inlined_call_operand.vmem [shape: bf16[2,8,128], index: 4, kind: output, shape index: {}]
  %s5 = sld [smem:[#allocation0]]
  $region57: #{mme_vit_forward.14} parent=0
    _
  %s7 = ssub.s32 1, %s5
  %s8 = scalar_select 0, %s7, %s5
  loop: start=0, step=1, limit=4
  $region2: #{mme_vit_forward.14} parent=0 // loop_pre_header
    _
  $region3: #{mme_vit_forward.14} parent=0 // loop_header
    %s10 = sphi 0, %s14
    %p11 = scmp.ge.s32.totalorder %s10, 4
    %s17 = sphi 0, %s36
    %s18 = sphi 0, %s32
    %s19 = sphi 0, %s28
    %s20 = sphi 0, %s17
    %s21 = sphi 0, %s18
    %s22 = sphi 0, %s19
    %s23 = sphi 0, %s20
    %s24 = sphi 0, %s21
    %s25 = sphi 0, %s22
    %s41 = sphi 0, %s43
    %s44 = sphi 0, %s41
    %s45 = sphi 0, %s44
    %s61 = sphi 0, %s45
    %s69 = sphi 0, %s71
    %s72 = sphi 0, %s69
    %s73 = sphi 0, %s72
    %s89 = sphi 0, %s73
    %s97 = sphi 0, %s99
    %s100 = sphi 0, %s97
    %s101 = sphi 0, %s100
    %s117 = sphi 0, %s101
    %s123 = sphi 0, %s125
    %s126 = sphi 0, %s123
    %s127 = sphi 0, %s126
    %s143 = sphi 0, %s127
    %s151 = sphi 0, %s153
    %s154 = sphi 0, %s151
    %s155 = sphi 0, %s154
    %s171 = sphi 0, %s155
  $region4: #{mme_vit_forward.14} parent=0 // loop_header_branch
    %13 = sbr.rel (%p11) target = $region8
  $region5: #{mme_vit_forward.14} parent=0 // loop_body
    %s15 = ssub.s32 %s10, 1
    %s16 = ssub.s32 %s10, 2
    %s26 = sadd.s32 1, %s19
    %p27 = scmp.ge.s32.totalorder %s26, 1
    %s28 = scalar_select %p27, 0, %s26
    %s29 = sadd.s32 1, %s18
    %s30 = scalar_select %p27, %s29, %s18
    %p31 = scmp.ge.s32.totalorder %s30, 1
    %s32 = scalar_select %p31, 0, %s30
    %s33 = sadd.s32 1, %s17
    %s34 = scalar_select %p31, %s33, %s17
    %p35 = scmp.ge.s32.totalorder %s34, 2
    %s36 = scalar_select %p35, 0, %s34
    %s37 = ssub.s32 %s17, %s36
    %s38 = ssub.s32 %s18, %s32
    %s39 = sor.u32 %s37, %s38
    %p40 = scmp.eq.s32.totalorder %s39, 0
    %s42 = sadd.s32 %s41, 1
    %s43 = scalar_select %p40, %s41, %s42
    %p46 = pneg %p40
    %p47 = scmp.eq.s32.totalorder %s10, 1
    %p48 = por %p46, %p47
    %p49 = scmp.ne.s32.totalorder %s41, %s44
    %p50 = scmp.eq.s32.totalorder %s10, 0
    %p51 = por %p49, %p50
    %p52 = scmp.ne.s32.totalorder %s41, %s44
    %p53 = scmp.eq.s32.totalorder %s15, 1
    %p54 = por %p52, %p53
    %p55 = scmp.ne.s32.totalorder %s44, %s45
    %p56 = scmp.eq.s32.totalorder %s15, 0
    %p57 = por %p55, %p56
    %p58 = scmp.ne.s32.totalorder %s44, %s45
    %p59 = scmp.eq.s32.totalorder %s16, 1
    %p60 = por %p58, %p59
    %p62 = scmp.ne.s32.totalorder %s45, %s61
    %p63 = scmp.eq.s32.totalorder %s16, 0
    %p64 = por %p62, %p63
    %s65 = ssub.s32 %s17, %s36
    %s66 = ssub.s32 %s19, %s28
    %s67 = sor.u32 %s65, %s66
    %p68 = scmp.eq.s32.totalorder %s67, 0
    %s70 = sadd.s32 %s69, 1
    %s71 = scalar_select %p68, %s69, %s70
    %p74 = pneg %p68
    %p75 = scmp.eq.s32.totalorder %s10, 1
    %p76 = por %p74, %p75
    %p77 = scmp.ne.s32.totalorder %s69, %s72
    %p78 = scmp.eq.s32.totalorder %s10, 0
    %p79 = por %p77, %p78
    %p80 = scmp.ne.s32.totalorder %s69, %s72
    %p81 = scmp.eq.s32.totalorder %s15, 1
    %p82 = por %p80, %p81
    %p83 = scmp.ne.s32.totalorder %s72, %s73
    %p84 = scmp.eq.s32.totalorder %s15, 0
    %p85 = por %p83, %p84
    %p86 = scmp.ne.s32.totalorder %s72, %s73
    %p87 = scmp.eq.s32.totalorder %s16, 1
    %p88 = por %p86, %p87
    %p90 = scmp.ne.s32.totalorder %s73, %s89
    %p91 = scmp.eq.s32.totalorder %s16, 0
    %p92 = por %p90, %p91
    %s93 = ssub.s32 %s17, %s36
    %s94 = ssub.s32 %s19, %s28
    %s95 = sor.u32 %s93, %s94
    %p96 = scmp.eq.s32.totalorder %s95, 0
    %s98 = sadd.s32 %s97, 1
    %s99 = scalar_select %p96, %s97, %s98
    %p102 = pneg %p96
    %p103 = scmp.eq.s32.totalorder %s10, 1
    %p104 = por %p102, %p103
    %p105 = scmp.ne.s32.totalorder %s97, %s100
    %p106 = scmp.eq.s32.totalorder %s10, 0
    %p107 = por %p105, %p106
    %p108 = scmp.ne.s32.totalorder %s97, %s100
    %p109 = scmp.eq.s32.totalorder %s15, 1
    %p110 = por %p108, %p109
    %p111 = scmp.ne.s32.totalorder %s100, %s101
    %p112 = scmp.eq.s32.totalorder %s15, 0
    %p113 = por %p111, %p112
    %p114 = scmp.ne.s32.totalorder %s100, %s101
    %p115 = scmp.eq.s32.totalorder %s16, 1
    %p116 = por %p114, %p115
    %p118 = scmp.ne.s32.totalorder %s101, %s117
    %p119 = scmp.eq.s32.totalorder %s16, 0
    %p120 = por %p118, %p119
    %s121 = ssub.s32 %s19, %s28
    %p122 = scmp.eq.s32.totalorder %s121, 0
    %s124 = sadd.s32 %s123, 1
    %s125 = scalar_select %p122, %s123, %s124
    %p128 = pneg %p122
    %p129 = scmp.eq.s32.totalorder %s10, 1
    %p130 = por %p128, %p129
    %p131 = scmp.ne.s32.totalorder %s123, %s126
    %p132 = scmp.eq.s32.totalorder %s10, 0
    %p133 = por %p131, %p132
    %p134 = scmp.ne.s32.totalorder %s123, %s126
    %p135 = scmp.eq.s32.totalorder %s15, 1
    %p136 = por %p134, %p135
    %p137 = scmp.ne.s32.totalorder %s126, %s127
    %p138 = scmp.eq.s32.totalorder %s15, 0
    %p139 = por %p137, %p138
    %p140 = scmp.ne.s32.totalorder %s126, %s127
    %p141 = scmp.eq.s32.totalorder %s16, 1
    %p142 = por %p140, %p141
    %p144 = scmp.ne.s32.totalorder %s127, %s143
    %p145 = scmp.eq.s32.totalorder %s16, 0
    %p146 = por %p144, %p145
    %s147 = ssub.s32 %s17, %s36
    %s148 = ssub.s32 %s18, %s32
    %s149 = sor.u32 %s147, %s148
    %p150 = scmp.eq.s32.totalorder %s149, 0
    %s152 = sadd.s32 %s151, 1
    %s153 = scalar_select %p150, %s151, %s152
    %p156 = pneg %p150
    %p157 = scmp.eq.s32.totalorder %s10, 1
    %p158 = por %p156, %p157
    %p159 = scmp.ne.s32.totalorder %s151, %s154
    %p160 = scmp.eq.s32.totalorder %s10, 0
    %p161 = por %p159, %p160
    %p162 = scmp.ne.s32.totalorder %s151, %s154
    %p163 = scmp.eq.s32.totalorder %s15, 1
    %p164 = por %p162, %p163
    %p165 = scmp.ne.s32.totalorder %s154, %s155
    %p166 = scmp.eq.s32.totalorder %s15, 0
    %p167 = por %p165, %p166
    %p168 = scmp.ne.s32.totalorder %s154, %s155
    %p169 = scmp.eq.s32.totalorder %s16, 1
    %p170 = por %p168, %p169
    %p172 = scmp.ne.s32.totalorder %s155, %s171
    %p173 = scmp.eq.s32.totalorder %s16, 0
    %p174 = por %p172, %p173
    %p175 = scmp.le.s32.totalorder 1, %s10
    %p176 = scmp.lt.s32.totalorder %s10, 3
    %p177 = pnand %p175, %p176
    %p178 = pneg %p177
    // Predicated region
    $region9: #{mme_vit_forward.14} parent=5 // pred_check
      _
    $region10: #{mme_vit_forward.14} parent=5 // pred_check_branch
      %180 = sbr.rel (%p177) target = $region12
    $region11: #{mme_vit_forward.14} parent=5 // pred_region
      %s181 = ssub.s32 %s10, 1
      // Predicated region
      $region13: #{mme_vit_forward.14} parent=11 // pred_check
        %p182 = pneg %p139
      $region14: #{mme_vit_forward.14} parent=11 // pred_check_branch
        %184 = sbr.rel (%p182) target = $region16
      $region15: #{mme_vit_forward.14} parent=11 // pred_region
        %p185 = scmp.lt.s32.totalorder %s22, 0
        %s186 = scalar_select %p185, %s22, 0
        %s187 = scalar_lea.vmem %s3, %s186
      $region16: #{mme_vit_forward.14} parent=11 // pred_fallthru
        _
    $region12: #{mme_vit_forward.14} parent=5 // pred_fallthru
      _
    %p188 = scmp.lt.s32.totalorder %s10, 2
    // Predicated region
    $region17: #{mme_vit_forward.14} parent=5 // pred_check
      %p189 = pneg %p188
    $region18: #{mme_vit_forward.14} parent=5 // pred_check_branch
      %191 = sbr.rel (%p189) target = $region20
    $region19: #{mme_vit_forward.14} parent=5 // pred_region
      // Predicated region
      $region21: #{mme_vit_forward.14} parent=19 // pred_check
        %p192 = pneg %p51
      $region22: #{mme_vit_forward.14} parent=19 // pred_check_branch
        %194 = sbr.rel (%p192) target = $region24
      $region23: #{mme_vit_forward.14} parent=19 // pred_region
        %p195 = scmp.lt.s32.totalorder %s17, 1
        %s196 = scalar_select %p195, %s17, 1
        %p197 = scmp.lt.s32.totalorder %s18, 0
        %s198 = scalar_select %p197, %s18, 0
        %s199 = smul.addr %s198, 3
        %s200 = smul.addr %s196, 3
        %s201 = sadd.s32 %s199, %s200
        %s202 = smul.addr %s201, 4
        %s203 = scalar_lea.vmem %s0, %s202
      $region24: #{mme_vit_forward.14} parent=19 // pred_fallthru
        _
      // Predicated region
      $region25: #{mme_vit_forward.14} parent=19 // pred_check
        %p204 = pneg %p79
      $region26: #{mme_vit_forward.14} parent=19 // pred_check_branch
        %206 = sbr.rel (%p204) target = $region28
      $region27: #{mme_vit_forward.14} parent=19 // pred_region
        %p207 = scmp.lt.s32.totalorder %s17, 1
        %s208 = scalar_select %p207, %s17, 1
        %p209 = scmp.lt.s32.totalorder %s19, 0
        %s210 = scalar_select %p209, %s19, 0
        %s211 = smul.addr %s210, 3
        %s212 = sadd.s32 1, %s211
        %s213 = smul.addr %s208, 3
        %s214 = sadd.s32 %s212, %s213
        %s215 = smul.addr %s214, 4
        %s216 = scalar_lea.vmem %s1, %s215
      $region28: #{mme_vit_forward.14} parent=19 // pred_fallthru
        _
      // Predicated region
      $region29: #{mme_vit_forward.14} parent=19 // pred_check
        %p217 = pneg %p107
      $region30: #{mme_vit_forward.14} parent=19 // pred_check_branch
        %219 = sbr.rel (%p217) target = $region32
      $region31: #{mme_vit_forward.14} parent=19 // pred_region
        %p220 = scmp.lt.s32.totalorder %s17, 1
        %s221 = scalar_select %p220, %s17, 1
        %p222 = scmp.lt.s32.totalorder %s19, 0
        %s223 = scalar_select %p222, %s19, 0
        %s224 = smul.addr %s223, 3
        %s225 = sadd.s32 2, %s224
        %s226 = smul.addr %s221, 3
        %s227 = sadd.s32 %s225, %s226
        %s228 = smul.addr %s227, 4
        %s229 = scalar_lea.vmem %s2, %s228
      $region32: #{mme_vit_forward.14} parent=19 // pred_fallthru
        _
    $region20: #{mme_vit_forward.14} parent=5 // pred_fallthru
      _
    %p230 = scmp.le.s32.totalorder 1, %s10
    %p231 = scmp.lt.s32.totalorder %s10, 3
    %p232 = pnand %p230, %p231
    %p233 = pneg %p232
    // Predicated region
    $region33: #{mme_vit_forward.14} parent=5 // pred_check
      _
    $region34: #{mme_vit_forward.14} parent=5 // pred_check_branch
      %235 = sbr.rel (%p232) target = $region36
    $region35: #{mme_vit_forward.14} parent=5 // pred_region
      %s236 = ssub.s32 %s10, 1
      %p237 = scmp.lt.s32.totalorder %s20, 1
      %s238 = scalar_select %p237, %s20, 1
      %p239 = scmp.lt.s32.totalorder %s21, 0
      %s240 = scalar_select %p239, %s21, 0
      %s241 = smul.addr %s240, 3
      %s242 = smul.addr %s238, 3
      %s243 = sadd.s32 %s241, %s242
      %s244 = smul.addr %s243, 4
      %s245 = scalar_lea.vmem %s0, %s244
      %p246 = pneg %p57
      %p247 = pneg %p54
      %p248 = scmp.lt.s32.totalorder %s20, 1
      %s249 = scalar_select %p248, %s20, 1
      %p250 = scmp.lt.s32.totalorder %s22, 0
      %s251 = scalar_select %p250, %s22, 0
      %s252 = smul.addr %s251, 3
      %s253 = sadd.s32 1, %s252
      %s254 = smul.addr %s249, 3
      %s255 = sadd.s32 %s253, %s254
      %s256 = smul.addr %s255, 4
      %s257 = scalar_lea.vmem %s1, %s256
      %p258 = pneg %p85
      %p259 = pneg %p82
      %p260 = scmp.lt.s32.totalorder %s20, 1
      %s261 = scalar_select %p260, %s20, 1
      %p262 = scmp.lt.s32.totalorder %s22, 0
      %s263 = scalar_select %p262, %s22, 0
      %s264 = smul.addr %s263, 3
      %s265 = sadd.s32 2, %s264
      %s266 = smul.addr %s261, 3
      %s267 = sadd.s32 %s265, %s266
      %s268 = smul.addr %s267, 4
      %s269 = scalar_lea.vmem %s2, %s268
      %p270 = pneg %p113
      %p271 = pneg %p110
      %p272 = scmp.lt.s32.totalorder %s22, 0
      %s273 = scalar_select %p272, %s22, 0
      %s274 = scalar_lea.vmem %s3, %s273
      %p275 = pneg %p139
      %p276 = pneg %p136
      %p277 = pneg %p167
      %p278 = pneg %p164
      %p279 = scmp.lt.s32.totalorder %s20, 1
      %s280 = scalar_select %p279, %s20, 1
      %p281 = scmp.lt.s32.totalorder %s21, 0
      %s282 = scalar_select %p281, %s21, 0
      %s283 = sadd.s32 %s282, %s280
      %s284 = smul.addr %s283, 4
      %s285 = scalar_lea.vmem %s4, %s284
      %p286 = scmp.lt.s32.totalorder %s20, 1
      %s287 = scalar_select %p286, %s20, 1
      %p288 = scmp.lt.s32.totalorder %s21, 0
      %s289 = scalar_select %p288, %s21, 0
      %s290 = smul.addr %s289, 3
      %s291 = smul.addr %s287, 3
      %s292 = sadd.s32 %s290, %s291
      %s293 = smul.addr %s292, 4
      %s294 = scalar_lea.vmem %s0, %s293
      %p295 = scmp.lt.s32.totalorder %s20, 1
      %s296 = scalar_select %p295, %s20, 1
      %p297 = scmp.lt.s32.totalorder %s22, 0
      %s298 = scalar_select %p297, %s22, 0
      %s299 = smul.addr %s298, 3
      %s300 = sadd.s32 1, %s299
      %s301 = smul.addr %s296, 3
      %s302 = sadd.s32 %s300, %s301
      %s303 = smul.addr %s302, 4
      %s304 = scalar_lea.vmem %s1, %s303
      %p305 = scmp.lt.s32.totalorder %s20, 1
      %s306 = scalar_select %p305, %s20, 1
      %p307 = scmp.lt.s32.totalorder %s22, 0
      %s308 = scalar_select %p307, %s22, 0
      %s309 = smul.addr %s308, 3
      %s310 = sadd.s32 2, %s309
      %s311 = smul.addr %s306, 3
      %s312 = sadd.s32 %s310, %s311
      %s313 = smul.addr %s312, 4
      %s314 = scalar_lea.vmem %s2, %s313
      %p315 = scmp.lt.s32.totalorder %s22, 0
      %s316 = scalar_select %p315, %s22, 0
      %s317 = scalar_lea.vmem %s3, %s316
      %p318 = scmp.lt.s32.totalorder %s20, 1
      %s319 = scalar_select %p318, %s20, 1
      %p320 = scmp.lt.s32.totalorder %s21, 0
      %s321 = scalar_select %p320, %s21, 0
      %s322 = sadd.s32 %s321, %s319
      %s323 = smul.addr %s322, 4
      %s324 = scalar_lea.vmem %s4, %s323
      %p326 = scmp.eq.s32.totalorder %s22, 0
      // Predicated region
      $region37: #{mme_vit_forward.14} parent=35 // pred_check
        %p327 = pneg %p326
      $region38: #{mme_vit_forward.14} parent=35 // pred_check_branch
        %329 = sbr.rel (%p327) target = $region40
      $region39: #{mme_vit_forward.14} parent=35 // pred_region
        %vm330 = vcmask 7168
        %331 = vst.msk [vmem:[#allocation2] sm:$0xff] %vm330, -1e+30
        %332 = vst.msk [vmem:[#allocation2 + $0x8] sm:$0xff] %vm330, -1e+30
        %333 = vst.msk [vmem:[#allocation2 + $0x10] sm:$0xff] %vm330, -1e+30
        %334 = vst.msk [vmem:[#allocation2 + $0x18] sm:$0xff] %vm330, -1e+30
        %335 = vst.msk [vmem:[#allocation3] sm:$0xff] %vm330, 0.0
        %336 = vst.msk [vmem:[#allocation3 + $0x8] sm:$0xff] %vm330, 0.0
        %337 = vst.msk [vmem:[#allocation3 + $0x10] sm:$0xff] %vm330, 0.0
        %338 = vst.msk [vmem:[#allocation3 + $0x18] sm:$0xff] %vm330, 0.0
        %vm339 = vcmask 261120
        %340 = vst.msk [vmem:[#allocation4] sm:$0xff] %vm339, 0.0
        %341 = vst.msk [vmem:[#allocation4 + $0x8] sm:$0xff] %vm339, 0.0
        %342 = vst.msk [vmem:[#allocation4 + $0x10] sm:$0xff] %vm339, 0.0
        %343 = vst.msk [vmem:[#allocation4 + $0x18] sm:$0xff] %vm339, 0.0
      $region40: #{mme_vit_forward.14} parent=35 // pred_fallthru
        _
      %v344 = vld [vmem:[%s294] sm:$0xf]
      %v345 = vld [vmem:[%s304] sm:$0xf]
      %v346 = vld [vmem:[%s314] sm:$0xf]
      %v347 = vld [vmem:[%s317] sm:$0x1]
      %vm348 = vcmask 261120
      %v350 = vsel %vm348, %v344, 0
      %v353 = vsel %vm348, %v345, 0
      %355 = vmatprep.subr.bf16.mxu0 0
      %356 = vmatpush1.bf16.xpose.msra.mxu0 %v353
      %357 = vmatprep.subr.bf16.mxu0 0
      %358 = vmatpush1.bf16.xpose.msra.mxu0 0
      %359 = vmatprep.subr.bf16.mxu0 0
      %360 = vmatpush1.bf16.xpose.msra.mxu0 0
      %361 = vmatprep.subr.bf16.mxu0 0
      %362 = vmatpush1.bf16.xpose.msra.mxu0 0
      %363 = vmatprep.subr.bf16.mxu0 0
      %364 = vmatpush1.bf16.xpose.msra.mxu0 0
      %365 = vmatprep.subr.bf16.mxu0 0
      %366 = vmatpush1.bf16.xpose.msra.mxu0 0
      %367 = vmatprep.subr.bf16.mxu0 0
      %368 = vmatpush1.bf16.xpose.msra.mxu0 0
      %369 = vmatprep.subr.bf16.mxu0 0
      %370 = vmatpush1.bf16.xpose.msra.mxu0 0
      %371 = vmatprep.subr.bf16.mxu0 0
      %372 = vmatpush1.bf16.xpose.msra.mxu0 0
      %373 = vmatprep.subr.bf16.mxu0 0
      %374 = vmatpush1.bf16.xpose.msra.mxu0 0
      %375 = vmatprep.subr.bf16.mxu0 0
      %376 = vmatpush1.bf16.xpose.msra.mxu0 0
      %377 = vmatprep.subr.bf16.mxu0 0
      %378 = vmatpush1.bf16.xpose.msra.mxu0 0
      %379 = vmatprep.subr.bf16.mxu0 0
      %380 = vmatpush1.bf16.xpose.msra.mxu0 0
      %381 = vmatprep.subr.bf16.mxu0 0
      %382 = vmatpush1.bf16.xpose.msra.mxu0 0
      %383 = vmatprep.subr.bf16.mxu0 0
      %384 = vmatpush1.bf16.xpose.msra.mxu0 0
      %385 = vmatprep.subr.bf16.mxu0 0
      %386 = vmatpush1.bf16.xpose.msra.mxu0 0
      %387 = vmatprep.mubr.bf16.mxu0 0
      %388 = vmatmul.mubr.bf16.gmra.mrb[0].mxu0 %v350
      %v389 = vpop.f32.mrb[0].mxu0
      %v390 = vadd.f32 0.0, %v389
      %v391 = vpop.f32.mrb[0].mxu0
      %v392 = vpop.f32.mrb[0].mxu0
      %v393 = vpop.f32.mrb[0].mxu0
      %394 = vdwg.mxu0
      %v395 = vmul.f32 %v390, 0.17677669
      %v397 = vlaneseq
      %v398 = vshrl.u32 %v397, 7
      %v399 = vsub.s32 0, %v398
      %v400 = vrot.slane %v347, %v399
      %v402 = vadd.f32 %v395, %v400
      %v403 = vld [vmem:[#allocation2] sm:$0xff]
      %vm404 = vcmask 64512
      %v405 = vsel %vm404, %v402, -inf
      %406 = vmax.xlane.f32.xlu0 %v405
      %v407 = vpop.xlane.xlu0 %406
      %v408 = vmax.f32 %v403, %v407
      %v409 = vsub.f32 %v403, %v408
      %v410 = vmul.f32 %v409, 1.442695
      %v411 = vpow.pop %v410
      %413 = vset.pattern.permute.xlu0 0
      %414 = vperm.xlu0 %413, %v408
      %v415 = vpop.permute.xlu0 %414
      %v417 = vsub.f32 %v402, %v415
      %v418 = vmul.f32 %v417, 1.442695
      %v419 = vpow.pop %v418
      %v420 = vld [vmem:[#allocation3] sm:$0xff]
      %v421 = vmul.f32 %v411, %v420
      %v422 = vsel %vm404, %v419, 0.0
      %423 = vadd.xlane.f32.xlu0 %v422
      %v424 = vpop.xlane.xlu0 %423
      %v425 = vadd.f32 %v421, %v424
      %vm426 = vcmask 7168
      %427 = vst.msk [vmem:[#allocation3] sm:$0xff] %vm426, %v425
      %v428 = vpack.c.bf16 %v419, %v419
      %v430 = vsel %vm404, %v428, 0
      %vm432 = vcmask 1043456
      %v434 = vsel %vm432, %v346, 0
      %436 = vmatprep.subr.bf16.mxu0 0
      %437 = vmatpush1.bf16.msra.mxu0 %v434
      %438 = vmatprep.subr.bf16.mxu0 0
      %439 = vmatpush1.bf16.msra.mxu0 0
      %440 = vmatprep.subr.bf16.mxu0 0
      %441 = vmatpush1.bf16.msra.mxu0 0
      %442 = vmatprep.subr.bf16.mxu0 0
      %443 = vmatpush1.bf16.msra.mxu0 0
      %444 = vmatprep.subr.bf16.mxu0 0
      %445 = vmatpush1.bf16.msra.mxu0 0
      %446 = vmatprep.subr.bf16.mxu0 0
      %447 = vmatpush1.bf16.msra.mxu0 0
      %448 = vmatprep.subr.bf16.mxu0 0
      %449 = vmatpush1.bf16.msra.mxu0 0
      %450 = vmatprep.subr.bf16.mxu0 0
      %451 = vmatpush1.bf16.msra.mxu0 0
      %452 = vmatprep.subr.bf16.mxu0 0
      %453 = vmatpush1.bf16.msra.mxu0 0
      %454 = vmatprep.subr.bf16.mxu0 0
      %455 = vmatpush1.bf16.msra.mxu0 0
      %456 = vmatprep.subr.bf16.mxu0 0
      %457 = vmatpush1.bf16.msra.mxu0 0
      %458 = vmatprep.subr.bf16.mxu0 0
      %459 = vmatpush1.bf16.msra.mxu0 0
      %460 = vmatprep.subr.bf16.mxu0 0
      %461 = vmatpush1.bf16.msra.mxu0 0
      %462 = vmatprep.subr.bf16.mxu0 0
      %463 = vmatpush1.bf16.msra.mxu0 0
      %464 = vmatprep.subr.bf16.mxu0 0
      %465 = vmatpush1.bf16.msra.mxu0 0
      %466 = vmatprep.subr.bf16.mxu0 0
      %467 = vmatpush1.bf16.msra.mxu0 0
      %468 = vmatprep.mubr.bf16.mxu0 0
      %469 = vmatmul.mubr.bf16.gmra.mrb[0].mxu0 %v430
      %v470 = vpop.f32.mrb[0].mxu0
      %v471 = vadd.f32 0.0, %v470
      %v472 = vpop.f32.mrb[0].mxu0
      %v473 = vpop.f32.mrb[0].mxu0
      %v474 = vpop.f32.mrb[0].mxu0
      %475 = vdwg.mxu0
      %v476 = vld [vmem:[#allocation4] sm:$0xff]
      %478 = vset.pattern.permute.xlu0 0
      %479 = vperm.xlu0 %478, %v411
      %v480 = vpop.permute.xlu0 %479
      %v482 = vmul.f32 %v480, %v476
      %v483 = vadd.f32 %v482, %v471
      %484 = vst.msk [vmem:[#allocation4] sm:$0xff] %vm348, %v483
      %485 = vst.msk [vmem:[#allocation2] sm:$0xff] %vm426, %v408
      %v487 = vunpack.c.l.b16 %v344
      %v488 = vpack.c.b16 %v487, %v487
      %489 = vrot.lane.b32.xlu0 %v488, 96
      %v490 = vpop.permute.xlu0 %489
      %v492 = vunpack.c.l.b16 %v345
      %v493 = vpack.c.b16 %v492, %v492
      %494 = vrot.lane.b32.xlu0 %v493, 96
      %v495 = vpop.permute.xlu0 %494
      %v497 = vsel %vm348, %v490, 0
      %v500 = vsel %vm348, %v495, 0
      %502 = vmatprep.subr.bf16.mxu0 0
      %503 = vmatpush1.bf16.xpose.msra.mxu0 %v500
      %504 = vmatprep.subr.bf16.mxu0 0
      %505 = vmatpush1.bf16.xpose.msra.mxu0 0
      %506 = vmatprep.subr.bf16.mxu0 0
      %507 = vmatpush1.bf16.xpose.msra.mxu0 0
      %508 = vmatprep.subr.bf16.mxu0 0
      %509 = vmatpush1.bf16.xpose.msra.mxu0 0
      %510 = vmatprep.subr.bf16.mxu0 0
      %511 = vmatpush1.bf16.xpose.msra.mxu0 0
      %512 = vmatprep.subr.bf16.mxu0 0
      %513 = vmatpush1.bf16.xpose.msra.mxu0 0
      %514 = vmatprep.subr.bf16.mxu0 0
      %515 = vmatpush1.bf16.xpose.msra.mxu0 0
      %516 = vmatprep.subr.bf16.mxu0 0
      %517 = vmatpush1.bf16.xpose.msra.mxu0 0
      %518 = vmatprep.subr.bf16.mxu0 0
      %519 = vmatpush1.bf16.xpose.msra.mxu0 0
      %520 = vmatprep.subr.bf16.mxu0 0
      %521 = vmatpush1.bf16.xpose.msra.mxu0 0
      %522 = vmatprep.subr.bf16.mxu0 0
      %523 = vmatpush1.bf16.xpose.msra.mxu0 0
      %524 = vmatprep.subr.bf16.mxu0 0
      %525 = vmatpush1.bf16.xpose.msra.mxu0 0
      %526 = vmatprep.subr.bf16.mxu0 0
      %527 = vmatpush1.bf16.xpose.msra.mxu0 0
      %528 = vmatprep.subr.bf16.mxu0 0
      %529 = vmatpush1.bf16.xpose.msra.mxu0 0
      %530 = vmatprep.subr.bf16.mxu0 0
      %531 = vmatpush1.bf16.xpose.msra.mxu0 0
      %532 = vmatprep.subr.bf16.mxu0 0
      %533 = vmatpush1.bf16.xpose.msra.mxu0 0
      %534 = vmatprep.mubr.bf16.mxu0 0
      %535 = vmatmul.mubr.bf16.gmra.mrb[0].mxu0 %v497
      %v536 = vpop.f32.mrb[0].mxu0
      %v537 = vadd.f32 0.0, %v536
      %v538 = vpop.f32.mrb[0].mxu0
      %v539 = vpop.f32.mrb[0].mxu0
      %v540 = vpop.f32.mrb[0].mxu0
      %541 = vdwg.mxu0
      %v542 = vmul.f32 %v537, 0.17677669
      %v543 = vadd.f32 %v542, %v400
      %s544 = scalar_lea.vmem [#allocation2], 8
      %v545 = vld [vmem:[%s544] sm:$0xff]
      %v546 = vsel %vm404, %v543, -inf
      %547 = vmax.xlane.f32.xlu0 %v546
      %v548 = vpop.xlane.xlu0 %547
      %v549 = vmax.f32 %v545, %v548
      %v550 = vsub.f32 %v545, %v549
      %v551 = vmul.f32 %v550, 1.442695
      %v552 = vpow.pop %v551
      %554 = vset.pattern.permute.xlu0 0
      %555 = vperm.xlu0 %554, %v549
      %v556 = vpop.permute.xlu0 %555
      %v558 = vsub.f32 %v543, %v556
      %v559 = vmul.f32 %v558, 1.442695
      %v560 = vpow.pop %v559
      %s561 = scalar_lea.vmem [#allocation3], 8
      %v562 = vld [vmem:[%s561] sm:$0xff]
      %v563 = vmul.f32 %v552, %v562
      %v564 = vsel %vm404, %v560, 0.0
      %565 = vadd.xlane.f32.xlu0 %v564
      %v566 = vpop.xlane.xlu0 %565
      %v567 = vadd.f32 %v563, %v566
      %568 = vst.msk [vmem:[%s561] sm:$0xff] %vm426, %v567
      %v569 = vpack.c.bf16 %v560, %v560
      %v571 = vunpack.c.l.b16 %v346
      %v572 = vpack.c.b16 %v571, %v571
      %573 = vrot.lane.b32.xlu0 %v572, 96
      %v574 = vpop.permute.xlu0 %573
      %v576 = vsel %vm404, %v569, 0
      %v579 = vsel %vm432, %v574, 0
      %581 = vmatprep.subr.bf16.mxu0 0
      %582 = vmatpush1.bf16.msra.mxu0 %v579
      %583 = vmatprep.subr.bf16.mxu0 0
      %584 = vmatpush1.bf16.msra.mxu0 0
      %585 = vmatprep.subr.bf16.mxu0 0
      %586 = vmatpush1.bf16.msra.mxu0 0
      %587 = vmatprep.subr.bf16.mxu0 0
      %588 = vmatpush1.bf16.msra.mxu0 0
      %589 = vmatprep.subr.bf16.mxu0 0
      %590 = vmatpush1.bf16.msra.mxu0 0
      %591 = vmatprep.subr.bf16.mxu0 0
      %592 = vmatpush1.bf16.msra.mxu0 0
      %593 = vmatprep.subr.bf16.mxu0 0
      %594 = vmatpush1.bf16.msra.mxu0 0
      %595 = vmatprep.subr.bf16.mxu0 0
      %596 = vmatpush1.bf16.msra.mxu0 0
      %597 = vmatprep.subr.bf16.mxu0 0
      %598 = vmatpush1.bf16.msra.mxu0 0
      %599 = vmatprep.subr.bf16.mxu0 0
      %600 = vmatpush1.bf16.msra.mxu0 0
      %601 = vmatprep.subr.bf16.mxu0 0
      %602 = vmatpush1.bf16.msra.mxu0 0
      %603 = vmatprep.subr.bf16.mxu0 0
      %604 = vmatpush1.bf16.msra.mxu0 0
      %605 = vmatprep.subr.bf16.mxu0 0
      %606 = vmatpush1.bf16.msra.mxu0 0
      %607 = vmatprep.subr.bf16.mxu0 0
      %608 = vmatpush1.bf16.msra.mxu0 0
      %609 = vmatprep.subr.bf16.mxu0 0
      %610 = vmatpush1.bf16.msra.mxu0 0
      %611 = vmatprep.subr.bf16.mxu0 0
      %612 = vmatpush1.bf16.msra.mxu0 0
      %613 = vmatprep.mubr.bf16.mxu0 0
      %614 = vmatmul.mubr.bf16.gmra.mrb[0].mxu0 %v576
      %v615 = vpop.f32.mrb[0].mxu0
      %v616 = vadd.f32 0.0, %v615
      %v617 = vpop.f32.mrb[0].mxu0
      %v618 = vpop.f32.mrb[0].mxu0
      %v619 = vpop.f32.mrb[0].mxu0
      %620 = vdwg.mxu0
      %s621 = scalar_lea.vmem [#allocation4], 8
      %v622 = vld [vmem:[%s621] sm:$0xff]
      %624 = vset.pattern.permute.xlu0 0
      %625 = vperm.xlu0 %624, %v552
      %v626 = vpop.permute.xlu0 %625
      %v628 = vmul.f32 %v626, %v622
      %v629 = vadd.f32 %v628, %v616
      %630 = vst.msk [vmem:[%s621] sm:$0xff] %vm348, %v629
      %631 = vst.msk [vmem:[%s544] sm:$0xff] %vm426, %v549
      %632 = vrot.lane.b32.xlu0 %v488, 64
      %v633 = vpop.permute.xlu0 %632
      %634 = vrot.lane.b32.xlu0 %v493, 64
      %v635 = vpop.permute.xlu0 %634
      %v637 = vsel %vm348, %v633, 0
      %v640 = vsel %vm348, %v635, 0
      %642 = vmatprep.subr.bf16.mxu0 0
      %643 = vmatpush1.bf16.xpose.msra.mxu0 %v640
      %644 = vmatprep.subr.bf16.mxu0 0
      %645 = vmatpush1.bf16.xpose.msra.mxu0 0
      %646 = vmatprep.subr.bf16.mxu0 0
      %647 = vmatpush1.bf16.xpose.msra.mxu0 0
      %648 = vmatprep.subr.bf16.mxu0 0
      %649 = vmatpush1.bf16.xpose.msra.mxu0 0
      %650 = vmatprep.subr.bf16.mxu0 0
      %651 = vmatpush1.bf16.xpose.msra.mxu0 0
      %652 = vmatprep.subr.bf16.mxu0 0
      %653 = vmatpush1.bf16.xpose.msra.mxu0 0
      %654 = vmatprep.subr.bf16.mxu0 0
      %655 = vmatpush1.bf16.xpose.msra.mxu0 0
      %656 = vmatprep.subr.bf16.mxu0 0
      %657 = vmatpush1.bf16.xpose.msra.mxu0 0
      %658 = vmatprep.subr.bf16.mxu0 0
      %659 = vmatpush1.bf16.xpose.msra.mxu0 0
      %660 = vmatprep.subr.bf16.mxu0 0
      %661 = vmatpush1.bf16.xpose.msra.mxu0 0
      %662 = vmatprep.subr.bf16.mxu0 0
      %663 = vmatpush1.bf16.xpose.msra.mxu0 0
      %664 = vmatprep.subr.bf16.mxu0 0
      %665 = vmatpush1.bf16.xpose.msra.mxu0 0
      %666 = vmatprep.subr.bf16.mxu0 0
      %667 = vmatpush1.bf16.xpose.msra.mxu0 0
      %668 = vmatprep.subr.bf16.mxu0 0
      %669 = vmatpush1.bf16.xpose.msra.mxu0 0
      %670 = vmatprep.subr.bf16.mxu0 0
      %671 = vmatpush1.bf16.xpose.msra.mxu0 0
      %672 = vmatprep.subr.bf16.mxu0 0
      %673 = vmatpush1.bf16.xpose.msra.mxu0 0
      %674 = vmatprep.mubr.bf16.mxu0 0
      %675 = vmatmul.mubr.bf16.gmra.mrb[0].mxu0 %v637
      %v676 = vpop.f32.mrb[0].mxu0
      %v677 = vadd.f32 0.0, %v676
      %v678 = vpop.f32.mrb[0].mxu0
      %v679 = vpop.f32.mrb[0].mxu0
      %v680 = vpop.f32.mrb[0].mxu0
      %681 = vdwg.mxu0
      %v682 = vmul.f32 %v677, 0.17677669
      %v683 = vadd.f32 %v682, %v400
      %s684 = scalar_lea.vmem [#allocation2], 16
      %v685 = vld [vmem:[%s684] sm:$0xff]
      %v686 = vsel %vm404, %v683, -inf
      %687 = vmax.xlane.f32.xlu0 %v686
      %v688 = vpop.xlane.xlu0 %687
      %v689 = vmax.f32 %v685, %v688
      %v690 = vsub.f32 %v685, %v689
      %v691 = vmul.f32 %v690, 1.442695
      %v692 = vpow.pop %v691
      %694 = vset.pattern.permute.xlu0 0
      %695 = vperm.xlu0 %694, %v689
      %v696 = vpop.permute.xlu0 %695
      %v698 = vsub.f32 %v683, %v696
      %v699 = vmul.f32 %v698, 1.442695
      %v700 = vpow.pop %v699
      %s701 = scalar_lea.vmem [#allocation3], 16
      %v702 = vld [vmem:[%s701] sm:$0xff]
      %v703 = vmul.f32 %v692, %v702
      %v704 = vsel %vm404, %v700, 0.0
      %705 = vadd.xlane.f32.xlu0 %v704
      %v706 = vpop.xlane.xlu0 %705
      %v707 = vadd.f32 %v703, %v706
      %708 = vst.msk [vmem:[%s701] sm:$0xff] %vm426, %v707
      %v709 = vpack.c.bf16 %v700, %v700
      %710 = vrot.lane.b32.xlu0 %v572, 64
      %v711 = vpop.permute.xlu0 %710
      %v713 = vsel %vm404, %v709, 0
      %v716 = vsel %vm432, %v711, 0
      %718 = vmatprep.subr.bf16.mxu0 0
      %719 = vmatpush1.bf16.msra.mxu0 %v716
      %720 = vmatprep.subr.bf16.mxu0 0
      %721 = vmatpush1.bf16.msra.mxu0 0
      %722 = vmatprep.subr.bf16.mxu0 0
      %723 = vmatpush1.bf16.msra.mxu0 0
      %724 = vmatprep.subr.bf16.mxu0 0
      %725 = vmatpush1.bf16.msra.mxu0 0
      %726 = vmatprep.subr.bf16.mxu0 0
      %727 = vmatpush1.bf16.msra.mxu0 0
      %728 = vmatprep.subr.bf16.mxu0 0
      %729 = vmatpush1.bf16.msra.mxu0 0
      %730 = vmatprep.subr.bf16.mxu0 0
      %731 = vmatpush1.bf16.msra.mxu0 0
      %732 = vmatprep.subr.bf16.mxu0 0
      %733 = vmatpush1.bf16.msra.mxu0 0
      %734 = vmatprep.subr.bf16.mxu0 0
      %735 = vmatpush1.bf16.msra.mxu0 0
      %736 = vmatprep.subr.bf16.mxu0 0
      %737 = vmatpush1.bf16.msra.mxu0 0
      %738 = vmatprep.subr.bf16.mxu0 0
      %739 = vmatpush1.bf16.msra.mxu0 0
      %740 = vmatprep.subr.bf16.mxu0 0
      %741 = vmatpush1.bf16.msra.mxu0 0
      %742 = vmatprep.subr.bf16.mxu0 0
      %743 = vmatpush1.bf16.msra.mxu0 0
      %744 = vmatprep.subr.bf16.mxu0 0
      %745 = vmatpush1.bf16.msra.mxu0 0
      %746 = vmatprep.subr.bf16.mxu0 0
      %747 = vmatpush1.bf16.msra.mxu0 0
      %748 = vmatprep.subr.bf16.mxu0 0
      %749 = vmatpush1.bf16.msra.mxu0 0
      %750 = vmatprep.mubr.bf16.mxu0 0
      %751 = vmatmul.mubr.bf16.gmra.mrb[0].mxu0 %v713
      %v752 = vpop.f32.mrb[0].mxu0
      %v753 = vadd.f32 0.0, %v752
      %v754 = vpop.f32.mrb[0].mxu0
      %v755 = vpop.f32.mrb[0].mxu0
      %v756 = vpop.f32.mrb[0].mxu0
      %757 = vdwg.mxu0
      %s758 = scalar_lea.vmem [#allocation4], 16
      %v759 = vld [vmem:[%s758] sm:$0xff]
      %761 = vset.pattern.permute.xlu0 0
      %762 = vperm.xlu0 %761, %v692
      %v763 = vpop.permute.xlu0 %762
      %v765 = vmul.f32 %v763, %v759
      %v766 = vadd.f32 %v765, %v753
      %767 = vst.msk [vmem:[%s758] sm:$0xff] %vm348, %v766
      %768 = vst.msk [vmem:[%s684] sm:$0xff] %vm426, %v689
      %769 = vrot.lane.b32.xlu0 %v488, 32
      %v770 = vpop.permute.xlu0 %769
      %771 = vrot.lane.b32.xlu0 %v493, 32
      %v772 = vpop.permute.xlu0 %771
      %v774 = vsel %vm348, %v770, 0
      %v777 = vsel %vm348, %v772, 0
      %779 = vmatprep.subr.bf16.mxu0 0
      %780 = vmatpush1.bf16.xpose.msra.mxu0 %v777
      %781 = vmatprep.subr.bf16.mxu0 0
      %782 = vmatpush1.bf16.xpose.msra.mxu0 0
      %783 = vmatprep.subr.bf16.mxu0 0
      %784 = vmatpush1.bf16.xpose.msra.mxu0 0
      %785 = vmatprep.subr.bf16.mxu0 0
      %786 = vmatpush1.bf16.xpose.msra.mxu0 0
      %787 = vmatprep.subr.bf16.mxu0 0
      %788 = vmatpush1.bf16.xpose.msra.mxu0 0
      %789 = vmatprep.subr.bf16.mxu0 0
      %790 = vmatpush1.bf16.xpose.msra.mxu0 0
      %791 = vmatprep.subr.bf16.mxu0 0
      %792 = vmatpush1.bf16.xpose.msra.mxu0 0
      %793 = vmatprep.subr.bf16.mxu0 0
      %794 = vmatpush1.bf16.xpose.msra.mxu0 0
      %795 = vmatprep.subr.bf16.mxu0 0
      %796 = vmatpush1.bf16.xpose.msra.mxu0 0
      %797 = vmatprep.subr.bf16.mxu0 0
      %798 = vmatpush1.bf16.xpose.msra.mxu0 0
      %799 = vmatprep.subr.bf16.mxu0 0
      %800 = vmatpush1.bf16.xpose.msra.mxu0 0
      %801 = vmatprep.subr.bf16.mxu0 0
      %802 = vmatpush1.bf16.xpose.msra.mxu0 0
      %803 = vmatprep.subr.bf16.mxu0 0
      %804 = vmatpush1.bf16.xpose.msra.mxu0 0
      %805 = vmatprep.subr.bf16.mxu0 0
      %806 = vmatpush1.bf16.xpose.msra.mxu0 0
      %807 = vmatprep.subr.bf16.mxu0 0
      %808 = vmatpush1.bf16.xpose.msra.mxu0 0
      %809 = vmatprep.subr.bf16.mxu0 0
      %810 = vmatpush1.bf16.xpose.msra.mxu0 0
      %811 = vmatprep.mubr.bf16.mxu0 0
      %812 = vmatmul.mubr.bf16.gmra.mrb[0].mxu0 %v774
      %v813 = vpop.f32.mrb[0].mxu0
      %v814 = vadd.f32 0.0, %v813
      %v815 = vpop.f32.mrb[0].mxu0
      %v816 = vpop.f32.mrb[0].mxu0
      %v817 = vpop.f32.mrb[0].mxu0
      %818 = vdwg.mxu0
      %v819 = vmul.f32 %v814, 0.17677669
      %v820 = vadd.f32 %v819, %v400
      %s821 = scalar_lea.vmem [#allocation2], 24
      %v822 = vld [vmem:[%s821] sm:$0xff]
      %v823 = vsel %vm404, %v820, -inf
      %824 = vmax.xlane.f32.xlu0 %v823
      %v825 = vpop.xlane.xlu0 %824
      %v826 = vmax.f32 %v822, %v825
      %v827 = vsub.f32 %v822, %v826
      %v828 = vmul.f32 %v827, 1.442695
      %v829 = vpow.pop %v828
      %831 = vset.pattern.permute.xlu0 0
      %832 = vperm.xlu0 %831, %v826
      %v833 = vpop.permute.xlu0 %832
      %v835 = vsub.f32 %v820, %v833
      %v836 = vmul.f32 %v835, 1.442695
      %v837 = vpow.pop %v836
      %s838 = scalar_lea.vmem [#allocation3], 24
      %v839 = vld [vmem:[%s838] sm:$0xff]
      %v840 = vmul.f32 %v829, %v839
      %v841 = vsel %vm404, %v837, 0.0
      %842 = vadd.xlane.f32.xlu0 %v841
      %v843 = vpop.xlane.xlu0 %842
      %v844 = vadd.f32 %v840, %v843
      %845 = vst.msk [vmem:[%s838] sm:$0xff] %vm426, %v844
      %v846 = vpack.c.bf16 %v837, %v837
      %847 = vrot.lane.b32.xlu0 %v572, 32
      %v848 = vpop.permute.xlu0 %847
      %v850 = vsel %vm404, %v846, 0
      %v853 = vsel %vm432, %v848, 0
      %855 = vmatprep.subr.bf16.mxu0 0
      %856 = vmatpush1.bf16.msra.mxu0 %v853
      %857 = vmatprep.subr.bf16.mxu0 0
      %858 = vmatpush1.bf16.msra.mxu0 0
      %859 = vmatprep.subr.bf16.mxu0 0
      %860 = vmatpush1.bf16.msra.mxu0 0
      %861 = vmatprep.subr.bf16.mxu0 0
      %862 = vmatpush1.bf16.msra.mxu0 0
      %863 = vmatprep.subr.bf16.mxu0 0
      %864 = vmatpush1.bf16.msra.mxu0 0
      %865 = vmatprep.subr.bf16.mxu0 0
      %866 = vmatpush1.bf16.msra.mxu0 0
      %867 = vmatprep.subr.bf16.mxu0 0
      %868 = vmatpush1.bf16.msra.mxu0 0
      %869 = vmatprep.subr.bf16.mxu0 0
      %870 = vmatpush1.bf16.msra.mxu0 0
      %871 = vmatprep.subr.bf16.mxu0 0
      %872 = vmatpush1.bf16.msra.mxu0 0
      %873 = vmatprep.subr.bf16.mxu0 0
      %874 = vmatpush1.bf16.msra.mxu0 0
      %875 = vmatprep.subr.bf16.mxu0 0
      %876 = vmatpush1.bf16.msra.mxu0 0
      %877 = vmatprep.subr.bf16.mxu0 0
      %878 = vmatpush1.bf16.msra.mxu0 0
      %879 = vmatprep.subr.bf16.mxu0 0
      %880 = vmatpush1.bf16.msra.mxu0 0
      %881 = vmatprep.subr.bf16.mxu0 0
      %882 = vmatpush1.bf16.msra.mxu0 0
      %883 = vmatprep.subr.bf16.mxu0 0
      %884 = vmatpush1.bf16.msra.mxu0 0
      %885 = vmatprep.subr.bf16.mxu0 0
      %886 = vmatpush1.bf16.msra.mxu0 0
      %887 = vmatprep.mubr.bf16.mxu0 0
      %888 = vmatmul.mubr.bf16.gmra.mrb[0].mxu0 %v850
      %v889 = vpop.f32.mrb[0].mxu0
      %v890 = vadd.f32 0.0, %v889
      %v891 = vpop.f32.mrb[0].mxu0
      %v892 = vpop.f32.mrb[0].mxu0
      %v893 = vpop.f32.mrb[0].mxu0
      %894 = vdwg.mxu0
      %s895 = scalar_lea.vmem [#allocation4], 24
      %v896 = vld [vmem:[%s895] sm:$0xff]
      %898 = vset.pattern.permute.xlu0 0
      %899 = vperm.xlu0 %898, %v829
      %v900 = vpop.permute.xlu0 %899
      %v902 = vmul.f32 %v900, %v896
      %v903 = vadd.f32 %v902, %v890
      %904 = vst.msk [vmem:[%s895] sm:$0xff] %vm348, %v903
      %905 = vst.msk [vmem:[%s821] sm:$0xff] %vm426, %v826
      // Predicated region
      $region41: #{mme_vit_forward.14} parent=35 // pred_check
        %p906 = pneg %p326
      $region42: #{mme_vit_forward.14} parent=35 // pred_check_branch
        %908 = sbr.rel (%p906) target = $region44
      $region43: #{mme_vit_forward.14} parent=35 // pred_region
        %v909 = vld [vmem:[#allocation3] sm:$0xff]
        %v910 = vrcp.pop %v909
        %v911 = vld [vmem:[#allocation4] sm:$0xff]
        %913 = vset.pattern.permute.xlu0 0
        %914 = vperm.xlu0 %913, %v910
        %v915 = vpop.permute.xlu0 %914
        %v917 = vmul.f32 %v911, %v915
        %v918 = vpack.c.bf16 %v917, %v917
        %vm919 = vcmask 257024
        %920 = vst.msk [vmem:[%s324] sm:$0xf] %vm919, %v918
        %v921 = vld [vmem:[%s561] sm:$0xff]
        %v922 = vrcp.pop %v921
        %v923 = vld [vmem:[%s621] sm:$0xff]
        %925 = vset.pattern.permute.xlu0 0
        %926 = vperm.xlu0 %925, %v922
        %v927 = vpop.permute.xlu0 %926
        %v929 = vmul.f32 %v923, %v927
        %v930 = vpack.c.bf16 %v929, %v929
        %v932 = vunpack.c.l.b16 %v930
        %v933 = vpack.c.b16 %v932, %v932
        %934 = vrot.lane.b32.xlu0 %v933, 32
        %v935 = vpop.permute.xlu0 %934
        %vm937 = vcmask 519424
        %938 = vst.msk [vmem:[%s324] sm:$0xf] %vm937, %v935
        %v939 = vld [vmem:[%s701] sm:$0xff]
        %v940 = vrcp.pop %v939
        %v941 = vld [vmem:[%s758] sm:$0xff]
        %943 = vset.pattern.permute.xlu0 0
        %944 = vperm.xlu0 %943, %v940
        %v945 = vpop.permute.xlu0 %944
        %v947 = vmul.f32 %v941, %v945
        %v948 = vpack.c.bf16 %v947, %v947
        %v950 = vunpack.c.l.b16 %v948
        %v951 = vpack.c.b16 %v950, %v950
        %952 = vrot.lane.b32.xlu0 %v951, 64
        %v953 = vpop.permute.xlu0 %952
        %vm955 = vcmask 781824
        %956 = vst.msk [vmem:[%s324] sm:$0xf] %vm955, %v953
        %v957 = vld [vmem:[%s838] sm:$0xff]
        %v958 = vrcp.pop %v957
        %v959 = vld [vmem:[%s895] sm:$0xff]
        %961 = vset.pattern.permute.xlu0 0
        %962 = vperm.xlu0 %961, %v958
        %v963 = vpop.permute.xlu0 %962
        %v965 = vmul.f32 %v959, %v963
        %v966 = vpack.c.bf16 %v965, %v965
        %v968 = vunpack.c.l.b16 %v966
        %v969 = vpack.c.b16 %v968, %v968
        %970 = vrot.lane.b32.xlu0 %v969, 96
        %v971 = vpop.permute.xlu0 %970
        %vm973 = vcmask 1044224
        %974 = vst.msk [vmem:[%s324] sm:$0xf] %vm973, %v971
      $region44: #{mme_vit_forward.14} parent=35 // pred_fallthru
        _
      %p975 = scmp.lt.s32.totalorder %s20, 1
      %s976 = scalar_select %p975, %s20, 1
      %p977 = scmp.lt.s32.totalorder %s21, 0
      %s978 = scalar_select %p977, %s21, 0
      %s979 = sadd.s32 %s978, %s976
      %s980 = smul.addr %s979, 4
      %s981 = scalar_lea.vmem %s4, %s980
      // Predicated region
      $region45: #{mme_vit_forward.14} parent=35 // pred_check
        %p982 = pneg %p164
      $region46: #{mme_vit_forward.14} parent=35 // pred_check_branch
        %984 = sbr.rel (%p982) target = $region48
      $region47: #{mme_vit_forward.14} parent=35 // pred_region
        _
      $region48: #{mme_vit_forward.14} parent=35 // pred_fallthru
        _
    $region36: #{mme_vit_forward.14} parent=5 // pred_fallthru
      _
    %p985 = scmp.le.s32.totalorder 2, %s10
    // Predicated region
    $region49: #{mme_vit_forward.14} parent=5 // pred_check
      %p986 = pneg %p985
    $region50: #{mme_vit_forward.14} parent=5 // pred_check_branch
      %988 = sbr.rel (%p986) target = $region52
    $region51: #{mme_vit_forward.14} parent=5 // pred_region
      %s989 = ssub.s32 %s10, 2
      // Predicated region
      $region53: #{mme_vit_forward.14} parent=51 // pred_check
        %p990 = pneg %p170
      $region54: #{mme_vit_forward.14} parent=51 // pred_check_branch
        %992 = sbr.rel (%p990) target = $region56
      $region55: #{mme_vit_forward.14} parent=51 // pred_region
        %p993 = scmp.lt.s32.totalorder %s23, 1
        %s994 = scalar_select %p993, %s23, 1
        %p995 = scmp.lt.s32.totalorder %s24, 0
        %s996 = scalar_select %p995, %s24, 0
        %s997 = sadd.s32 %s996, %s994
        %s998 = smul.addr %s997, 4
        %s999 = scalar_lea.vmem %s4, %s998
      $region56: #{mme_vit_forward.14} parent=51 // pred_fallthru
        _
    $region52: #{mme_vit_forward.14} parent=5 // pred_fallthru
      _
  $region6: #{mme_vit_forward.14} parent=0 // loop_footer
    %s14 = sadd.s32 1, %s10
  $region7: #{mme_vit_forward.14} parent=0 // loop_footer_branch
    %9 = sbr.rel target = $region3
  $region8: #{mme_vit_forward.14} parent=0 // loop_exit
    _

// kernel: mme_vit_forward.16
$region0: #{mme_vit_forward.16}
  #allocation0 [shape = 'u32[]', space=smem, size = 0x4, offset = 0x4, fixed_abs, tag = 'smem constant byte address 0x4 - core index']
  #allocation1 [shape = 'u32[144,128]{1,0:T(1,128)}', space=vmem, size = 0x12000, scoped, tag = 'internal scratch']
  #allocation2 [shape = 'bf16[16,128]{1,0:T(16,128)(2,1)}', space=vmem, size = 0x1000, scoped, tag = 'scratch operand']
  %s0 = inlined_call_operand.vmem [shape: bf16[16,128], index: 0, kind: input, shape index: {}]
  %s1 = inlined_call_operand.vmem [shape: f32[1,128], index: 1, kind: input, shape index: {}]
  %s2 = inlined_call_operand.vmem [shape: f32[1,128], index: 2, kind: input, shape index: {}]
  %s3 = inlined_call_operand.vmem [shape: bf16[128,512], index: 3, kind: input, shape index: {}]
  %s4 = inlined_call_operand.vmem [shape: f32[1,512], index: 4, kind: input, shape index: {}]
  %s5 = inlined_call_operand.vmem [shape: bf16[16,512], index: 5, kind: output, shape index: {}]
  %s6 = sld [smem:[#allocation0]]
  $region129: #{mme_vit_forward.16} parent=0
    _
  %s8 = ssub.s32 1, %s6
  %s9 = scalar_select 0, %s8, %s6
  $region1: #{mme_vit_forward.16} parent=0
    #allocation3 [shape = 'u8[131072]{0}', space=vmem, size = 0x20000, scoped, tag = 'input window, operand 3']
    #allocation4 [shape = 'u8[16384]{0}', space=vmem, size = 0x4000, scoped, tag = 'output window, operand 0']
    loop: start=0, step=1, limit=4
    $region2: #{mme_vit_forward.16} parent=1 // loop_pre_header
      _
    $region3: #{mme_vit_forward.16} parent=1 // loop_header
      %s11 = sphi 0, %s15
      %p12 = scmp.ge.s32.totalorder %s11, 4
      %s18 = sphi 0, %s30
      %s19 = sphi 0, %s26
      %s20 = sphi 0, %s18
      %s21 = sphi 0, %s19
      %s22 = sphi 0, %s20
      %s23 = sphi 0, %s21
      %s33 = sphi 0, %s35
      %s36 = sphi 0, %s33
      %s37 = sphi 0, %s36
      %s53 = sphi 0, %s37
      %s57 = sphi 0, %s57
      %s59 = sphi 0, %s57
      %s60 = sphi 0, %s59
      %s74 = sphi 0, %s60
      %s78 = sphi 0, %s78
      %s80 = sphi 0, %s78
      %s81 = sphi 0, %s80
      %s95 = sphi 0, %s81
      %s101 = sphi 0, %s103
      %s104 = sphi 0, %s101
      %s105 = sphi 0, %s104
      %s121 = sphi 0, %s105
      %s127 = sphi 0, %s129
      %s130 = sphi 0, %s127
      %s131 = sphi 0, %s130
      %s147 = sphi 0, %s131
      %s155 = sphi 0, %s157
      %s158 = sphi 0, %s155
      %s159 = sphi 0, %s158
      %s175 = sphi 0, %s159
    $region4: #{mme_vit_forward.16} parent=1 // loop_header_branch
      %14 = sbr.rel (%p12) target = $region8
    $region5: #{mme_vit_forward.16} parent=1 // loop_body
      %s16 = ssub.s32 %s11, 1
      %s17 = ssub.s32 %s11, 2
      %s24 = sadd.s32 1, %s19
      %p25 = scmp.ge.s32.totalorder %s24, 2
      %s26 = scalar_select %p25, 0, %s24
      %s27 = sadd.s32 1, %s18
      %s28 = scalar_select %p25, %s27, %s18
      %p29 = scmp.ge.s32.totalorder %s28, 1
      %s30 = scalar_select %p29, 0, %s28
      %s31 = ssub.s32 %s18, %s30
      %p32 = scmp.eq.s32.totalorder %s31, 0
      %s34 = sadd.s32 %s33, 1
      %s35 = scalar_select %p32, %s33, %s34
      %p38 = pneg %p32
      %p39 = scmp.eq.s32.totalorder %s11, 1
      %p40 = por %p38, %p39
      %p41 = scmp.ne.s32.totalorder %s33, %s36
      %p42 = scmp.eq.s32.totalorder %s11, 0
      %p43 = por %p41, %p42
      %p44 = scmp.ne.s32.totalorder %s33, %s36
      %p45 = scmp.eq.s32.totalorder %s16, 1
      %p46 = por %p44, %p45
      %p47 = scmp.ne.s32.totalorder %s36, %s37
      %p48 = scmp.eq.s32.totalorder %s16, 0
      %p49 = por %p47, %p48
      %p50 = scmp.ne.s32.totalorder %s36, %s37
      %p51 = scmp.eq.s32.totalorder %s17, 1
      %p52 = por %p50, %p51
      %p54 = scmp.ne.s32.totalorder %s37, %s53
      %p55 = scmp.eq.s32.totalorder %s17, 0
      %p56 = por %p54, %p55
      %s58 = sadd.s32 %s57, 1
      %p61 = scmp.eq.s32.totalorder %s11, 1
      %p62 = scmp.ne.s32.totalorder %s57, %s59
      %p63 = scmp.eq.s32.totalorder %s11, 0
      %p64 = por %p62, %p63
      %p65 = scmp.ne.s32.totalorder %s57, %s59
      %p66 = scmp.eq.s32.totalorder %s16, 1
      %p67 = por %p65, %p66
      %p68 = scmp.ne.s32.totalorder %s59, %s60
      %p69 = scmp.eq.s32.totalorder %s16, 0
      %p70 = por %p68, %p69
      %p71 = scmp.ne.s32.totalorder %s59, %s60
      %p72 = scmp.eq.s32.totalorder %s17, 1
      %p73 = por %p71, %p72
      %p75 = scmp.ne.s32.totalorder %s60, %s74
      %p76 = scmp.eq.s32.totalorder %s17, 0
      %p77 = por %p75, %p76
      %s79 = sadd.s32 %s78, 1
      %p82 = scmp.eq.s32.totalorder %s11, 1
      %p83 = scmp.ne.s32.totalorder %s78, %s80
      %p84 = scmp.eq.s32.totalorder %s11, 0
      %p85 = por %p83, %p84
      %p86 = scmp.ne.s32.totalorder %s78, %s80
      %p87 = scmp.eq.s32.totalorder %s16, 1
      %p88 = por %p86, %p87
      %p89 = scmp.ne.s32.totalorder %s80, %s81
      %p90 = scmp.eq.s32.totalorder %s16, 0
      %p91 = por %p89, %p90
      %p92 = scmp.ne.s32.totalorder %s80, %s81
      %p93 = scmp.eq.s32.totalorder %s17, 1
      %p94 = por %p92, %p93
      %p96 = scmp.ne.s32.totalorder %s81, %s95
      %p97 = scmp.eq.s32.totalorder %s17, 0
      %p98 = por %p96, %p97
      %s99 = ssub.s32 %s19, %s26
      %p100 = scmp.eq.s32.totalorder %s99, 0
      %s102 = sadd.s32 %s101, 1
      %s103 = scalar_select %p100, %s101, %s102
      %p106 = pneg %p100
      %p107 = scmp.eq.s32.totalorder %s11, 1
      %p108 = por %p106, %p107
      %p109 = scmp.ne.s32.totalorder %s101, %s104
      %p110 = scmp.eq.s32.totalorder %s11, 0
      %p111 = por %p109, %p110
      %p112 = scmp.ne.s32.totalorder %s101, %s104
      %p113 = scmp.eq.s32.totalorder %s16, 1
      %p114 = por %p112, %p113
      %p115 = scmp.ne.s32.totalorder %s104, %s105
      %p116 = scmp.eq.s32.totalorder %s16, 0
      %p117 = por %p115, %p116
      %p118 = scmp.ne.s32.totalorder %s104, %s105
      %p119 = scmp.eq.s32.totalorder %s17, 1
      %p120 = por %p118, %p119
      %p122 = scmp.ne.s32.totalorder %s105, %s121
      %p123 = scmp.eq.s32.totalorder %s17, 0
      %p124 = por %p122, %p123
      %s125 = ssub.s32 %s19, %s26
      %p126 = scmp.eq.s32.totalorder %s125, 0
      %s128 = sadd.s32 %s127, 1
      %s129 = scalar_select %p126, %s127, %s128
      %p132 = pneg %p126
      %p133 = scmp.eq.s32.totalorder %s11, 1
      %p134 = por %p132, %p133
      %p135 = scmp.ne.s32.totalorder %s127, %s130
      %p136 = scmp.eq.s32.totalorder %s11, 0
      %p137 = por %p135, %p136
      %p138 = scmp.ne.s32.totalorder %s127, %s130
      %p139 = scmp.eq.s32.totalorder %s16, 1
      %p140 = por %p138, %p139
      %p141 = scmp.ne.s32.totalorder %s130, %s131
      %p142 = scmp.eq.s32.totalorder %s16, 0
      %p143 = por %p141, %p142
      %p144 = scmp.ne.s32.totalorder %s130, %s131
      %p145 = scmp.eq.s32.totalorder %s17, 1
      %p146 = por %p144, %p145
      %p148 = scmp.ne.s32.totalorder %s131, %s147
      %p149 = scmp.eq.s32.totalorder %s17, 0
      %p150 = por %p148, %p149
      %s151 = ssub.s32 %s18, %s30
      %s152 = ssub.s32 %s19, %s26
      %s153 = sor.u32 %s151, %s152
      %p154 = scmp.eq.s32.totalorder %s153, 0
      %s156 = sadd.s32 %s155, 1
      %s157 = scalar_select %p154, %s155, %s156
      %p160 = pneg %p154
      %p161 = scmp.eq.s32.totalorder %s11, 1
      %p162 = por %p160, %p161
      %p163 = scmp.ne.s32.totalorder %s155, %s158
      %p164 = scmp.eq.s32.totalorder %s11, 0
      %p165 = por %p163, %p164
      %p166 = scmp.ne.s32.totalorder %s155, %s158
      %p167 = scmp.eq.s32.totalorder %s16, 1
      %p168 = por %p166, %p167
      %p169 = scmp.ne.s32.totalorder %s158, %s159
      %p170 = scmp.eq.s32.totalorder %s16, 0
      %p171 = por %p169, %p170
      %p172 = scmp.ne.s32.totalorder %s158, %s159
      %p173 = scmp.eq.s32.totalorder %s17, 1
      %p174 = por %p172, %p173
      %p176 = scmp.ne.s32.totalorder %s159, %s175
      %p177 = scmp.eq.s32.totalorder %s17, 0
      %p178 = por %p176, %p177
      %p179 = scmp.le.s32.totalorder 1, %s11
      %p180 = scmp.lt.s32.totalorder %s11, 3
      %p181 = pnand %p179, %p180
      %p182 = pneg %p181
      // Predicated region
      $region9: #{mme_vit_forward.16} parent=5 // pred_check
        _
      $region10: #{mme_vit_forward.16} parent=5 // pred_check_branch
        %184 = sbr.rel (%p181) target = $region12
      $region11: #{mme_vit_forward.16} parent=5 // pred_region
        %s185 = ssub.s32 %s11, 1
        // Predicated region
        $region13: #{mme_vit_forward.16} parent=11 // pred_check
          %p186 = pneg %p49
        $region14: #{mme_vit_forward.16} parent=11 // pred_check_branch
          %188 = sbr.rel (%p186) target = $region16
        $region15: #{mme_vit_forward.16} parent=11 // pred_region
          %s189 = smul.u32 2, %s20
          %p190 = scmp.lt.s32.totalorder %s189, 1
          %s191 = scalar_select %p190, %s189, 1
          %s192 = smul.addr %s191, 4
          %s193 = scalar_lea.vmem %s0, %s192
          %s194 = smul.u32 2, %s20
        $region16: #{mme_vit_forward.16} parent=11 // pred_fallthru
          _
        // Predicated region
        $region17: #{mme_vit_forward.16} parent=11 // pred_check
          %p195 = pneg %p70
        $region18: #{mme_vit_forward.16} parent=11 // pred_check_branch
          %197 = sbr.rel (%p195) target = $region20
        $region19: #{mme_vit_forward.16} parent=11 // pred_region
          _
        $region20: #{mme_vit_forward.16} parent=11 // pred_fallthru
          _
        // Predicated region
        $region21: #{mme_vit_forward.16} parent=11 // pred_check
          %p198 = pneg %p91
        $region22: #{mme_vit_forward.16} parent=11 // pred_check_branch
          %200 = sbr.rel (%p198) target = $region24
        $region23: #{mme_vit_forward.16} parent=11 // pred_region
          _
        $region24: #{mme_vit_forward.16} parent=11 // pred_fallthru
          _
      $region12: #{mme_vit_forward.16} parent=5 // pred_fallthru
        _
      %p201 = scmp.lt.s32.totalorder %s11, 2
      // Predicated region
      $region25: #{mme_vit_forward.16} parent=5 // pred_check
        %p202 = pneg %p201
      $region26: #{mme_vit_forward.16} parent=5 // pred_check_branch
        %204 = sbr.rel (%p202) target = $region28
      $region27: #{mme_vit_forward.16} parent=5 // pred_region
        // Predicated region
        $region29: #{mme_vit_forward.16} parent=27 // pred_check
          %p205 = pneg %p111
        $region30: #{mme_vit_forward.16} parent=27 // pred_check_branch
          %207 = sbr.rel (%p205) target = $region32
        $region31: #{mme_vit_forward.16} parent=27 // pred_region
          %s208 = sand.u32 %s101, 1
          %s209 = sand.u32 %s101, 1
          %s210 = smul.addr %s209, 128
          %s211 = scalar_lea.vmem [#allocation3], %s210
          %s212 = smul.u32 2, %s19
          %s213 = smul.addr %s212, 4
          %s214 = scalar_lea.vmem %s3, %s213
          // Predicated region
          $region33: #{mme_vit_forward.16} parent=31 // pred_check
            _
          $region34: #{mme_vit_forward.16} parent=31 // pred_check_branch
            %216 = sbr.rel (0) target = $region36
          $region35: #{mme_vit_forward.16} parent=31 // pred_region
            // Predicated region
            $region37: #{mme_vit_forward.16} parent=35 // pred_check
              _
            $region38: #{mme_vit_forward.16} parent=35 // pred_check_branch
              %218 = sbr.rel (0) target = $region40
            $region39: #{mme_vit_forward.16} parent=35 // pred_region
              // Predicated region
              $region52: #{mme_vit_forward.16} parent=39 // pred_check
                _
              $region53: #{mme_vit_forward.16} parent=39 // pred_check_branch
                %263 = sbr.rel (0) target = $region55
              $region54: #{mme_vit_forward.16} parent=39 // pred_region
                loop: start=0, step=1, limit=1
                $region56: #{mme_vit_forward.16} parent=54 // loop_pre_header
                  _
                $region57: #{mme_vit_forward.16} parent=54 // loop_header
                  %s265 = sphi 0, %s269
                  %p266 = scmp.ge.s32.totalorder %s265, 1
                  %s270 = sphi %s214, %s214
                  %s271 = sphi %s211, %s211
                $region58: #{mme_vit_forward.16} parent=54 // loop_header_branch
                  %268 = sbr.rel (%p266) target = $region62
                $region59: #{mme_vit_forward.16} parent=54 // loop_body
                  %v272 = vld [vmem:[%s270] sm:$0xff]
                  %273 = vst [vmem:[%s271] sm:$0xff] %v272
                  %v274 = vld [vmem:[%s270 + $0x10] sm:$0xff]
                  %275 = vst [vmem:[%s271 + $0x8] sm:$0xff] %v274
                  %v276 = vld [vmem:[%s270 + $0x20] sm:$0xff]
                  %277 = vst [vmem:[%s271 + $0x10] sm:$0xff] %v276
                  %v278 = vld [vmem:[%s270 + $0x30] sm:$0xff]
                  %279 = vst [vmem:[%s271 + $0x18] sm:$0xff] %v278
                  %v280 = vld [vmem:[%s270 + $0x40] sm:$0xff]
                  %281 = vst [vmem:[%s271 + $0x20] sm:$0xff] %v280
                  %v282 = vld [vmem:[%s270 + $0x50] sm:$0xff]
                  %283 = vst [vmem:[%s271 + $0x28] sm:$0xff] %v282
                  %v284 = vld [vmem:[%s270 + $0x60] sm:$0xff]
                  %285 = vst [vmem:[%s271 + $0x30] sm:$0xff] %v284
                  %v286 = vld [vmem:[%s270 + $0x70] sm:$0xff]
                  %287 = vst [vmem:[%s271 + $0x38] sm:$0xff] %v286
                  %v288 = vld [vmem:[%s270 + $0x80] sm:$0xff]
                  %289 = vst [vmem:[%s271 + $0x40] sm:$0xff] %v288
                  %v290 = vld [vmem:[%s270 + $0x90] sm:$0xff]
                  %291 = vst [vmem:[%s271 + $0x48] sm:$0xff] %v290
                  %v292 = vld [vmem:[%s270 + $0xa0] sm:$0xff]
                  %293 = vst [vmem:[%s271 + $0x50] sm:$0xff] %v292
                  %v294 = vld [vmem:[%s270 + $0xb0] sm:$0xff]
                  %295 = vst [vmem:[%s271 + $0x58] sm:$0xff] %v294
                  %v296 = vld [vmem:[%s270 + $0xc0] sm:$0xff]
                  %297 = vst [vmem:[%s271 + $0x60] sm:$0xff] %v296
                  %v298 = vld [vmem:[%s270 + $0xd0] sm:$0xff]
                  %299 = vst [vmem:[%s271 + $0x68] sm:$0xff] %v298
                  %v300 = vld [vmem:[%s270 + $0xe0] sm:$0xff]
                  %301 = vst [vmem:[%s271 + $0x70] sm:$0xff] %v300
                  %v302 = vld [vmem:[%s270 + $0xf0] sm:$0xff]
                  %303 = vst [vmem:[%s271 + $0x78] sm:$0xff] %v302
                $region60: #{mme_vit_forward.16} parent=54 // loop_footer
                  %s269 = sadd.s32 1, %s265
                $region61: #{mme_vit_forward.16} parent=54 // loop_footer_branch
                  %264 = sbr.rel target = $region57
                $region62: #{mme_vit_forward.16} parent=54 // loop_exit
                  _
              $region55: #{mme_vit_forward.16} parent=39 // pred_fallthru
                _
              // Predicated region
              $region63: #{mme_vit_forward.16} parent=39 // pred_check
                _
              $region64: #{mme_vit_forward.16} parent=39 // pred_check_branch
                %305 = sbr.rel target = $region66
              $region65: #{mme_vit_forward.16} parent=39 // pred_region
                _
              $region66: #{mme_vit_forward.16} parent=39 // pred_fallthru
                _
            $region40: #{mme_vit_forward.16} parent=35 // pred_fallthru
              _
            // Predicated region
            $region41: #{mme_vit_forward.16} parent=35 // pred_check
              _
            $region42: #{mme_vit_forward.16} parent=35 // pred_check_branch
              %220 = sbr.rel target = $region44
            $region43: #{mme_vit_forward.16} parent=35 // pred_region
              loop: start=0, step=1, limit=1
              $region45: #{mme_vit_forward.16} parent=43 // loop_pre_header
                _
              $region46: #{mme_vit_forward.16} parent=43 // loop_header
                %s223 = sphi 0, %s227
                %p224 = scmp.ge.s32.totalorder %s223, 1
                %s228 = sphi %s214, %s214
                %s229 = sphi %s211, %s211
              $region47: #{mme_vit_forward.16} parent=43 // loop_header_branch
                %226 = sbr.rel (%p224) target = $region51
              $region48: #{mme_vit_forward.16} parent=43 // loop_body
                %v230 = vld [vmem:[%s228] sm:$0xff]
                %231 = vst [vmem:[%s229] sm:$0xff] %v230
                %v232 = vld [vmem:[%s228 + $0x10] sm:$0xff]
                %233 = vst [vmem:[%s229 + $0x8] sm:$0xff] %v232
                %v234 = vld [vmem:[%s228 + $0x20] sm:$0xff]
                %235 = vst [vmem:[%s229 + $0x10] sm:$0xff] %v234
                %v236 = vld [vmem:[%s228 + $0x30] sm:$0xff]
                %237 = vst [vmem:[%s229 + $0x18] sm:$0xff] %v236
                %v238 = vld [vmem:[%s228 + $0x40] sm:$0xff]
                %239 = vst [vmem:[%s229 + $0x20] sm:$0xff] %v238
                %v240 = vld [vmem:[%s228 + $0x50] sm:$0xff]
                %241 = vst [vmem:[%s229 + $0x28] sm:$0xff] %v240
                %v242 = vld [vmem:[%s228 + $0x60] sm:$0xff]
                %243 = vst [vmem:[%s229 + $0x30] sm:$0xff] %v242
                %v244 = vld [vmem:[%s228 + $0x70] sm:$0xff]
                %245 = vst [vmem:[%s229 + $0x38] sm:$0xff] %v244
                %v246 = vld [vmem:[%s228 + $0x80] sm:$0xff]
                %247 = vst [vmem:[%s229 + $0x40] sm:$0xff] %v246
                %v248 = vld [vmem:[%s228 + $0x90] sm:$0xff]
                %249 = vst [vmem:[%s229 + $0x48] sm:$0xff] %v248
                %v250 = vld [vmem:[%s228 + $0xa0] sm:$0xff]
                %251 = vst [vmem:[%s229 + $0x50] sm:$0xff] %v250
                %v252 = vld [vmem:[%s228 + $0xb0] sm:$0xff]
                %253 = vst [vmem:[%s229 + $0x58] sm:$0xff] %v252
                %v254 = vld [vmem:[%s228 + $0xc0] sm:$0xff]
                %255 = vst [vmem:[%s229 + $0x60] sm:$0xff] %v254
                %v256 = vld [vmem:[%s228 + $0xd0] sm:$0xff]
                %257 = vst [vmem:[%s229 + $0x68] sm:$0xff] %v256
                %v258 = vld [vmem:[%s228 + $0xe0] sm:$0xff]
                %259 = vst [vmem:[%s229 + $0x70] sm:$0xff] %v258
                %v260 = vld [vmem:[%s228 + $0xf0] sm:$0xff]
                %261 = vst [vmem:[%s229 + $0x78] sm:$0xff] %v260
              $region49: #{mme_vit_forward.16} parent=43 // loop_footer
                %s227 = sadd.s32 1, %s223
              $region50: #{mme_vit_forward.16} parent=43 // loop_footer_branch
                %222 = sbr.rel target = $region46
              $region51: #{mme_vit_forward.16} parent=43 // loop_exit
                _
            $region44: #{mme_vit_forward.16} parent=35 // pred_fallthru
              _
          $region36: #{mme_vit_forward.16} parent=31 // pred_fallthru
            _
          %306 = vnop
        $region32: #{mme_vit_forward.16} parent=27 // pred_fallthru
          _
        // Predicated region
        $region67: #{mme_vit_forward.16} parent=27 // pred_check
          %p307 = pneg %p137
        $region68: #{mme_vit_forward.16} parent=27 // pred_check_branch
          %309 = sbr.rel (%p307) target = $region70
        $region69: #{mme_vit_forward.16} parent=27 // pred_region
          %s310 = smul.u32 2, %s19
          %p311 = scmp.lt.s32.totalorder %s310, 3
          %s312 = scalar_select %p311, %s310, 3
          %s313 = scalar_lea.vmem %s4, %s312
          %s314 = smul.u32 2, %s19
        $region70: #{mme_vit_forward.16} parent=27 // pred_fallthru
          _
      $region28: #{mme_vit_forward.16} parent=5 // pred_fallthru
        _
      %p315 = scmp.le.s32.totalorder 1, %s11
      %p316 = scmp.lt.s32.totalorder %s11, 3
      %p317 = pnand %p315, %p316
      %p318 = pneg %p317
      // Predicated region
      $region71: #{mme_vit_forward.16} parent=5 // pred_check
        _
      $region72: #{mme_vit_forward.16} parent=5 // pred_check_branch
        %320 = sbr.rel (%p317) target = $region74
      $region73: #{mme_vit_forward.16} parent=5 // pred_region
        %s321 = ssub.s32 %s11, 1
        %s322 = sand.u32 %s104, 1
        %s323 = sand.u32 %s104, 1
        %s324 = smul.addr %s323, 128
        %s325 = scalar_lea.vmem [#allocation3], %s324
        // Predicated region
        $region75: #{mme_vit_forward.16} parent=73 // pred_check
          %p326 = pneg %p117
        $region76: #{mme_vit_forward.16} parent=73 // pred_check_branch
          %328 = sbr.rel (%p326) target = $region78
        $region77: #{mme_vit_forward.16} parent=73 // pred_region
          _
        $region78: #{mme_vit_forward.16} parent=73 // pred_fallthru
          _
        %s329 = smul.u32 2, %s20
        %p330 = scmp.lt.s32.totalorder %s329, 1
        %s331 = scalar_select %p330, %s329, 1
        %s332 = smul.addr %s331, 4
        %s333 = scalar_lea.vmem %s0, %s332
        %p334 = pneg %p49
        %p335 = pneg %p46
        %p336 = pneg %p70
        %p337 = pneg %p67
        %p338 = pneg %p91
        %p339 = pneg %p88
        %s340 = sand.u32 %s104, 1
        %s341 = sand.u32 %s104, 1
        %s342 = smul.addr %s341, 128
        %s343 = scalar_lea.vmem [#allocation3], %s342
        %p344 = pneg %p117
        %p345 = pneg %p114
        %s346 = smul.u32 2, %s21
        %p347 = scmp.lt.s32.totalorder %s346, 3
        %s348 = scalar_select %p347, %s346, 3
        %s349 = scalar_lea.vmem %s4, %s348
        %p350 = pneg %p143
        %p351 = pneg %p140
        %p352 = pneg %p171
        %p353 = pneg %p168
        %s354 = sand.u32 %s158, 1
        %s355 = sand.u32 %s158, 1
        %s356 = smul.addr %s355, 16
        %s357 = scalar_lea.vmem [#allocation4], %s356
        %s358 = smul.u32 2, %s20
        %p359 = scmp.lt.s32.totalorder %s358, 1
        %s360 = scalar_select %p359, %s358, 1
        %s361 = smul.addr %s360, 4
        %s362 = scalar_lea.vmem %s0, %s361
        %s363 = smul.u32 2, %s20
        %s364 = smul.u32 2, %s21
        %s365 = smul.u32 2, %s21
        %p366 = scmp.lt.s32.totalorder %s365, 3
        %s367 = scalar_select %p366, %s365, 3
        %s368 = scalar_lea.vmem %s4, %s367
        %s369 = smul.u32 2, %s21
        %s370 = smul.u32 2, %s20
        %s371 = smul.u32 2, %s21
        %p373 = scmp.eq.s32.totalorder %s21, 0
        // Predicated region
        $region79: #{mme_vit_forward.16} parent=73 // pred_check
          %p374 = pneg %p373
        $region80: #{mme_vit_forward.16} parent=73 // pred_check_branch
          %376 = sbr.rel (%p374) target = $region82
        $region81: #{mme_vit_forward.16} parent=73 // pred_region
          %v377 = vld [vmem:[%s362] sm:$0xf]
          %v378 = vld [vmem:[%s362 + $0x4] sm:$0xf]
          %v379 = vunpack.c.l.bf16 %v377
          %v380 = vunpack.c.l.bf16 %v378
          %381 = vadd.xlane.f32.xlu0 %v379
          %v382 = vpop.xlane.xlu0 %381
          %383 = vadd.xlane.f32.xlu0 %v380
          %v384 = vpop.xlane.xlu0 %383
          %v385 = vrcp.pop 128.0
          %v386 = vmul.f32 %v382, %v385
          %v387 = vmul.f32 %v384, %v385
          %v388 = vsub.f32 %v379, %v386
          %v389 = vsub.f32 %v380, %v387
          %v390 = vmul.f32 %v388, %v388
          %v391 = vmul.f32 %v389, %v389
          %392 = vadd.xlane.f32.xlu0 %v390
          %v393 = vpop.xlane.xlu0 %392
          %394 = vadd.xlane.f32.xlu0 %v391
          %v395 = vpop.xlane.xlu0 %394
          %v396 = vmul.f32 %v393, %v385
          %v397 = vmul.f32 %v395, %v385
          %v398 = vadd.f32 %v396, 1e-06
          %v399 = vadd.f32 %v397, 1e-06
          %v400 = vrsqrt.pop %v398
          %v401 = vrsqrt.pop %v399
          %v402 = vmul.f32 %v388, %v400
          %v403 = vmul.f32 %v389, %v401
          %v404 = vld [vmem:[%s1] sm:$0x1]
          %v406 = vlaneseq
          %v407 = vshrl.u32 %v406, 7
          %v408 = vsub.s32 0, %v407
          %v409 = vrot.slane %v404, %v408
          %v411 = vmul.f32 %v402, %v409
          %v412 = vmul.f32 %v403, %v409
          %v413 = vld [vmem:[%s2] sm:$0x1]
          %v415 = vlaneseq
          %v416 = vshrl.u32 %v415, 7
          %v417 = vsub.s32 0, %v416
          %v418 = vrot.slane %v413, %v417
          %v420 = vadd.f32 %v411, %v418
          %v421 = vadd.f32 %v412, %v418
          %v422 = vpack.c.bf16 %v421, %v420
          %423 = vst [vmem:[#allocation2] sm:$0xff] %v422
        $region82: #{mme_vit_forward.16} parent=73 // pred_fallthru
          _
        %v424 = vld [vmem:[#allocation2] sm:$0xff]
        %v425 = vld [vmem:[%s325] sm:$0xff]
        %v426 = vld [vmem:[%s325 + $0x8] sm:$0xff]
        %v427 = vld [vmem:[%s325 + $0x10] sm:$0xff]
        %v428 = vld [vmem:[%s325 + $0x18] sm:$0xff]
        %v429 = vld [vmem:[%s325 + $0x20] sm:$0xff]
        %v430 = vld [vmem:[%s325 + $0x28] sm:$0xff]
        %v431 = vld [vmem:[%s325 + $0x30] sm:$0xff]
        %v432 = vld [vmem:[%s325 + $0x38] sm:$0xff]
        %v433 = vld [vmem:[%s325 + $0x40] sm:$0xff]
        %v434 = vld [vmem:[%s325 + $0x48] sm:$0xff]
        %v435 = vld [vmem:[%s325 + $0x50] sm:$0xff]
        %v436 = vld [vmem:[%s325 + $0x58] sm:$0xff]
        %v437 = vld [vmem:[%s325 + $0x60] sm:$0xff]
        %v438 = vld [vmem:[%s325 + $0x68] sm:$0xff]
        %v439 = vld [vmem:[%s325 + $0x70] sm:$0xff]
        %v440 = vld [vmem:[%s325 + $0x78] sm:$0xff]
        %v441 = vld [vmem:[%s368] sm:$0x3]
        %v443 = vlaneseq
        %v444 = vshrl.u32 %v443, 7
        %v445 = vsub.s32 0, %v444
        %v446 = vrot.slane %v441, %v445
        %v447 = vlaneseq
        %v448 = vshrl.u32 %v447, 7
        %v449 = vsub.s32 1, %v448
        %v450 = vrot.slane %v441, %v449
        %v469 = vunpack.c.l.b16 %v425
        %v470 = vunpack.c.h.b16 %v425
        %v471 = vunpack.c.l.b16 %v426
        %v472 = vunpack.c.h.b16 %v426
        %v473 = vunpack.c.l.b16 %v427
        %v474 = vunpack.c.h.b16 %v427
        %v475 = vunpack.c.l.b16 %v428
        %v476 = vunpack.c.h.b16 %v428
        %v477 = vunpack.c.l.b16 %v429
        %v478 = vunpack.c.h.b16 %v429
        %v479 = vunpack.c.l.b16 %v430
        %v480 = vunpack.c.h.b16 %v430
        %v481 = vunpack.c.l.b16 %v431
        %v482 = vunpack.c.h.b16 %v431
        %v483 = vunpack.c.l.b16 %v432
        %v484 = vunpack.c.h.b16 %v432
        %v485 = vunpack.c.l.b16 %v433
        %v486 = vunpack.c.h.b16 %v433
        %v487 = vunpack.c.l.b16 %v434
        %v488 = vunpack.c.h.b16 %v434
        %v489 = vunpack.c.l.b16 %v435
        %v490 = vunpack.c.h.b16 %v435
        %v491 = vunpack.c.l.b16 %v436
        %v492 = vunpack.c.h.b16 %v436
        %v493 = vunpack.c.l.b16 %v437
        %v494 = vunpack.c.h.b16 %v437
        %v495 = vunpack.c.l.b16 %v438
        %v496 = vunpack.c.h.b16 %v438
        %v497 = vunpack.c.l.b16 %v439
        %v498 = vunpack.c.h.b16 %v439
        %v499 = vunpack.c.l.b16 %v440
        %v500 = vunpack.c.h.b16 %v440
        %v501 = vpack.c.b16 %v471, %v469
        %v502 = vpack.c.b16 %v472, %v470
        %v503 = vpack.c.b16 %v475, %v473
        %v504 = vpack.c.b16 %v476, %v474
        %v505 = vpack.c.b16 %v479, %v477
        %v506 = vpack.c.b16 %v480, %v478
        %v507 = vpack.c.b16 %v483, %v481
        %v508 = vpack.c.b16 %v484, %v482
        %v509 = vpack.c.b16 %v487, %v485
        %v510 = vpack.c.b16 %v488, %v486
        %v511 = vpack.c.b16 %v491, %v489
        %v512 = vpack.c.b16 %v492, %v490
        %v513 = vpack.c.b16 %v495, %v493
        %v514 = vpack.c.b16 %v496, %v494
        %v515 = vpack.c.b16 %v499, %v497
        %v516 = vpack.c.b16 %v500, %v498
        %533 = vmatprep.subr.bf16.mxu0 %v502
        %534 = vmatpush1.bf16.msra.mxu0 %v501
        %535 = vmatprep.subr.bf16.mxu0 %v504
        %536 = vmatpush1.bf16.msra.mxu0 %v503
        %537 = vmatprep.subr.bf16.mxu0 %v506
        %538 = vmatpush1.bf16.msra.mxu0 %v505
        %539 = vmatprep.subr.bf16.mxu0 %v508
        %540 = vmatpush1.bf16.msra.mxu0 %v507
        %541 = vmatprep.subr.bf16.mxu0 %v510
        %542 = vmatpush1.bf16.msra.mxu0 %v509
        %543 = vmatprep.subr.bf16.mxu0 %v512
        %544 = vmatpush1.bf16.msra.mxu0 %v511
        %545 = vmatprep.subr.bf16.mxu0 %v514
        %546 = vmatpush1.bf16.msra.mxu0 %v513
        %547 = vmatprep.subr.bf16.mxu0 %v516
        %548 = vmatpush1.bf16.msra.mxu0 %v515
        %549 = vmatprep.subr.bf16.mxu0 0
        %550 = vmatpush1.bf16.msra.mxu0 0
        %551 = vmatprep.subr.bf16.mxu0 0
        %552 = vmatpush1.bf16.msra.mxu0 0
        %553 = vmatprep.subr.bf16.mxu0 0
        %554 = vmatpush1.bf16.msra.mxu0 0
        %555 = vmatprep.subr.bf16.mxu0 0
        %556 = vmatpush1.bf16.msra.mxu0 0
        %557 = vmatprep.subr.bf16.mxu0 0
        %558 = vmatpush1.bf16.msra.mxu0 0
        %559 = vmatprep.subr.bf16.mxu0 0
        %560 = vmatpush1.bf16.msra.mxu0 0
        %561 = vmatprep.subr.bf16.mxu0 0
        %562 = vmatpush1.bf16.msra.mxu0 0
        %563 = vmatprep.subr.bf16.mxu0 0
        %564 = vmatpush1.bf16.msra.mxu0 0
        %565 = vmatprep.mubr.bf16.mxu0 0
        %566 = vmatmul.mubr.bf16.gmra.mrb[0].mxu0 %v424
        %v567 = vpop.f32.mrb[0].mxu0
        %v568 = vadd.f32 %v446, %v567
        %v569 = vpop.f32.mrb[0].mxu0
        %v570 = vadd.f32 %v450, %v569
        %v571 = vpop.f32.mrb[0].mxu0
        %v572 = vadd.f32 %v446, %v571
        %v573 = vpop.f32.mrb[0].mxu0
        %v574 = vadd.f32 %v450, %v573
        %575 = vdwg.mxu0
        %v576 = vmul.f32 %v568, 0.5
        %v577 = vmul.f32 %v570, 0.5
        %v578 = vmul.f32 %v572, 0.5
        %v579 = vmul.f32 %v574, 0.5
        %v580 = vmul.f32 %v568, %v568
        %v581 = vmul.f32 %v570, %v570
        %v582 = vmul.f32 %v572, %v572
        %v583 = vmul.f32 %v574, %v574
        %v584 = vmul.f32 %v580, %v568
        %v585 = vmul.f32 %v581, %v570
        %v586 = vmul.f32 %v582, %v572
        %v587 = vmul.f32 %v583, %v574
        %v588 = vmul.f32 %v584, 0.044715
        %v589 = vmul.f32 %v585, 0.044715
        %v590 = vmul.f32 %v586, 0.044715
        %v591 = vmul.f32 %v587, 0.044715
        %v592 = vadd.f32 %v568, %v588
        %v593 = vadd.f32 %v570, %v589
        %v594 = vadd.f32 %v572, %v590
        %v595 = vadd.f32 %v574, %v591
        %v596 = vmul.f32 %v592, 0.7978846
        %v597 = vmul.f32 %v593, 0.7978846
        %v598 = vmul.f32 %v594, 0.7978846
        %v599 = vmul.f32 %v595, 0.7978846
        %v600 = vtanh.pop %v596
        %v601 = vtanh.pop %v597
        %v602 = vtanh.pop %v598
        %v603 = vtanh.pop %v599
        %v604 = vadd.f32 %v600, 1.0
        %v605 = vadd.f32 %v601, 1.0
        %v606 = vadd.f32 %v602, 1.0
        %v607 = vadd.f32 %v603, 1.0
        %v608 = vmul.f32 %v576, %v604
        %v609 = vmul.f32 %v577, %v605
        %v610 = vmul.f32 %v578, %v606
        %v611 = vmul.f32 %v579, %v607
        %v612 = vpack.c.bf16 %v610, %v608
        %v613 = vpack.c.bf16 %v611, %v609
        %v616 = vunpack.c.l.b16 %v612
        %v617 = vunpack.c.l.b16 %v613
        %v618 = vunpack.c.h.b16 %v612
        %v619 = vunpack.c.h.b16 %v613
        %v620 = vpack.c.b16 %v617, %v616
        %v621 = vpack.c.b16 %v619, %v618
        %624 = vst [vmem:[%s357] sm:$0xff] %v620
        %625 = vst [vmem:[%s357 + $0x8] sm:$0xff] %v621
        %s626 = sand.u32 %s158, 1
        %s627 = sand.u32 %s158, 1
        %s628 = smul.addr %s627, 16
        %s629 = scalar_lea.vmem [#allocation4], %s628
        // Predicated region
        $region83: #{mme_vit_forward.16} parent=73 // pred_check
          %p630 = pneg %p168
        $region84: #{mme_vit_forward.16} parent=73 // pred_check_branch
          %632 = sbr.rel (%p630) target = $region86
        $region85: #{mme_vit_forward.16} parent=73 // pred_region
          %s633 = smul.u32 2, %s20
          %s634 = smul.u32 2, %s21
          %s635 = smul.addr %s633, 4
          %s636 = sadd.s32 %s634, %s635
          %s637 = smul.addr %s636, 4
          %s638 = scalar_lea.vmem %s5, %s637
          // Predicated region
          $region87: #{mme_vit_forward.16} parent=85 // pred_check
            _
          $region88: #{mme_vit_forward.16} parent=85 // pred_check_branch
            %640 = sbr.rel (0) target = $region90
          $region89: #{mme_vit_forward.16} parent=85 // pred_region
            // Predicated region
            $region91: #{mme_vit_forward.16} parent=89 // pred_check
              _
            $region92: #{mme_vit_forward.16} parent=89 // pred_check_branch
              %642 = sbr.rel (0) target = $region94
            $region93: #{mme_vit_forward.16} parent=89 // pred_region
              // Predicated region
              $region106: #{mme_vit_forward.16} parent=93 // pred_check
                _
              $region107: #{mme_vit_forward.16} parent=93 // pred_check_branch
                %659 = sbr.rel (0) target = $region109
              $region108: #{mme_vit_forward.16} parent=93 // pred_region
                loop: start=0, step=1, limit=1
                $region110: #{mme_vit_forward.16} parent=108 // loop_pre_header
                  _
                $region111: #{mme_vit_forward.16} parent=108 // loop_header
                  %s661 = sphi 0, %s665
                  %p662 = scmp.ge.s32.totalorder %s661, 1
                  %s666 = sphi %s629, %s629
                  %s667 = sphi %s638, %s638
                $region112: #{mme_vit_forward.16} parent=108 // loop_header_branch
                  %664 = sbr.rel (%p662) target = $region116
                $region113: #{mme_vit_forward.16} parent=108 // loop_body
                  %v668 = vld [vmem:[%s666] sm:$0xff]
                  %669 = vst [vmem:[%s667] sm:$0xff] %v668
                  %v670 = vld [vmem:[%s666 + $0x8] sm:$0xff]
                  %671 = vst [vmem:[%s667 + $0x10] sm:$0xff] %v670
                $region114: #{mme_vit_forward.16} parent=108 // loop_footer
                  %s665 = sadd.s32 1, %s661
                $region115: #{mme_vit_forward.16} parent=108 // loop_footer_branch
                  %660 = sbr.rel target = $region111
                $region116: #{mme_vit_forward.16} parent=108 // loop_exit
                  _
              $region109: #{mme_vit_forward.16} parent=93 // pred_fallthru
                _
              // Predicated region
              $region117: #{mme_vit_forward.16} parent=93 // pred_check
                _
              $region118: #{mme_vit_forward.16} parent=93 // pred_check_branch
                %673 = sbr.rel target = $region120
              $region119: #{mme_vit_forward.16} parent=93 // pred_region
                _
              $region120: #{mme_vit_forward.16} parent=93 // pred_fallthru
                _
            $region94: #{mme_vit_forward.16} parent=89 // pred_fallthru
              _
            // Predicated region
            $region95: #{mme_vit_forward.16} parent=89 // pred_check
              _
            $region96: #{mme_vit_forward.16} parent=89 // pred_check_branch
              %644 = sbr.rel target = $region98
            $region97: #{mme_vit_forward.16} parent=89 // pred_region
              loop: start=0, step=1, limit=1
              $region99: #{mme_vit_forward.16} parent=97 // loop_pre_header
                _
              $region100: #{mme_vit_forward.16} parent=97 // loop_header
                %s647 = sphi 0, %s651
                %p648 = scmp.ge.s32.totalorder %s647, 1
                %s652 = sphi %s629, %s629
                %s653 = sphi %s638, %s638
              $region101: #{mme_vit_forward.16} parent=97 // loop_header_branch
                %650 = sbr.rel (%p648) target = $region105
              $region102: #{mme_vit_forward.16} parent=97 // loop_body
                %v654 = vld [vmem:[%s652] sm:$0xff]
                %655 = vst [vmem:[%s653] sm:$0xff] %v654
                %v656 = vld [vmem:[%s652 + $0x8] sm:$0xff]
                %657 = vst [vmem:[%s653 + $0x10] sm:$0xff] %v656
              $region103: #{mme_vit_forward.16} parent=97 // loop_footer
                %s651 = sadd.s32 1, %s647
              $region104: #{mme_vit_forward.16} parent=97 // loop_footer_branch
                %646 = sbr.rel target = $region100
              $region105: #{mme_vit_forward.16} parent=97 // loop_exit
                _
            $region98: #{mme_vit_forward.16} parent=89 // pred_fallthru
              _
          $region90: #{mme_vit_forward.16} parent=85 // pred_fallthru
            _
          %674 = vnop
        $region86: #{mme_vit_forward.16} parent=73 // pred_fallthru
          _
      $region74: #{mme_vit_forward.16} parent=5 // pred_fallthru
        _
      %p675 = scmp.le.s32.totalorder 2, %s11
      // Predicated region
      $region121: #{mme_vit_forward.16} parent=5 // pred_check
        %p676 = pneg %p675
      $region122: #{mme_vit_forward.16} parent=5 // pred_check_branch
        %678 = sbr.rel (%p676) target = $region124
      $region123: #{mme_vit_forward.16} parent=5 // pred_region
        %s679 = ssub.s32 %s11, 2
        // Predicated region
        $region125: #{mme_vit_forward.16} parent=123 // pred_check
          %p680 = pneg %p174
        $region126: #{mme_vit_forward.16} parent=123 // pred_check_branch
          %682 = sbr.rel (%p680) target = $region128
        $region127: #{mme_vit_forward.16} parent=123 // pred_region
          %s683 = sand.u32 %s159, 1
          %s684 = sand.u32 %s159, 1
          %s685 = smul.addr %s684, 16
          %s686 = scalar_lea.vmem [#allocation4], %s685
        $region128: #{mme_vit_forward.16} parent=123 // pred_fallthru
          _
      $region124: #{mme_vit_forward.16} parent=5 // pred_fallthru
        _
    $region6: #{mme_vit_forward.16} parent=1 // loop_footer
      %s15 = sadd.s32 1, %s11
    $region7: #{mme_vit_forward.16} parent=1 // loop_footer_branch
      %10 = sbr.rel target = $region3
    $region8: #{mme_vit_forward.16} parent=1 // loop_exit
      _

// kernel: mme_vit_forward.23
$region0: #{mme_vit_forward.23}
  #allocation0 [shape = 'u32[]', space=smem, size = 0x4, offset = 0x4, fixed_abs, tag = 'smem constant byte address 0x4 - core index']
  #allocation1 [shape = 'u32[144,128]{1,0:T(1,128)}', space=vmem, size = 0x12000, scoped, tag = 'internal scratch']
  %s0 = inlined_call_operand.vmem [shape: bf16[2,8,128], index: 0, kind: input, shape index: {}]
  %s1 = inlined_call_operand.vmem [shape: f32[1,128], index: 1, kind: input, shape index: {}]
  %s2 = inlined_call_operand.vmem [shape: f32[1,128], index: 2, kind: input, shape index: {}]
  %s3 = inlined_call_operand.vmem [shape: bf16[128,128], index: 3, kind: input, shape index: {}]
  %s4 = inlined_call_operand.vmem [shape: f32[1,128], index: 4, kind: input, shape index: {}]
  %s5 = inlined_call_operand.hbm [shape: f32[2,128], index: 5, kind: output, shape index: {0}]
  %s6 = inlined_call_operand.hbm [shape: f32[2,128], index: 6, kind: output, shape index: {1}]
  %7 = xla_tuple %s5, %s6
  %s8 = sld [smem:[#allocation0]]
  $region38: #{mme_vit_forward.23} parent=0
    _
  %s10 = ssub.s32 1, %s8
  %s11 = scalar_select 0, %s10, %s8
  $region1: #{mme_vit_forward.23} parent=0
    #allocation2 [shape = 'u8[1024]{0}', space=vmem, size = 0x400, scoped, tag = 'output window, operand 0, single buffered']
    #allocation3 [shape = 's32[1]{0}', space=sflag, size = 0x4, scoped, tag = 'scoped memory for mme_vit_forward.23']
    #allocation4 [shape = 'u8[1024]{0}', space=vmem, size = 0x400, scoped, tag = 'output window, operand 1, single buffered']
    #allocation5 [shape = 's32[1]{0}', space=sflag, size = 0x4, scoped, tag = 'scoped memory for mme_vit_forward.23']
    %12 = vsyncpa [#allocation3], 0
    %13 = vsyncpa [#allocation5], 0
    // Predicated region
    $region2: #{mme_vit_forward.23} parent=1 // pred_check
      _
    $region3: #{mme_vit_forward.23} parent=1 // pred_check_branch
      %15 = sbr.rel (0) target = $region5
    $region4: #{mme_vit_forward.23} parent=1 // pred_region
      _
    $region5: #{mme_vit_forward.23} parent=1 // pred_fallthru
      _
    // Predicated region
    $region6: #{mme_vit_forward.23} parent=1 // pred_check
      _
    $region7: #{mme_vit_forward.23} parent=1 // pred_check_branch
      %17 = sbr.rel (0) target = $region9
    $region8: #{mme_vit_forward.23} parent=1 // pred_region
      _
    $region9: #{mme_vit_forward.23} parent=1 // pred_fallthru
      _
    // Predicated region
    $region10: #{mme_vit_forward.23} parent=1 // pred_check
      _
    $region11: #{mme_vit_forward.23} parent=1 // pred_check_branch
      %19 = sbr.rel (0) target = $region13
    $region12: #{mme_vit_forward.23} parent=1 // pred_region
      _
    $region13: #{mme_vit_forward.23} parent=1 // pred_fallthru
      _
    // Predicated region
    $region14: #{mme_vit_forward.23} parent=1 // pred_check
      _
    $region15: #{mme_vit_forward.23} parent=1 // pred_check_branch
      %21 = sbr.rel (0) target = $region17
    $region16: #{mme_vit_forward.23} parent=1 // pred_region
      _
    $region17: #{mme_vit_forward.23} parent=1 // pred_fallthru
      _
    // Predicated region
    $region18: #{mme_vit_forward.23} parent=1 // pred_check
      _
    $region19: #{mme_vit_forward.23} parent=1 // pred_check_branch
      %23 = sbr.rel (0) target = $region21
    $region20: #{mme_vit_forward.23} parent=1 // pred_region
      _
    $region21: #{mme_vit_forward.23} parent=1 // pred_fallthru
      _
    %v25 = vld [vmem:[%s0] sm:$0xf]
    %v26 = vld [vmem:[%s0 + $0x4] sm:$0xf]
    %v27 = vunpack.c.l.bf16 %v25
    %v28 = vunpack.c.l.bf16 %v26
    %v29 = vlaneseq
    %v30 = vshrl.u32 %v29, 7
    %vm31 = vcmp.ge.s32.totalorder %v30, 1
    %vm32 = vcmp.lt.s32.totalorder %v30, 5
    %vm33 = vmand %vm31, %vm32
    %v34 = vsel %vm33, 1, 0
    %v35 = vcvt.s32.f32 %v34
    %v36 = vmul.f32 %v27, %v35
    %v37 = vmul.f32 %v28, %v35
    %v38 = vrot.slane %v36, 4
    %v39 = vadd.f32 %v36, %v38
    %v40 = vrot.slane %v39, 2
    %v41 = vadd.f32 %v39, %v40
    %v42 = vrot.slane %v41, 1
    %v43 = vadd.f32 %v41, %v42
    %v44 = vrot.slane %v37, 4
    %v45 = vadd.f32 %v37, %v44
    %v46 = vrot.slane %v45, 2
    %v47 = vadd.f32 %v45, %v46
    %v48 = vrot.slane %v47, 1
    %v49 = vadd.f32 %v47, %v48
    %v50 = vmul.f32 %v43, 0.25
    %v51 = vmul.f32 %v49, 0.25
    %vm54 = vcmask 1041409
    %v55 = vsel %vm54, %v51, %v50
    %vm57 = vcmask 1041408
    %v58 = vsel %vm57, %v55, 0.0
    %59 = vadd.xlane.f32.xlu0 %v58
    %v60 = vpop.xlane.xlu0 %59
    %v61 = vrcp.pop 128.0
    %v62 = vmul.f32 %v60, %v61
    %v64 = vrot.slane %v62, 1
    %v67 = vsub.f32 %v50, %v62
    %v68 = vsub.f32 %v51, %v64
    %v69 = vmul.f32 %v67, %v67
    %v70 = vmul.f32 %v68, %v68
    %v73 = vrot.slane %v70, 7
    %v74 = vsel %vm54, %v73, %v69
    %v76 = vsel %vm57, %v74, 0.0
    %77 = vadd.xlane.f32.xlu0 %v76
    %v78 = vpop.xlane.xlu0 %77
    %v79 = vmul.f32 %v78, %v61
    %v80 = vadd.f32 %v79, 1e-06
    %v81 = vrsqrt.pop %v80
    %v83 = vrot.slane %v81, 1
    %v86 = vmul.f32 %v67, %v81
    %v87 = vmul.f32 %v68, %v83
    %v88 = vld [vmem:[%s1] sm:$0x1]
    %v90 = vlaneseq
    %v91 = vshrl.u32 %v90, 7
    %v92 = vsub.s32 0, %v91
    %v93 = vrot.slane %v88, %v92
    %v95 = vmul.f32 %v86, %v93
    %v96 = vmul.f32 %v87, %v93
    %v97 = vld [vmem:[%s2] sm:$0x1]
    %v99 = vlaneseq
    %v100 = vshrl.u32 %v99, 7
    %v101 = vsub.s32 0, %v100
    %v102 = vrot.slane %v97, %v101
    %v104 = vadd.f32 %v95, %v102
    %v105 = vadd.f32 %v96, %v102
    %v108 = vrot.slane %v105, 7
    %v109 = vsel %vm54, %v108, %v104
    %111 = vst [vmem:[#allocation2] sm:$0x3] %v109
    %v112 = vld [vmem:[%s3] sm:$0xf]
    %v113 = vld [vmem:[%s3 + $0x4] sm:$0xf]
    %v114 = vld [vmem:[%s3 + $0x8] sm:$0xf]
    %v115 = vld [vmem:[%s3 + $0xc] sm:$0xf]
    %v116 = vld [vmem:[%s3 + $0x10] sm:$0xf]
    %v117 = vld [vmem:[%s3 + $0x14] sm:$0xf]
    %v118 = vld [vmem:[%s3 + $0x18] sm:$0xf]
    %v119 = vld [vmem:[%s3 + $0x1c] sm:$0xf]
    %v120 = vld [vmem:[%s3 + $0x20] sm:$0xf]
    %v121 = vld [vmem:[%s3 + $0x24] sm:$0xf]
    %v122 = vld [vmem:[%s3 + $0x28] sm:$0xf]
    %v123 = vld [vmem:[%s3 + $0x2c] sm:$0xf]
    %v124 = vld [vmem:[%s3 + $0x30] sm:$0xf]
    %v125 = vld [vmem:[%s3 + $0x34] sm:$0xf]
    %v126 = vld [vmem:[%s3 + $0x38] sm:$0xf]
    %v127 = vld [vmem:[%s3 + $0x3c] sm:$0xf]
    %v128 = vld [vmem:[%s4] sm:$0x1]
    %v130 = vlaneseq
    %v131 = vshrl.u32 %v130, 7
    %v132 = vsub.s32 0, %v131
    %v133 = vrot.slane %v128, %v132
    %v151 = vunpack.c.l.b16 %v112
    %v152 = vunpack.c.l.b16 %v113
    %v153 = vunpack.c.l.b16 %v114
    %v154 = vunpack.c.l.b16 %v115
    %v155 = vunpack.c.l.b16 %v116
    %v156 = vunpack.c.l.b16 %v117
    %v157 = vunpack.c.l.b16 %v118
    %v158 = vunpack.c.l.b16 %v119
    %v159 = vunpack.c.l.b16 %v120
    %v160 = vunpack.c.l.b16 %v121
    %v161 = vunpack.c.l.b16 %v122
    %v162 = vunpack.c.l.b16 %v123
    %v163 = vunpack.c.l.b16 %v124
    %v164 = vunpack.c.l.b16 %v125
    %v165 = vunpack.c.l.b16 %v126
    %v166 = vunpack.c.l.b16 %v127
    %v167 = vpack.c.b16 %v152, %v151
    %v168 = vpack.c.b16 %v154, %v153
    %v169 = vpack.c.b16 %v156, %v155
    %v170 = vpack.c.b16 %v158, %v157
    %v171 = vpack.c.b16 %v160, %v159
    %v172 = vpack.c.b16 %v162, %v161
    %v173 = vpack.c.b16 %v164, %v163
    %v174 = vpack.c.b16 %v166, %v165
    %183 = vmatprep.subr.bf16.mxu0 0
    %184 = vmatpush1.bf16.msra.mxu0 %v167
    %185 = vmatprep.subr.bf16.mxu0 0
    %186 = vmatpush1.bf16.msra.mxu0 %v168
    %187 = vmatprep.subr.bf16.mxu0 0
    %188 = vmatpush1.bf16.msra.mxu0 %v169
    %189 = vmatprep.subr.bf16.mxu0 0
    %190 = vmatpush1.bf16.msra.mxu0 %v170
    %191 = vmatprep.subr.bf16.mxu0 0
    %192 = vmatpush1.bf16.msra.mxu0 %v171
    %193 = vmatprep.subr.bf16.mxu0 0
    %194 = vmatpush1.bf16.msra.mxu0 %v172
    %195 = vmatprep.subr.bf16.mxu0 0
    %196 = vmatpush1.bf16.msra.mxu0 %v173
    %197 = vmatprep.subr.bf16.mxu0 0
    %198 = vmatpush1.bf16.msra.mxu0 %v174
    %199 = vmatprep.subr.bf16.mxu0 0
    %200 = vmatpush1.bf16.msra.mxu0 0
    %201 = vmatprep.subr.bf16.mxu0 0
    %202 = vmatpush1.bf16.msra.mxu0 0
    %203 = vmatprep.subr.bf16.mxu0 0
    %204 = vmatpush1.bf16.msra.mxu0 0
    %205 = vmatprep.subr.bf16.mxu0 0
    %206 = vmatpush1.bf16.msra.mxu0 0
    %207 = vmatprep.subr.bf16.mxu0 0
    %208 = vmatpush1.bf16.msra.mxu0 0
    %209 = vmatprep.subr.bf16.mxu0 0
    %210 = vmatpush1.bf16.msra.mxu0 0
    %211 = vmatprep.subr.bf16.mxu0 0
    %212 = vmatpush1.bf16.msra.mxu0 0
    %213 = vmatprep.subr.bf16.mxu0 0
    %214 = vmatpush1.bf16.msra.mxu0 0
    %215 = vmatprep.mubr.f32.mxu0 0.0
    %216 = vmatmul.mubr.f32.gmra.mrb[0].mxu0 %v109
    %v217 = vpop.f32.mrb[0].mxu0
    %v218 = vadd.f32 %v133, %v217
    %v219 = vpop.f32.mrb[0].mxu0
    %220 = vdwg.mxu0
    %221 = vst [vmem:[#allocation4] sm:$0x3] %v218
    // Predicated region
    $region22: #{mme_vit_forward.23} parent=1 // pred_check
      _
    $region23: #{mme_vit_forward.23} parent=1 // pred_check_branch
      %223 = sbr.rel (0) target = $region25
    $region24: #{mme_vit_forward.23} parent=1 // pred_region
      %s225 = ssub.s32 32, 32
      %226 = vsyncadd [#allocation3], %s225
      %s228 = sshll.u32 [#allocation2], 4
      %s229 = int_to_ptr.vmem [resolvable:$true] %s228
      %231 = dma.vmem_to_hbm [thread:$0]  %s229, 32, %s5, [#allocation3]
    $region25: #{mme_vit_forward.23} parent=1 // pred_fallthru
      _
    // Predicated region
    $region26: #{mme_vit_forward.23} parent=1 // pred_check
      _
    $region27: #{mme_vit_forward.23} parent=1 // pred_check_branch
      %233 = sbr.rel (0) target = $region29
    $region28: #{mme_vit_forward.23} parent=1 // pred_region
      %s235 = ssub.s32 32, 32
      %236 = vsyncadd [#allocation5], %s235
      %s238 = sshll.u32 [#allocation4], 4
      %s239 = int_to_ptr.vmem [resolvable:$true] %s238
      %241 = dma.vmem_to_hbm [thread:$0]  %s239, 32, %s6, [#allocation5]
    $region29: #{mme_vit_forward.23} parent=1 // pred_fallthru
      _
    // Predicated region
    $region30: #{mme_vit_forward.23} parent=1 // pred_check
      _
    $region31: #{mme_vit_forward.23} parent=1 // pred_check_branch
      %243 = sbr.rel (0) target = $region33
    $region32: #{mme_vit_forward.23} parent=1 // pred_region
      %244 = dma.done [#allocation3], 32
    $region33: #{mme_vit_forward.23} parent=1 // pred_fallthru
      _
    // Predicated region
    $region34: #{mme_vit_forward.23} parent=1 // pred_check
      _
    $region35: #{mme_vit_forward.23} parent=1 // pred_check_branch
      %246 = sbr.rel (0) target = $region37
    $region36: #{mme_vit_forward.23} parent=1 // pred_region
      %247 = dma.done [#allocation5], 32
    $region37: #{mme_vit_forward.23} parent=1 // pred_fallthru
      _
    %248 = vsyncpa [#allocation3], 1
    %249 = vsyncpa [#allocation5], 1

// kernel: mme_vit_forward.17
$region0: #{mme_vit_forward.17}
  #allocation0 [shape = 'u32[]', space=smem, size = 0x4, offset = 0x4, fixed_abs, tag = 'smem constant byte address 0x4 - core index']
  #allocation1 [shape = 'u32[144,128]{1,0:T(1,128)}', space=vmem, size = 0x12000, scoped, tag = 'internal scratch']
  #allocation2 [shape = 'f32[16,128]{1,0:T(8,128)}', space=vmem, size = 0x2000, scoped, tag = 'scratch operand']
  %s0 = inlined_call_operand.vmem [shape: bf16[16,512], index: 0, kind: input, shape index: {}]
  %s1 = inlined_call_operand.vmem [shape: bf16[512,128], index: 1, kind: input, shape index: {}]
  %s2 = inlined_call_operand.vmem [shape: f32[1,128], index: 2, kind: input, shape index: {}]
  %s3 = inlined_call_operand.vmem [shape: bf16[16,128], index: 3, kind: input, shape index: {}]
  %s4 = inlined_call_operand.vmem [shape: bf16[16,128], index: 4, kind: output, shape index: {}]
  %s5 = sld [smem:[#allocation0]]
  $region34: #{mme_vit_forward.17} parent=0
    _
  %s7 = ssub.s32 1, %s5
  %s8 = scalar_select 0, %s7, %s5
  // Predicated region
  $region2: #{mme_vit_forward.17} parent=0 // pred_check
    _
  $region3: #{mme_vit_forward.17} parent=0 // pred_check_branch
    %10 = sbr.rel (0) target = $region5
  $region4: #{mme_vit_forward.17} parent=0 // pred_region
    _
  $region5: #{mme_vit_forward.17} parent=0 // pred_fallthru
    _
  // Predicated region
  $region6: #{mme_vit_forward.17} parent=0 // pred_check
    _
  $region7: #{mme_vit_forward.17} parent=0 // pred_check_branch
    %12 = sbr.rel (0) target = $region9
  $region8: #{mme_vit_forward.17} parent=0 // pred_region
    _
  $region9: #{mme_vit_forward.17} parent=0 // pred_fallthru
    _
  // Predicated region
  $region10: #{mme_vit_forward.17} parent=0 // pred_check
    _
  $region11: #{mme_vit_forward.17} parent=0 // pred_check_branch
    %14 = sbr.rel (0) target = $region13
  $region12: #{mme_vit_forward.17} parent=0 // pred_region
    _
  $region13: #{mme_vit_forward.17} parent=0 // pred_fallthru
    _
  // Predicated region
  $region14: #{mme_vit_forward.17} parent=0 // pred_check
    _
  $region15: #{mme_vit_forward.17} parent=0 // pred_check_branch
    %16 = sbr.rel (0) target = $region17
  $region16: #{mme_vit_forward.17} parent=0 // pred_region
    _
  $region17: #{mme_vit_forward.17} parent=0 // pred_fallthru
    _
  %p18 = scmp.eq.s32.totalorder 0, 0
  // Predicated region
  $region18: #{mme_vit_forward.17} parent=0 // pred_check
    %p19 = pneg %p18
  $region19: #{mme_vit_forward.17} parent=0 // pred_check_branch
    %21 = sbr.rel (%p19) target = $region21
  $region20: #{mme_vit_forward.17} parent=0 // pred_region
    %22 = vst [vmem:[#allocation2] sm:$0xff] 0.0
    %23 = vst [vmem:[#allocation2 + $0x8] sm:$0xff] 0.0
  $region21: #{mme_vit_forward.17} parent=0 // pred_fallthru
    _
  %v24 = vld [vmem:[#allocation2] sm:$0xff]
  %v25 = vld [vmem:[#allocation2 + $0x8] sm:$0xff]
  %v26 = vld [vmem:[%s0] sm:$0xff]
  %v27 = vld [vmem:[%s0 + $0x8] sm:$0xff]
  %v28 = vld [vmem:[%s0 + $0x10] sm:$0xff]
  %v29 = vld [vmem:[%s0 + $0x18] sm:$0xff]
  %v30 = vld [vmem:[%s1] sm:$0xf]
  %v31 = vld [vmem:[%s1 + $0x4] sm:$0xf]
  %v32 = vld [vmem:[%s1 + $0x8] sm:$0xf]
  %v33 = vld [vmem:[%s1 + $0xc] sm:$0xf]
  %v34 = vld [vmem:[%s1 + $0x10] sm:$0xf]
  %v35 = vld [vmem:[%s1 + $0x14] sm:$0xf]
  %v36 = vld [vmem:[%s1 + $0x18] sm:$0xf]
  %v37 = vld [vmem:[%s1 + $0x1c] sm:$0xf]
  %v38 = vld [vmem:[%s1 + $0x20] sm:$0xf]
  %v39 = vld [vmem:[%s1 + $0x24] sm:$0xf]
  %v40 = vld [vmem:[%s1 + $0x28] sm:$0xf]
  %v41 = vld [vmem:[%s1 + $0x2c] sm:$0xf]
  %v42 = vld [vmem:[%s1 + $0x30] sm:$0xf]
  %v43 = vld [vmem:[%s1 + $0x34] sm:$0xf]
  %v44 = vld [vmem:[%s1 + $0x38] sm:$0xf]
  %v45 = vld [vmem:[%s1 + $0x3c] sm:$0xf]
  %v46 = vld [vmem:[%s1 + $0x40] sm:$0xf]
  %v47 = vld [vmem:[%s1 + $0x44] sm:$0xf]
  %v48 = vld [vmem:[%s1 + $0x48] sm:$0xf]
  %v49 = vld [vmem:[%s1 + $0x4c] sm:$0xf]
  %v50 = vld [vmem:[%s1 + $0x50] sm:$0xf]
  %v51 = vld [vmem:[%s1 + $0x54] sm:$0xf]
  %v52 = vld [vmem:[%s1 + $0x58] sm:$0xf]
  %v53 = vld [vmem:[%s1 + $0x5c] sm:$0xf]
  %v54 = vld [vmem:[%s1 + $0x60] sm:$0xf]
  %v55 = vld [vmem:[%s1 + $0x64] sm:$0xf]
  %v56 = vld [vmem:[%s1 + $0x68] sm:$0xf]
  %v57 = vld [vmem:[%s1 + $0x6c] sm:$0xf]
  %v58 = vld [vmem:[%s1 + $0x70] sm:$0xf]
  %v59 = vld [vmem:[%s1 + $0x74] sm:$0xf]
  %v60 = vld [vmem:[%s1 + $0x78] sm:$0xf]
  %v61 = vld [vmem:[%s1 + $0x7c] sm:$0xf]
  %v62 = vld [vmem:[%s1 + $0x80] sm:$0xf]
  %v63 = vld [vmem:[%s1 + $0x84] sm:$0xf]
  %v64 = vld [vmem:[%s1 + $0x88] sm:$0xf]
  %v65 = vld [vmem:[%s1 + $0x8c] sm:$0xf]
  %v66 = vld [vmem:[%s1 + $0x90] sm:$0xf]
  %v67 = vld [vmem:[%s1 + $0x94] sm:$0xf]
  %v68 = vld [vmem:[%s1 + $0x98] sm:$0xf]
  %v69 = vld [vmem:[%s1 + $0x9c] sm:$0xf]
  %v70 = vld [vmem:[%s1 + $0xa0] sm:$0xf]
  %v71 = vld [vmem:[%s1 + $0xa4] sm:$0xf]
  %v72 = vld [vmem:[%s1 + $0xa8] sm:$0xf]
  %v73 = vld [vmem:[%s1 + $0xac] sm:$0xf]
  %v74 = vld [vmem:[%s1 + $0xb0] sm:$0xf]
  %v75 = vld [vmem:[%s1 + $0xb4] sm:$0xf]
  %v76 = vld [vmem:[%s1 + $0xb8] sm:$0xf]
  %v77 = vld [vmem:[%s1 + $0xbc] sm:$0xf]
  %v78 = vld [vmem:[%s1 + $0xc0] sm:$0xf]
  %v79 = vld [vmem:[%s1 + $0xc4] sm:$0xf]
  %v80 = vld [vmem:[%s1 + $0xc8] sm:$0xf]
  %v81 = vld [vmem:[%s1 + $0xcc] sm:$0xf]
  %v82 = vld [vmem:[%s1 + $0xd0] sm:$0xf]
  %v83 = vld [vmem:[%s1 + $0xd4] sm:$0xf]
  %v84 = vld [vmem:[%s1 + $0xd8] sm:$0xf]
  %v85 = vld [vmem:[%s1 + $0xdc] sm:$0xf]
  %v86 = vld [vmem:[%s1 + $0xe0] sm:$0xf]
  %v87 = vld [vmem:[%s1 + $0xe4] sm:$0xf]
  %v88 = vld [vmem:[%s1 + $0xe8] sm:$0xf]
  %v89 = vld [vmem:[%s1 + $0xec] sm:$0xf]
  %v90 = vld [vmem:[%s1 + $0xf0] sm:$0xf]
  %v91 = vld [vmem:[%s1 + $0xf4] sm:$0xf]
  %v92 = vld [vmem:[%s1 + $0xf8] sm:$0xf]
  %v93 = vld [vmem:[%s1 + $0xfc] sm:$0xf]
  %v98 = vunpack.c.l.b16 %v26
  %v99 = vunpack.c.h.b16 %v26
  %v100 = vunpack.c.l.b16 %v27
  %v101 = vunpack.c.h.b16 %v27
  %v102 = vunpack.c.l.b16 %v28
  %v103 = vunpack.c.h.b16 %v28
  %v104 = vunpack.c.l.b16 %v29
  %v105 = vunpack.c.h.b16 %v29
  %v106 = vpack.c.b16 %v102, %v98
  %v107 = vpack.c.b16 %v103, %v99
  %v108 = vpack.c.b16 %v104, %v100
  %v109 = vpack.c.b16 %v105, %v101
  %v178 = vunpack.c.l.b16 %v30
  %v179 = vunpack.c.l.b16 %v31
  %v180 = vunpack.c.l.b16 %v32
  %v181 = vunpack.c.l.b16 %v33
  %v182 = vunpack.c.l.b16 %v34
  %v183 = vunpack.c.l.b16 %v35
  %v184 = vunpack.c.l.b16 %v36
  %v185 = vunpack.c.l.b16 %v37
  %v186 = vunpack.c.l.b16 %v38
  %v187 = vunpack.c.l.b16 %v39
  %v188 = vunpack.c.l.b16 %v40
  %v189 = vunpack.c.l.b16 %v41
  %v190 = vunpack.c.l.b16 %v42
  %v191 = vunpack.c.l.b16 %v43
  %v192 = vunpack.c.l.b16 %v44
  %v193 = vunpack.c.l.b16 %v45
  %v194 = vunpack.c.l.b16 %v46
  %v195 = vunpack.c.l.b16 %v47
  %v196 = vunpack.c.l.b16 %v48
  %v197 = vunpack.c.l.b16 %v49
  %v198 = vunpack.c.l.b16 %v50
  %v199 = vunpack.c.l.b16 %v51
  %v200 = vunpack.c.l.b16 %v52
  %v201 = vunpack.c.l.b16 %v53
  %v202 = vunpack.c.l.b16 %v54
  %v203 = vunpack.c.l.b16 %v55
  %v204 = vunpack.c.l.b16 %v56
  %v205 = vunpack.c.l.b16 %v57
  %v206 = vunpack.c.l.b16 %v58
  %v207 = vunpack.c.l.b16 %v59
  %v208 = vunpack.c.l.b16 %v60
  %v209 = vunpack.c.l.b16 %v61
  %v210 = vunpack.c.l.b16 %v62
  %v211 = vunpack.c.l.b16 %v63
  %v212 = vunpack.c.l.b16 %v64
  %v213 = vunpack.c.l.b16 %v65
  %v214 = vunpack.c.l.b16 %v66
  %v215 = vunpack.c.l.b16 %v67
  %v216 = vunpack.c.l.b16 %v68
  %v217 = vunpack.c.l.b16 %v69
  %v218 = vunpack.c.l.b16 %v70
  %v219 = vunpack.c.l.b16 %v71
  %v220 = vunpack.c.l.b16 %v72
  %v221 = vunpack.c.l.b16 %v73
  %v222 = vunpack.c.l.b16 %v74
  %v223 = vunpack.c.l.b16 %v75
  %v224 = vunpack.c.l.b16 %v76
  %v225 = vunpack.c.l.b16 %v77
  %v226 = vunpack.c.l.b16 %v78
  %v227 = vunpack.c.l.b16 %v79
  %v228 = vunpack.c.l.b16 %v80
  %v229 = vunpack.c.l.b16 %v81
  %v230 = vunpack.c.l.b16 %v82
  %v231 = vunpack.c.l.b16 %v83
  %v232 = vunpack.c.l.b16 %v84
  %v233 = vunpack.c.l.b16 %v85
  %v234 = vunpack.c.l.b16 %v86
  %v235 = vunpack.c.l.b16 %v87
  %v236 = vunpack.c.l.b16 %v88
  %v237 = vunpack.c.l.b16 %v89
  %v238 = vunpack.c.l.b16 %v90
  %v239 = vunpack.c.l.b16 %v91
  %v240 = vunpack.c.l.b16 %v92
  %v241 = vunpack.c.l.b16 %v93
  %v242 = vpack.c.b16 %v179, %v178
  %v243 = vpack.c.b16 %v181, %v180
  %v244 = vpack.c.b16 %v183, %v182
  %v245 = vpack.c.b16 %v185, %v184
  %v246 = vpack.c.b16 %v187, %v186
  %v247 = vpack.c.b16 %v189, %v188
  %v248 = vpack.c.b16 %v191, %v190
  %v249 = vpack.c.b16 %v193, %v192
  %v250 = vpack.c.b16 %v195, %v194
  %v251 = vpack.c.b16 %v197, %v196
  %v252 = vpack.c.b16 %v199, %v198
  %v253 = vpack.c.b16 %v201, %v200
  %v254 = vpack.c.b16 %v203, %v202
  %v255 = vpack.c.b16 %v205, %v204
  %v256 = vpack.c.b16 %v207, %v206
  %v257 = vpack.c.b16 %v209, %v208
  %v258 = vpack.c.b16 %v211, %v210
  %v259 = vpack.c.b16 %v213, %v212
  %v260 = vpack.c.b16 %v215, %v214
  %v261 = vpack.c.b16 %v217, %v216
  %v262 = vpack.c.b16 %v219, %v218
  %v263 = vpack.c.b16 %v221, %v220
  %v264 = vpack.c.b16 %v223, %v222
  %v265 = vpack.c.b16 %v225, %v224
  %v266 = vpack.c.b16 %v227, %v226
  %v267 = vpack.c.b16 %v229, %v228
  %v268 = vpack.c.b16 %v231, %v230
  %v269 = vpack.c.b16 %v233, %v232
  %v270 = vpack.c.b16 %v235, %v234
  %v271 = vpack.c.b16 %v237, %v236
  %v272 = vpack.c.b16 %v239, %v238
  %v273 = vpack.c.b16 %v241, %v240
  %306 = vmatprep.subr.bf16.mxu0 0
  %307 = vmatpush1.bf16.msra.mxu0 %v242
  %308 = vmatprep.subr.bf16.mxu0 0
  %309 = vmatpush1.bf16.msra.mxu0 %v243
  %310 = vmatprep.subr.bf16.mxu0 0
  %311 = vmatpush1.bf16.msra.mxu0 %v244
  %312 = vmatprep.subr.bf16.mxu0 0
  %313 = vmatpush1.bf16.msra.mxu0 %v245
  %314 = vmatprep.subr.bf16.mxu0 0
  %315 = vmatpush1.bf16.msra.mxu0 %v246
  %316 = vmatprep.subr.bf16.mxu0 0
  %317 = vmatpush1.bf16.msra.mxu0 %v247
  %318 = vmatprep.subr.bf16.mxu0 0
  %319 = vmatpush1.bf16.msra.mxu0 %v248
  %320 = vmatprep.subr.bf16.mxu0 0
  %321 = vmatpush1.bf16.msra.mxu0 %v249
  %322 = vmatprep.subr.bf16.mxu0 0
  %323 = vmatpush1.bf16.msra.mxu0 %v250
  %324 = vmatprep.subr.bf16.mxu0 0
  %325 = vmatpush1.bf16.msra.mxu0 %v251
  %326 = vmatprep.subr.bf16.mxu0 0
  %327 = vmatpush1.bf16.msra.mxu0 %v252
  %328 = vmatprep.subr.bf16.mxu0 0
  %329 = vmatpush1.bf16.msra.mxu0 %v253
  %330 = vmatprep.subr.bf16.mxu0 0
  %331 = vmatpush1.bf16.msra.mxu0 %v254
  %332 = vmatprep.subr.bf16.mxu0 0
  %333 = vmatpush1.bf16.msra.mxu0 %v255
  %334 = vmatprep.subr.bf16.mxu0 0
  %335 = vmatpush1.bf16.msra.mxu0 %v256
  %336 = vmatprep.subr.bf16.mxu0 0
  %337 = vmatpush1.bf16.msra.mxu0 %v257
  %338 = vmatprep.mubr.bf16.mxu0 %v107
  %339 = vmatmul.mubr.bf16.gmra.mrb[0].mxu0 %v106
  %v340 = vpop.f32.mrb[0].mxu0
  %v341 = vadd.f32 0.0, %v340
  %v342 = vpop.f32.mrb[0].mxu0
  %v343 = vpop.f32.mrb[0].mxu0
  %v344 = vadd.f32 0.0, %v343
  %v345 = vpop.f32.mrb[0].mxu0
  %346 = vdwg.mxu0
  %347 = vmatprep.subr.bf16.mxu0 0
  %348 = vmatpush1.bf16.msra.mxu0 %v258
  %349 = vmatprep.subr.bf16.mxu0 0
  %350 = vmatpush1.bf16.msra.mxu0 %v259
  %351 = vmatprep.subr.bf16.mxu0 0
  %352 = vmatpush1.bf16.msra.mxu0 %v260
  %353 = vmatprep.subr.bf16.mxu0 0
  %354 = vmatpush1.bf16.msra.mxu0 %v261
  %355 = vmatprep.subr.bf16.mxu0 0
  %356 = vmatpush1.bf16.msra.mxu0 %v262
  %357 = vmatprep.subr.bf16.mxu0 0
  %358 = vmatpush1.bf16.msra.mxu0 %v263
  %359 = vmatprep.subr.bf16.mxu0 0
  %360 = vmatpush1.bf16.msra.mxu0 %v264
  %361 = vmatprep.subr.bf16.mxu0 0
  %362 = vmatpush1.bf16.msra.mxu0 %v265
  %363 = vmatprep.subr.bf16.mxu0 0
  %364 = vmatpush1.bf16.msra.mxu0 %v266
  %365 = vmatprep.subr.bf16.mxu0 0
  %366 = vmatpush1.bf16.msra.mxu0 %v267
  %367 = vmatprep.subr.bf16.mxu0 0
  %368 = vmatpush1.bf16.msra.mxu0 %v268
  %369 = vmatprep.subr.bf16.mxu0 0
  %370 = vmatpush1.bf16.msra.mxu0 %v269
  %371 = vmatprep.subr.bf16.mxu0 0
  %372 = vmatpush1.bf16.msra.mxu0 %v270
  %373 = vmatprep.subr.bf16.mxu0 0
  %374 = vmatpush1.bf16.msra.mxu0 %v271
  %375 = vmatprep.subr.bf16.mxu0 0
  %376 = vmatpush1.bf16.msra.mxu0 %v272
  %377 = vmatprep.subr.bf16.mxu0 0
  %378 = vmatpush1.bf16.msra.mxu0 %v273
  %379 = vmatprep.mubr.bf16.mxu0 %v109
  %380 = vmatmul.mubr.bf16.gmra.mrb[0].mxu0 %v108
  %v381 = vpop.f32.mrb[0].mxu0
  %v382 = vadd.f32 %v341, %v381
  %v383 = vpop.f32.mrb[0].mxu0
  %v384 = vpop.f32.mrb[0].mxu0
  %v385 = vadd.f32 %v344, %v384
  %v386 = vpop.f32.mrb[0].mxu0
  %387 = vdwg.mxu0
  %v388 = vadd.f32 %v24, %v382
  %v389 = vadd.f32 %v25, %v385
  %390 = vst [vmem:[#allocation2] sm:$0xff] %v388
  %391 = vst [vmem:[#allocation2 + $0x8] sm:$0xff] %v389
  // Predicated region
  $region22: #{mme_vit_forward.17} parent=0 // pred_check
    %p392 = pneg %p18
  $region23: #{mme_vit_forward.17} parent=0 // pred_check_branch
    %394 = sbr.rel (%p392) target = $region25
  $region24: #{mme_vit_forward.17} parent=0 // pred_region
    %v395 = vld [vmem:[#allocation2] sm:$0xff]
    %v396 = vld [vmem:[#allocation2 + $0x8] sm:$0xff]
    %v397 = vld [vmem:[%s2] sm:$0x1]
    %v399 = vlaneseq
    %v400 = vshrl.u32 %v399, 7
    %v401 = vsub.s32 0, %v400
    %v402 = vrot.slane %v397, %v401
    %v404 = vadd.f32 %v395, %v402
    %v405 = vadd.f32 %v396, %v402
    %v406 = vld [vmem:[%s3] sm:$0xf]
    %v407 = vld [vmem:[%s3 + $0x4] sm:$0xf]
    %v408 = vunpack.c.l.bf16 %v406
    %v409 = vunpack.c.l.bf16 %v407
    %v410 = vadd.f32 %v404, %v408
    %v411 = vadd.f32 %v405, %v409
    %v412 = vpack.c.bf16 %v411, %v410
    %v414 = vunpack.c.l.b16 %v412
    %v415 = vunpack.c.h.b16 %v412
    %v416 = vpack.c.b16 %v414, %v414
    %v417 = vpack.c.b16 %v415, %v415
    %420 = vst [vmem:[%s4] sm:$0xf] %v416
    %421 = vst [vmem:[%s4 + $0x4] sm:$0xf] %v417
  $region25: #{mme_vit_forward.17} parent=0 // pred_fallthru
    _
  // Predicated region
  $region26: #{mme_vit_forward.17} parent=0 // pred_check
    _
  $region27: #{mme_vit_forward.17} parent=0 // pred_check_branch
    %423 = sbr.rel (0) target = $region29
  $region28: #{mme_vit_forward.17} parent=0 // pred_region
    _
  $region29: #{mme_vit_forward.17} parent=0 // pred_fallthru
    _
  // Predicated region
  $region30: #{mme_vit_forward.17} parent=0 // pred_check
    _
  $region31: #{mme_vit_forward.17} parent=0 // pred_check_branch
    %425 = sbr.rel (0) target = $region33
  $region32: #{mme_vit_forward.17} parent=0 // pred_region
    _
  $region33: #{mme_vit_forward.17} parent=0 // pred_fallthru
    _

</llo_original>
